<compile_context>
chip_gen: v7x
topology: tpu7x:2x2x1
jax: 0.10.0
libtpu: 0.0.40
codegen_flags: <defaults>
</compile_context>

<pallas_src>
import functools

import jax
import jax.numpy as jnp
from jax import lax
from jax.experimental import pallas as pl
from jax.experimental.pallas import tpu as pltpu

KSIZE = 7      # spatial-attention conv kernel size
PAD = 3        # its padding
BN_EPS = 1e-5


def _sigmoid(x):
    return 1.0 / (1.0 + jnp.exp(-x))


def _fusion_kernel(H, W,
                   low_ref,     # [B, C, HW]   VMEM
                   high_ref,    # [B, C, HW]   VMEM
                   w1l_ref,     # [C, C]       VMEM  conv1x1 weight, low half  (out, in)
                   w1h_ref,     # [C, C]       VMEM  conv1x1 weight, high half (out, in)
                   b1_ref,      # [C, 1]       VMEM
                   fc1w_ref,    # [Cr, C]      VMEM  channel-attn FC1 (out, in)
                   fc1b_ref,    # [Cr, 1]      VMEM
                   fc2w_ref,    # [C, Cr]      VMEM  channel-attn FC2 (out, in)
                   fc2b_ref,    # [C, 1]       VMEM
                   saw_ref,     # [2*7*7 + 1]  SMEM  spatial-attn conv weights + bias
                   gamma_ref,   # [C, 1]       VMEM  BN weight
                   beta_ref,    # [C, 1]       VMEM  BN bias
                   ridx_ref,    # [1, HW]      VMEM  int32 pixel row index
                   cidx_ref,    # [1, HW]      VMEM  int32 pixel col index
                   out_ref):    # [B, C, HW]   VMEM
    B, C, HW = out_ref.shape
    pad_flat = PAD * W + PAD          # flat-index padding for the 7x7 conv windows

    # ---------- pass 1: fuse + channel attn + spatial attn + BN partial sums ----------
    def fuse_body(b, carry):
        s_sum, s_sq = carry

        # conv1x1 as two matmuls (no concatenated [.,2C,.] tensor ever built)
        fused = (jnp.dot(w1l_ref[...], low_ref[b],
                         preferred_element_type=jnp.float32)
                 + jnp.dot(w1h_ref[...], high_ref[b],
                           preferred_element_type=jnp.float32)
                 + b1_ref[...])                                     # [C, HW]

        # channel attention: global avg pool -> MLP -> sigmoid gate
        y = jnp.mean(fused, axis=1, keepdims=True)                  # [C, 1]
        h = jnp.maximum(jnp.dot(fc1w_ref[...], y,
                                preferred_element_type=jnp.float32)
                        + fc1b_ref[...], 0.0)                       # [Cr, 1]
        attn = _sigmoid(jnp.dot(fc2w_ref[...], h,
                                preferred_element_type=jnp.float32)
                        + fc2b_ref[...])                            # [C, 1]
        ca = fused * attn                                           # [C, HW]

        # spatial attention: channel mean/max maps -> 7x7 conv (in-register) -> gate
        avg_m = jnp.mean(ca, axis=0, keepdims=True)                 # [1, HW]
        max_m = jnp.max(ca, axis=0, keepdims=True)                  # [1, HW]
        m2 = jnp.concatenate([avg_m, max_m], axis=0)                # [2, HW]
        zpad = jnp.zeros((2, pad_flat), jnp.float32)
        m2p = jnp.concatenate([zpad, m2, zpad], axis=1)             # [2, HW + 2*pad_flat]

        rvec = ridx_ref[...]                                        # [1, HW] int32
        cvec = cidx_ref[...]                                        # [1, HW] int32
        row_ok = [(rvec + dy >= 0) & (rvec + dy < H)
                  for dy in range(-PAD, PAD + 1)]
        col_ok = [(cvec + dx >= 0) & (cvec + dx < W)
                  for dx in range(-PAD, PAD + 1)]

        acc = jnp.zeros((1, HW), jnp.float32)
        for kh in range(KSIZE):
            dy = kh - PAD
            for kw in range(KSIZE):
                dx = kw - PAD
                start = pad_flat + dy * W + dx                      # static offset
                window = m2p[:, start:start + HW]                   # static lane slice
                window = jnp.where(row_ok[kh] & col_ok[kw], window, 0.0)
                w_avg = saw_ref[kh * KSIZE + kw]                    # scalar (SMEM)
                w_max = saw_ref[KSIZE * KSIZE + kh * KSIZE + kw]
                acc = acc + w_avg * window[0:1, :] + w_max * window[1:2, :]
        acc = acc + saw_ref[2 * KSIZE * KSIZE]                      # conv bias
        smap = _sigmoid(acc)                                        # [1, HW]

        sa = ca * smap                                              # [C, HW]
        out_ref[b] = sa

        # fused BatchNorm batch statistics
        s_sum = s_sum + jnp.sum(sa, axis=1, keepdims=True)
        s_sq = s_sq + jnp.sum(sa * sa, axis=1, keepdims=True)
        return s_sum, s_sq

    zero = jnp.zeros((C, 1), jnp.float32)
    s_sum, s_sq = lax.fori_loop(0, B, fuse_body, (zero, zero))

    # ---------- pass 2: BatchNorm finalize + affine + ReLU (hoisted broadcasts) ----------
    inv_n = 1.0 / float(B * H * W)
    mean = s_sum * inv_n                                            # [C, 1]
    var = jnp.maximum(s_sq * inv_n - mean * mean, 0.0)              # biased (train mode)
    inv = lax.rsqrt(var + BN_EPS)
    scale = gamma_ref[...] * inv                                    # [C, 1]
    shift = beta_ref[...] - mean * scale                            # [C, 1]

    def norm_body(b, carry):
        out_ref[b] = jnp.maximum(out_ref[b] * scale + shift, 0.0)
        return carry

    lax.fori_loop(0, B, norm_body, 0)


def fusion_forward(low_feat, high_feat, params):
    """FusionModule.forward. Inputs NCHW float32; output NCHW float32."""
    B, C, H, W = low_feat.shape
    if high_feat.shape[2:] != (H, W):
        # bilinear, align_corners=False — wrapper-side plain-JAX glue
        high_feat = jax.image.resize(
            high_feat, (high_feat.shape[0], high_feat.shape[1], H, W),
            method="bilinear")
    HW = H * W

    # No transpose / no concat: NCHW is just flattened to [B, C, HW].
    low_r = low_feat.reshape(B, C, HW).astype(jnp.float32)
    high_r = high_feat.reshape(B, C, HW).astype(jnp.float32)

    hw = jnp.arange(HW, dtype=jnp.int32)
    ridx = (hw // W).reshape(1, HW)
    cidx = (hw % W).reshape(1, HW)

    wc = params["wc"]                                  # [C, 2C] (out, in)
    w1l = wc[:, :C]
    w1h = wc[:, C:]
    Cr = params["fc1w"].shape[0]
    b1 = params["b1"].reshape(C, 1)
    fc1b = params["fc1b"].reshape(Cr, 1)
    fc2b = params["fc2b"].reshape(C, 1)
    gamma = params["gamma"].reshape(C, 1)
    beta = params["beta"].reshape(C, 1)
    saw_flat = jnp.concatenate(
        [params["saw"].reshape(-1), params["sab"].reshape(-1)]).astype(jnp.float32)

    kern = functools.partial(_fusion_kernel, H, W)
    vmem = pl.BlockSpec(memory_space=pltpu.MemorySpace.VMEM)
    smem = pl.BlockSpec(memory_space=pltpu.MemorySpace.SMEM)

    vmem_bytes = 4 * (low_r.size + high_r.size + B * C * HW) + (2 << 20)
    vmem_limit = int(min(48 * 1024 * 1024, max(vmem_bytes, 16 * 1024 * 1024)))
    # TODO(synk): for feature maps too large for whole-array VMEM residency
    # (notably v7x's 64 MiB), add a grid over batch/spatial tiles with BlockSpec
    # pipelining and partial-sum BatchNorm accumulation.

    out = pl.pallas_call(
        kern,
        out_shape=jax.ShapeDtypeStruct((B, C, HW), jnp.float32),
        in_specs=[vmem, vmem,              # low, high
                  vmem, vmem, vmem,        # w1l, w1h, b1
                  vmem, vmem, vmem, vmem,  # fc1w, fc1b, fc2w, fc2b
                  smem,                    # spatial-attn conv weights (scalars)
                  vmem, vmem,              # gamma, beta
                  vmem, vmem],             # ridx, cidx
        out_specs=vmem,
        compiler_params=pltpu.CompilerParams(vmem_limit_bytes=vmem_limit),
    )(low_r, high_r, w1l, w1h, b1,
      params["fc1w"], fc1b, params["fc2w"], fc2b,
      saw_flat, gamma, beta, ridx, cidx)

    return out.reshape(B, C, H, W)


def init_params(key, C):
    """Deterministic synthetic parameters, PyTorch layouts (out, in)."""
    Cr = C // 16
    ks = jax.random.split(key, 8)
    wc = jax.random.normal(ks[0], (C, 2 * C), jnp.float32) * 0.05      # conv1x1
    b1 = jax.random.normal(ks[1], (C,), jnp.float32) * 0.05
    fc1w = jax.random.normal(ks[2], (Cr, C), jnp.float32) * 0.10       # Linear(C, Cr)
    fc1b = jax.random.normal(ks[3], (Cr,), jnp.float32) * 0.10
    fc2w = jax.random.normal(ks[4], (C, Cr), jnp.float32) * 0.10       # Linear(Cr, C)
    fc2b = jax.random.normal(ks[5], (C,), jnp.float32) * 0.10
    saw = jax.random.normal(ks[6], (2, KSIZE, KSIZE), jnp.float32) * 0.05
    sab = jax.random.normal(ks[7], (1,), jnp.float32) * 0.05
    gamma = jnp.ones((C,), jnp.float32)
    beta = jnp.zeros((C,), jnp.float32)
    return dict(wc=wc, b1=b1, fc1w=fc1w, fc1b=fc1b, fc2w=fc2w, fc2b=fc2b,
                saw=saw, sab=sab, gamma=gamma, beta=beta)


def fusion_reference(low, high, p):
    """Pure-JAX reference with identical semantics (NCHW)."""
    B, C, H, W = low.shape
    if high.shape[2:] != (H, W):
        high = jax.image.resize(high, (high.shape[0], high.shape[1], H, W),
                                method="bilinear")
    cat = jnp.concatenate([low, high], axis=1)                      # [B, 2C, H, W]
    fused = jnp.einsum("ok,bkhw->bohw", p["wc"], cat,
                       precision=lax.Precision.HIGHEST) + p["b1"].reshape(1, C, 1, 1)
    # channel attention
    y = fused.mean(axis=(2, 3))                                     # [B, C]
    h = jnp.maximum(jnp.dot(y, p["fc1w"].T, precision=lax.Precision.HIGHEST)
                    + p["fc1b"], 0.0)
    attn = _sigmoid(jnp.dot(h, p["fc2w"].T, precision=lax.Precision.HIGHEST)
                    + p["fc2b"])
    ca = fused * attn[:, :, None, None]
    # spatial attention
    avg = ca.mean(axis=1, keepdims=True)
    mx = ca.max(axis=1, keepdims=True)
    m = jnp.concatenate([avg, mx], axis=1)                          # [B, 2, H, W]
    conv = lax.conv_general_dilated(
        m, p["saw"].reshape(1, 2, KSIZE, KSIZE), (1, 1),
        padding=((PAD, PAD), (PAD, PAD)),
        dimension_numbers=("NCHW", "OIHW", "NCHW"),
        precision=lax.Precision.HIGHEST) + p["sab"][0]
    sa = ca * _sigmoid(conv)
    # train-mode BatchNorm (batch stats, biased variance) + ReLU
    mean = sa.mean(axis=(0, 2, 3), keepdims=True)
    var = ((sa - mean) ** 2).mean(axis=(0, 2, 3), keepdims=True)
    out = (sa - mean) * lax.rsqrt(var + BN_EPS)
    out = out * p["gamma"].reshape(1, C, 1, 1) + p["beta"].reshape(1, C, 1, 1)
    return jnp.maximum(out, 0.0)


if __name__ == "__main__":
    key = jax.random.PRNGKey(0)
    k_low, k_high, k_par = jax.random.split(key, 3)

    B, C, H, W = 2, 32, 16, 16      # in_channels=32 so C//16 = 2 for the SE bottleneck
    low = jax.random.normal(k_low, (B, C, H, W), jnp.float32)
    high = jax.random.normal(k_high, (B, C, H, W), jnp.float32)
    params = init_params(k_par, C)

    out = fusion_forward(low, high, params)
    out = jax.block_until_ready(out)

    ref = fusion_reference(low, high, params)
    assert out.shape == ref.shape == (B, C, H, W)
    max_err = float(jnp.max(jnp.abs(out - ref)))
    if not (bool(jnp.isfinite(out).all()) and max_err < 2e-3):
        raise AssertionError(f"mismatch vs reference, max abs err = {max_err}")

    print("KERNEL_OK")
</pallas_src>

<mosaic_0001>
module attributes {stable_mosaic.version = 11 : i64} {
  func.func @_fusion_kernel(%arg0: memref<2x32x256xf32, #tpu.memory_space<vmem>>, %arg1: memref<2x32x256xf32, #tpu.memory_space<vmem>>, %arg2: memref<32x32xf32, #tpu.memory_space<vmem>>, %arg3: memref<32x32xf32, #tpu.memory_space<vmem>>, %arg4: memref<32x1xf32, #tpu.memory_space<vmem>>, %arg5: memref<2x32xf32, #tpu.memory_space<vmem>>, %arg6: memref<2x1xf32, #tpu.memory_space<vmem>>, %arg7: memref<32x2xf32, #tpu.memory_space<vmem>>, %arg8: memref<32x1xf32, #tpu.memory_space<vmem>>, %arg9: memref<99xf32, #tpu.memory_space<smem>>, %arg10: memref<32x1xf32, #tpu.memory_space<vmem>>, %arg11: memref<32x1xf32, #tpu.memory_space<vmem>>, %arg12: memref<1x256xi32, #tpu.memory_space<vmem>>, %arg13: memref<1x256xi32, #tpu.memory_space<vmem>>, %arg14: memref<2x32x256xf32, #tpu.memory_space<vmem>>) attributes {dimension_semantics = [], scalar_prefetch = 0 : i64, scratch_operands = 0 : i64, tpu.core_type = #tpu.core_type<tc>} {
    %cst = arith.constant 0.000000e+00 : f32
    %0 = vector.broadcast %cst : f32 to vector<32x1xf32>
    %c0_i32 = arith.constant 0 : i32
    %c2_i32 = arith.constant 2 : i32
    %1 = arith.addi %c0_i32, %c2_i32 : i32
    %c1_i32 = arith.constant 1 : i32
    %2:2 = scf.for %arg15 = %c0_i32 to %1 step %c1_i32 iter_args(%arg16 = %0, %arg17 = %0) -> (vector<32x1xf32>, vector<32x1xf32>)  : i32 {
      %c0_12 = arith.constant 0 : index
      %c0_13 = arith.constant 0 : index
      %20 = vector.load %arg2[%c0_12, %c0_13] : memref<32x32xf32, #tpu.memory_space<vmem>>, vector<32x32xf32>
      %21 = arith.index_cast %arg15 : i32 to index
      %c0_14 = arith.constant 0 : index
      %c0_15 = arith.constant 0 : index
      %22 = vector.load %arg0[%21, %c0_14, %c0_15] : memref<2x32x256xf32, #tpu.memory_space<vmem>>, vector<1x32x256xf32>
      %23 = vector.shape_cast %22 : vector<1x32x256xf32> to vector<32x256xf32>
      %cst_16 = arith.constant dense<0.000000e+00> : vector<32x256xf32>
      %24 = tpu.matmul %20, %23, %cst_16 {dimension_numbers = #tpu.dot_dimension_numbers<[1], [0], [0], [1], [0, 0, 1, 1], [], []>} : vector<32x32xf32>, vector<32x256xf32>, vector<32x256xf32> -> vector<32x256xf32>
      %c0_17 = arith.constant 0 : index
      %c0_18 = arith.constant 0 : index
      %25 = vector.load %arg3[%c0_17, %c0_18] : memref<32x32xf32, #tpu.memory_space<vmem>>, vector<32x32xf32>
      %26 = arith.index_cast %arg15 : i32 to index
      %c0_19 = arith.constant 0 : index
      %c0_20 = arith.constant 0 : index
      %27 = vector.load %arg1[%26, %c0_19, %c0_20] : memref<2x32x256xf32, #tpu.memory_space<vmem>>, vector<1x32x256xf32>
      %28 = vector.shape_cast %27 : vector<1x32x256xf32> to vector<32x256xf32>
      %cst_21 = arith.constant dense<0.000000e+00> : vector<32x256xf32>
      %29 = tpu.matmul %25, %28, %cst_21 {dimension_numbers = #tpu.dot_dimension_numbers<[1], [0], [0], [1], [0, 0, 1, 1], [], []>} : vector<32x32xf32>, vector<32x256xf32>, vector<32x256xf32> -> vector<32x256xf32>
      %30 = arith.addf %24, %29 : vector<32x256xf32>
      %c0_22 = arith.constant 0 : index
      %c0_23 = arith.constant 0 : index
      %31 = vector.load %arg4[%c0_22, %c0_23] : memref<32x1xf32, #tpu.memory_space<vmem>>, vector<32x1xf32>
      %32 = vector.broadcast %31 : vector<32x1xf32> to vector<32x256xf32>
      %33 = arith.addf %30, %32 : vector<32x256xf32>
      %cst_24 = arith.constant dense<0.000000e+00> : vector<32xf32>
      %34 = vector.multi_reduction <add>, %33, %cst_24 [1] : vector<32x256xf32> to vector<32xf32>
      %35 = vector.shape_cast %34 : vector<32xf32> to vector<32x1xf32>
      %cst_25 = arith.constant 2.560000e+02 : f32
      %36 = vector.broadcast %cst_25 : f32 to vector<32x1xf32>
      %37 = arith.divf %35, %36 : vector<32x1xf32>
      %c0_26 = arith.constant 0 : index
      %c0_27 = arith.constant 0 : index
      %38 = vector.load %arg5[%c0_26, %c0_27] : memref<2x32xf32, #tpu.memory_space<vmem>>, vector<2x32xf32>
      %cst_28 = arith.constant dense<0.000000e+00> : vector<2x1xf32>
      %39 = tpu.matmul %38, %37, %cst_28 {dimension_numbers = #tpu.dot_dimension_numbers<[1], [0], [0], [1], [0, 0, 1, 1], [], []>} : vector<2x32xf32>, vector<32x1xf32>, vector<2x1xf32> -> vector<2x1xf32>
      %c0_29 = arith.constant 0 : index
      %c0_30 = arith.constant 0 : index
      %40 = vector.load %arg6[%c0_29, %c0_30] : memref<2x1xf32, #tpu.memory_space<vmem>>, vector<2x1xf32>
      %41 = arith.addf %39, %40 : vector<2x1xf32>
      %cst_31 = arith.constant 0.000000e+00 : f32
      %42 = vector.broadcast %cst_31 : f32 to vector<2x1xf32>
      %43 = arith.maximumf %41, %42 : vector<2x1xf32>
      %c0_32 = arith.constant 0 : index
      %c0_33 = arith.constant 0 : index
      %44 = vector.load %arg7[%c0_32, %c0_33] : memref<32x2xf32, #tpu.memory_space<vmem>>, vector<32x2xf32>
      %cst_34 = arith.constant dense<0.000000e+00> : vector<32x1xf32>
      %45 = tpu.matmul %44, %43, %cst_34 {dimension_numbers = #tpu.dot_dimension_numbers<[1], [0], [0], [1], [0, 0, 1, 1], [], []>} : vector<32x2xf32>, vector<2x1xf32>, vector<32x1xf32> -> vector<32x1xf32>
      %c0_35 = arith.constant 0 : index
      %c0_36 = arith.constant 0 : index
      %46 = vector.load %arg8[%c0_35, %c0_36] : memref<32x1xf32, #tpu.memory_space<vmem>>, vector<32x1xf32>
      %47 = arith.addf %45, %46 : vector<32x1xf32>
      %cst_37 = arith.constant 0.000000e+00 : f32
      %48 = vector.broadcast %cst_37 : f32 to vector<32x1xf32>
      %49 = arith.subf %48, %47 : vector<32x1xf32>
      %50 = math.exp %49 : vector<32x1xf32>
      %cst_38 = arith.constant 1.000000e+00 : f32
      %51 = vector.broadcast %cst_38 : f32 to vector<32x1xf32>
      %52 = arith.addf %51, %50 : vector<32x1xf32>
      %cst_39 = arith.constant 1.000000e+00 : f32
      %53 = vector.broadcast %cst_39 : f32 to vector<32x1xf32>
      %54 = arith.divf %53, %52 : vector<32x1xf32>
      %55 = vector.broadcast %54 : vector<32x1xf32> to vector<32x256xf32>
      %56 = arith.mulf %33, %55 : vector<32x256xf32>
      %cst_40 = arith.constant dense<0.000000e+00> : vector<256xf32>
      %57 = vector.multi_reduction <add>, %56, %cst_40 [0] : vector<32x256xf32> to vector<256xf32>
      %58 = vector.shape_cast %57 : vector<256xf32> to vector<1x256xf32>
      %cst_41 = arith.constant 3.200000e+01 : f32
      %59 = vector.broadcast %cst_41 : f32 to vector<1x256xf32>
      %60 = arith.divf %58, %59 : vector<1x256xf32>
      %cst_42 = arith.constant dense<0xFF800000> : vector<256xf32>
      %61 = vector.multi_reduction <maximumf>, %56, %cst_42 [0] : vector<32x256xf32> to vector<256xf32>
      %62 = vector.shape_cast %61 : vector<256xf32> to vector<1x256xf32>
      %63 = tpu.concatenate %60, %62 in 0 : vector<1x256xf32>, vector<1x256xf32> -> vector<2x256xf32>
      %cst_43 = arith.constant 0.000000e+00 : f32
      %64 = vector.broadcast %cst_43 : f32 to vector<2x51xf32>
      %65 = tpu.concatenate %64, %63, %64 in 1 : vector<2x51xf32>, vector<2x256xf32>, vector<2x51xf32> -> vector<2x358xf32>
      %c0_44 = arith.constant 0 : index
      %c0_45 = arith.constant 0 : index
      %66 = vector.load %arg12[%c0_44, %c0_45] : memref<1x256xi32, #tpu.memory_space<vmem>>, vector<1x256xi32>
      %c0_46 = arith.constant 0 : index
      %c0_47 = arith.constant 0 : index
      %67 = vector.load %arg13[%c0_46, %c0_47] : memref<1x256xi32, #tpu.memory_space<vmem>>, vector<1x256xi32>
      %c-3_i32 = arith.constant -3 : i32
      %68 = vector.broadcast %c-3_i32 : i32 to vector<1x256xi32>
      %69 = arith.addi %66, %68 : vector<1x256xi32>
      %c0_i32_48 = arith.constant 0 : i32
      %70 = vector.broadcast %c0_i32_48 : i32 to vector<1x256xi32>
      %71 = arith.cmpi sge, %69, %70 : vector<1x256xi32>
      %c-3_i32_49 = arith.constant -3 : i32
      %72 = vector.broadcast %c-3_i32_49 : i32 to vector<1x256xi32>
      %73 = arith.addi %66, %72 : vector<1x256xi32>
      %c16_i32 = arith.constant 16 : i32
      %74 = vector.broadcast %c16_i32 : i32 to vector<1x256xi32>
      %75 = arith.cmpi slt, %73, %74 : vector<1x256xi32>
      %76 = arith.andi %71, %75 : vector<1x256xi1>
      %c-2_i32 = arith.constant -2 : i32
      %77 = vector.broadcast %c-2_i32 : i32 to vector<1x256xi32>
      %78 = arith.addi %66, %77 : vector<1x256xi32>
      %c0_i32_50 = arith.constant 0 : i32
      %79 = vector.broadcast %c0_i32_50 : i32 to vector<1x256xi32>
      %80 = arith.cmpi sge, %78, %79 : vector<1x256xi32>
      %c-2_i32_51 = arith.constant -2 : i32
      %81 = vector.broadcast %c-2_i32_51 : i32 to vector<1x256xi32>
      %82 = arith.addi %66, %81 : vector<1x256xi32>
      %c16_i32_52 = arith.constant 16 : i32
      %83 = vector.broadcast %c16_i32_52 : i32 to vector<1x256xi32>
      %84 = arith.cmpi slt, %82, %83 : vector<1x256xi32>
      %85 = arith.andi %80, %84 : vector<1x256xi1>
      %c-1_i32 = arith.constant -1 : i32
      %86 = vector.broadcast %c-1_i32 : i32 to vector<1x256xi32>
      %87 = arith.addi %66, %86 : vector<1x256xi32>
      %c0_i32_53 = arith.constant 0 : i32
      %88 = vector.broadcast %c0_i32_53 : i32 to vector<1x256xi32>
      %89 = arith.cmpi sge, %87, %88 : vector<1x256xi32>
      %c-1_i32_54 = arith.constant -1 : i32
      %90 = vector.broadcast %c-1_i32_54 : i32 to vector<1x256xi32>
      %91 = arith.addi %66, %90 : vector<1x256xi32>
      %c16_i32_55 = arith.constant 16 : i32
      %92 = vector.broadcast %c16_i32_55 : i32 to vector<1x256xi32>
      %93 = arith.cmpi slt, %91, %92 : vector<1x256xi32>
      %94 = arith.andi %89, %93 : vector<1x256xi1>
      %c0_i32_56 = arith.constant 0 : i32
      %95 = vector.broadcast %c0_i32_56 : i32 to vector<1x256xi32>
      %96 = arith.addi %66, %95 : vector<1x256xi32>
      %c0_i32_57 = arith.constant 0 : i32
      %97 = vector.broadcast %c0_i32_57 : i32 to vector<1x256xi32>
      %98 = arith.cmpi sge, %96, %97 : vector<1x256xi32>
      %c0_i32_58 = arith.constant 0 : i32
      %99 = vector.broadcast %c0_i32_58 : i32 to vector<1x256xi32>
      %100 = arith.addi %66, %99 : vector<1x256xi32>
      %c16_i32_59 = arith.constant 16 : i32
      %101 = vector.broadcast %c16_i32_59 : i32 to vector<1x256xi32>
      %102 = arith.cmpi slt, %100, %101 : vector<1x256xi32>
      %103 = arith.andi %98, %102 : vector<1x256xi1>
      %c1_i32_60 = arith.constant 1 : i32
      %104 = vector.broadcast %c1_i32_60 : i32 to vector<1x256xi32>
      %105 = arith.addi %66, %104 : vector<1x256xi32>
      %c0_i32_61 = arith.constant 0 : i32
      %106 = vector.broadcast %c0_i32_61 : i32 to vector<1x256xi32>
      %107 = arith.cmpi sge, %105, %106 : vector<1x256xi32>
      %c1_i32_62 = arith.constant 1 : i32
      %108 = vector.broadcast %c1_i32_62 : i32 to vector<1x256xi32>
      %109 = arith.addi %66, %108 : vector<1x256xi32>
      %c16_i32_63 = arith.constant 16 : i32
      %110 = vector.broadcast %c16_i32_63 : i32 to vector<1x256xi32>
      %111 = arith.cmpi slt, %109, %110 : vector<1x256xi32>
      %112 = arith.andi %107, %111 : vector<1x256xi1>
      %c2_i32_64 = arith.constant 2 : i32
      %113 = vector.broadcast %c2_i32_64 : i32 to vector<1x256xi32>
      %114 = arith.addi %66, %113 : vector<1x256xi32>
      %c0_i32_65 = arith.constant 0 : i32
      %115 = vector.broadcast %c0_i32_65 : i32 to vector<1x256xi32>
      %116 = arith.cmpi sge, %114, %115 : vector<1x256xi32>
      %c2_i32_66 = arith.constant 2 : i32
      %117 = vector.broadcast %c2_i32_66 : i32 to vector<1x256xi32>
      %118 = arith.addi %66, %117 : vector<1x256xi32>
      %c16_i32_67 = arith.constant 16 : i32
      %119 = vector.broadcast %c16_i32_67 : i32 to vector<1x256xi32>
      %120 = arith.cmpi slt, %118, %119 : vector<1x256xi32>
      %121 = arith.andi %116, %120 : vector<1x256xi1>
      %c3_i32 = arith.constant 3 : i32
      %122 = vector.broadcast %c3_i32 : i32 to vector<1x256xi32>
      %123 = arith.addi %66, %122 : vector<1x256xi32>
      %c0_i32_68 = arith.constant 0 : i32
      %124 = vector.broadcast %c0_i32_68 : i32 to vector<1x256xi32>
      %125 = arith.cmpi sge, %123, %124 : vector<1x256xi32>
      %c3_i32_69 = arith.constant 3 : i32
      %126 = vector.broadcast %c3_i32_69 : i32 to vector<1x256xi32>
      %127 = arith.addi %66, %126 : vector<1x256xi32>
      %c16_i32_70 = arith.constant 16 : i32
      %128 = vector.broadcast %c16_i32_70 : i32 to vector<1x256xi32>
      %129 = arith.cmpi slt, %127, %128 : vector<1x256xi32>
      %130 = arith.andi %125, %129 : vector<1x256xi1>
      %c-3_i32_71 = arith.constant -3 : i32
      %131 = vector.broadcast %c-3_i32_71 : i32 to vector<1x256xi32>
      %132 = arith.addi %67, %131 : vector<1x256xi32>
      %c0_i32_72 = arith.constant 0 : i32
      %133 = vector.broadcast %c0_i32_72 : i32 to vector<1x256xi32>
      %134 = arith.cmpi sge, %132, %133 : vector<1x256xi32>
      %c-3_i32_73 = arith.constant -3 : i32
      %135 = vector.broadcast %c-3_i32_73 : i32 to vector<1x256xi32>
      %136 = arith.addi %67, %135 : vector<1x256xi32>
      %c16_i32_74 = arith.constant 16 : i32
      %137 = vector.broadcast %c16_i32_74 : i32 to vector<1x256xi32>
      %138 = arith.cmpi slt, %136, %137 : vector<1x256xi32>
      %139 = arith.andi %134, %138 : vector<1x256xi1>
      %c-2_i32_75 = arith.constant -2 : i32
      %140 = vector.broadcast %c-2_i32_75 : i32 to vector<1x256xi32>
      %141 = arith.addi %67, %140 : vector<1x256xi32>
      %c0_i32_76 = arith.constant 0 : i32
      %142 = vector.broadcast %c0_i32_76 : i32 to vector<1x256xi32>
      %143 = arith.cmpi sge, %141, %142 : vector<1x256xi32>
      %c-2_i32_77 = arith.constant -2 : i32
      %144 = vector.broadcast %c-2_i32_77 : i32 to vector<1x256xi32>
      %145 = arith.addi %67, %144 : vector<1x256xi32>
      %c16_i32_78 = arith.constant 16 : i32
      %146 = vector.broadcast %c16_i32_78 : i32 to vector<1x256xi32>
      %147 = arith.cmpi slt, %145, %146 : vector<1x256xi32>
      %148 = arith.andi %143, %147 : vector<1x256xi1>
      %c-1_i32_79 = arith.constant -1 : i32
      %149 = vector.broadcast %c-1_i32_79 : i32 to vector<1x256xi32>
      %150 = arith.addi %67, %149 : vector<1x256xi32>
      %c0_i32_80 = arith.constant 0 : i32
      %151 = vector.broadcast %c0_i32_80 : i32 to vector<1x256xi32>
      %152 = arith.cmpi sge, %150, %151 : vector<1x256xi32>
      %c-1_i32_81 = arith.constant -1 : i32
      %153 = vector.broadcast %c-1_i32_81 : i32 to vector<1x256xi32>
      %154 = arith.addi %67, %153 : vector<1x256xi32>
      %c16_i32_82 = arith.constant 16 : i32
      %155 = vector.broadcast %c16_i32_82 : i32 to vector<1x256xi32>
      %156 = arith.cmpi slt, %154, %155 : vector<1x256xi32>
      %157 = arith.andi %152, %156 : vector<1x256xi1>
      %c0_i32_83 = arith.constant 0 : i32
      %158 = vector.broadcast %c0_i32_83 : i32 to vector<1x256xi32>
      %159 = arith.addi %67, %158 : vector<1x256xi32>
      %c0_i32_84 = arith.constant 0 : i32
      %160 = vector.broadcast %c0_i32_84 : i32 to vector<1x256xi32>
      %161 = arith.cmpi sge, %159, %160 : vector<1x256xi32>
      %c0_i32_85 = arith.constant 0 : i32
      %162 = vector.broadcast %c0_i32_85 : i32 to vector<1x256xi32>
      %163 = arith.addi %67, %162 : vector<1x256xi32>
      %c16_i32_86 = arith.constant 16 : i32
      %164 = vector.broadcast %c16_i32_86 : i32 to vector<1x256xi32>
      %165 = arith.cmpi slt, %163, %164 : vector<1x256xi32>
      %166 = arith.andi %161, %165 : vector<1x256xi1>
      %c1_i32_87 = arith.constant 1 : i32
      %167 = vector.broadcast %c1_i32_87 : i32 to vector<1x256xi32>
      %168 = arith.addi %67, %167 : vector<1x256xi32>
      %c0_i32_88 = arith.constant 0 : i32
      %169 = vector.broadcast %c0_i32_88 : i32 to vector<1x256xi32>
      %170 = arith.cmpi sge, %168, %169 : vector<1x256xi32>
      %c1_i32_89 = arith.constant 1 : i32
      %171 = vector.broadcast %c1_i32_89 : i32 to vector<1x256xi32>
      %172 = arith.addi %67, %171 : vector<1x256xi32>
      %c16_i32_90 = arith.constant 16 : i32
      %173 = vector.broadcast %c16_i32_90 : i32 to vector<1x256xi32>
      %174 = arith.cmpi slt, %172, %173 : vector<1x256xi32>
      %175 = arith.andi %170, %174 : vector<1x256xi1>
      %c2_i32_91 = arith.constant 2 : i32
      %176 = vector.broadcast %c2_i32_91 : i32 to vector<1x256xi32>
      %177 = arith.addi %67, %176 : vector<1x256xi32>
      %c0_i32_92 = arith.constant 0 : i32
      %178 = vector.broadcast %c0_i32_92 : i32 to vector<1x256xi32>
      %179 = arith.cmpi sge, %177, %178 : vector<1x256xi32>
      %c2_i32_93 = arith.constant 2 : i32
      %180 = vector.broadcast %c2_i32_93 : i32 to vector<1x256xi32>
      %181 = arith.addi %67, %180 : vector<1x256xi32>
      %c16_i32_94 = arith.constant 16 : i32
      %182 = vector.broadcast %c16_i32_94 : i32 to vector<1x256xi32>
      %183 = arith.cmpi slt, %181, %182 : vector<1x256xi32>
      %184 = arith.andi %179, %183 : vector<1x256xi1>
      %c3_i32_95 = arith.constant 3 : i32
      %185 = vector.broadcast %c3_i32_95 : i32 to vector<1x256xi32>
      %186 = arith.addi %67, %185 : vector<1x256xi32>
      %c0_i32_96 = arith.constant 0 : i32
      %187 = vector.broadcast %c0_i32_96 : i32 to vector<1x256xi32>
      %188 = arith.cmpi sge, %186, %187 : vector<1x256xi32>
      %c3_i32_97 = arith.constant 3 : i32
      %189 = vector.broadcast %c3_i32_97 : i32 to vector<1x256xi32>
      %190 = arith.addi %67, %189 : vector<1x256xi32>
      %c16_i32_98 = arith.constant 16 : i32
      %191 = vector.broadcast %c16_i32_98 : i32 to vector<1x256xi32>
      %192 = arith.cmpi slt, %190, %191 : vector<1x256xi32>
      %193 = arith.andi %188, %192 : vector<1x256xi1>
      %cst_99 = arith.constant 0.000000e+00 : f32
      %194 = vector.broadcast %cst_99 : f32 to vector<1x256xf32>
      %195 = vector.extract_strided_slice %65 {offsets = [0, 0], sizes = [2, 256], strides = [1, 1]} : vector<2x358xf32> to vector<2x256xf32>
      %196 = arith.andi %76, %139 : vector<1x256xi1>
      %cst_100 = arith.constant 0.000000e+00 : f32
      %197 = vector.shape_cast %196 : vector<1x256xi1> to vector<1x256xi1>
      %198 = vector.broadcast %197 : vector<1x256xi1> to vector<2x256xi1>
      %199 = vector.broadcast %cst_100 : f32 to vector<2x256xf32>
      %200 = arith.select %198, %195, %199 : vector<2x256xi1>, vector<2x256xf32>
      %c0_101 = arith.constant 0 : index
      %201 = memref.load %arg9[%c0_101] : memref<99xf32, #tpu.memory_space<smem>>
      %c49 = arith.constant 49 : index
      %202 = memref.load %arg9[%c49] : memref<99xf32, #tpu.memory_space<smem>>
      %203 = vector.extract_strided_slice %200 {offsets = [0, 0], sizes = [1, 256], strides = [1, 1]} : vector<2x256xf32> to vector<1x256xf32>
      %204 = vector.broadcast %201 : f32 to vector<1x256xf32>
      %205 = arith.mulf %204, %203 : vector<1x256xf32>
      %206 = arith.addf %194, %205 : vector<1x256xf32>
      %207 = vector.extract_strided_slice %200 {offsets = [1, 0], sizes = [1, 256], strides = [1, 1]} : vector<2x256xf32> to vector<1x256xf32>
      %208 = vector.broadcast %202 : f32 to vector<1x256xf32>
      %209 = arith.mulf %208, %207 : vector<1x256xf32>
      %210 = arith.addf %206, %209 : vector<1x256xf32>
      %211 = vector.extract_strided_slice %65 {offsets = [0, 1], sizes = [2, 256], strides = [1, 1]} : vector<2x358xf32> to vector<2x256xf32>
      %212 = arith.andi %76, %148 : vector<1x256xi1>
      %cst_102 = arith.constant 0.000000e+00 : f32
      %213 = vector.shape_cast %212 : vector<1x256xi1> to vector<1x256xi1>
      %214 = vector.broadcast %213 : vector<1x256xi1> to vector<2x256xi1>
      %215 = vector.broadcast %cst_102 : f32 to vector<2x256xf32>
      %216 = arith.select %214, %211, %215 : vector<2x256xi1>, vector<2x256xf32>
      %c1 = arith.constant 1 : index
      %217 = memref.load %arg9[%c1] : memref<99xf32, #tpu.memory_space<smem>>
      %c50 = arith.constant 50 : index
      %218 = memref.load %arg9[%c50] : memref<99xf32, #tpu.memory_space<smem>>
      %219 = vector.extract_strided_slice %216 {offsets = [0, 0], sizes = [1, 256], strides = [1, 1]} : vector<2x256xf32> to vector<1x256xf32>
      %220 = vector.broadcast %217 : f32 to vector<1x256xf32>
      %221 = arith.mulf %220, %219 : vector<1x256xf32>
      %222 = arith.addf %210, %221 : vector<1x256xf32>
      %223 = vector.extract_strided_slice %216 {offsets = [1, 0], sizes = [1, 256], strides = [1, 1]} : vector<2x256xf32> to vector<1x256xf32>
      %224 = vector.broadcast %218 : f32 to vector<1x256xf32>
      %225 = arith.mulf %224, %223 : vector<1x256xf32>
      %226 = arith.addf %222, %225 : vector<1x256xf32>
      %227 = vector.extract_strided_slice %65 {offsets = [0, 2], sizes = [2, 256], strides = [1, 1]} : vector<2x358xf32> to vector<2x256xf32>
      %228 = arith.andi %76, %157 : vector<1x256xi1>
      %cst_103 = arith.constant 0.000000e+00 : f32
      %229 = vector.shape_cast %228 : vector<1x256xi1> to vector<1x256xi1>
      %230 = vector.broadcast %229 : vector<1x256xi1> to vector<2x256xi1>
      %231 = vector.broadcast %cst_103 : f32 to vector<2x256xf32>
      %232 = arith.select %230, %227, %231 : vector<2x256xi1>, vector<2x256xf32>
      %c2 = arith.constant 2 : index
      %233 = memref.load %arg9[%c2] : memref<99xf32, #tpu.memory_space<smem>>
      %c51 = arith.constant 51 : index
      %234 = memref.load %arg9[%c51] : memref<99xf32, #tpu.memory_space<smem>>
      %235 = vector.extract_strided_slice %232 {offsets = [0, 0], sizes = [1, 256], strides = [1, 1]} : vector<2x256xf32> to vector<1x256xf32>
      %236 = vector.broadcast %233 : f32 to vector<1x256xf32>
      %237 = arith.mulf %236, %235 : vector<1x256xf32>
      %238 = arith.addf %226, %237 : vector<1x256xf32>
      %239 = vector.extract_strided_slice %232 {offsets = [1, 0], sizes = [1, 256], strides = [1, 1]} : vector<2x256xf32> to vector<1x256xf32>
      %240 = vector.broadcast %234 : f32 to vector<1x256xf32>
      %241 = arith.mulf %240, %239 : vector<1x256xf32>
      %242 = arith.addf %238, %241 : vector<1x256xf32>
      %243 = vector.extract_strided_slice %65 {offsets = [0, 3], sizes = [2, 256], strides = [1, 1]} : vector<2x358xf32> to vector<2x256xf32>
      %244 = arith.andi %76, %166 : vector<1x256xi1>
      %cst_104 = arith.constant 0.000000e+00 : f32
      %245 = vector.shape_cast %244 : vector<1x256xi1> to vector<1x256xi1>
      %246 = vector.broadcast %245 : vector<1x256xi1> to vector<2x256xi1>
      %247 = vector.broadcast %cst_104 : f32 to vector<2x256xf32>
      %248 = arith.select %246, %243, %247 : vector<2x256xi1>, vector<2x256xf32>
      %c3 = arith.constant 3 : index
      %249 = memref.load %arg9[%c3] : memref<99xf32, #tpu.memory_space<smem>>
      %c52 = arith.constant 52 : index
      %250 = memref.load %arg9[%c52] : memref<99xf32, #tpu.memory_space<smem>>
      %251 = vector.extract_strided_slice %248 {offsets = [0, 0], sizes = [1, 256], strides = [1, 1]} : vector<2x256xf32> to vector<1x256xf32>
      %252 = vector.broadcast %249 : f32 to vector<1x256xf32>
      %253 = arith.mulf %252, %251 : vector<1x256xf32>
      %254 = arith.addf %242, %253 : vector<1x256xf32>
      %255 = vector.extract_strided_slice %248 {offsets = [1, 0], sizes = [1, 256], strides = [1, 1]} : vector<2x256xf32> to vector<1x256xf32>
      %256 = vector.broadcast %250 : f32 to vector<1x256xf32>
      %257 = arith.mulf %256, %255 : vector<1x256xf32>
      %258 = arith.addf %254, %257 : vector<1x256xf32>
      %259 = vector.extract_strided_slice %65 {offsets = [0, 4], sizes = [2, 256], strides = [1, 1]} : vector<2x358xf32> to vector<2x256xf32>
      %260 = arith.andi %76, %175 : vector<1x256xi1>
      %cst_105 = arith.constant 0.000000e+00 : f32
      %261 = vector.shape_cast %260 : vector<1x256xi1> to vector<1x256xi1>
      %262 = vector.broadcast %261 : vector<1x256xi1> to vector<2x256xi1>
      %263 = vector.broadcast %cst_105 : f32 to vector<2x256xf32>
      %264 = arith.select %262, %259, %263 : vector<2x256xi1>, vector<2x256xf32>
      %c4 = arith.constant 4 : index
      %265 = memref.load %arg9[%c4] : memref<99xf32, #tpu.memory_space<smem>>
      %c53 = arith.constant 53 : index
      %266 = memref.load %arg9[%c53] : memref<99xf32, #tpu.memory_space<smem>>
      %267 = vector.extract_strided_slice %264 {offsets = [0, 0], sizes = [1, 256], strides = [1, 1]} : vector<2x256xf32> to vector<1x256xf32>
      %268 = vector.broadcast %265 : f32 to vector<1x256xf32>
      %269 = arith.mulf %268, %267 : vector<1x256xf32>
      %270 = arith.addf %258, %269 : vector<1x256xf32>
      %271 = vector.extract_strided_slice %264 {offsets = [1, 0], sizes = [1, 256], strides = [1, 1]} : vector<2x256xf32> to vector<1x256xf32>
      %272 = vector.broadcast %266 : f32 to vector<1x256xf32>
      %273 = arith.mulf %272, %271 : vector<1x256xf32>
      %274 = arith.addf %270, %273 : vector<1x256xf32>
      %275 = vector.extract_strided_slice %65 {offsets = [0, 5], sizes = [2, 256], strides = [1, 1]} : vector<2x358xf32> to vector<2x256xf32>
      %276 = arith.andi %76, %184 : vector<1x256xi1>
      %cst_106 = arith.constant 0.000000e+00 : f32
      %277 = vector.shape_cast %276 : vector<1x256xi1> to vector<1x256xi1>
      %278 = vector.broadcast %277 : vector<1x256xi1> to vector<2x256xi1>
      %279 = vector.broadcast %cst_106 : f32 to vector<2x256xf32>
      %280 = arith.select %278, %275, %279 : vector<2x256xi1>, vector<2x256xf32>
      %c5 = arith.constant 5 : index
      %281 = memref.load %arg9[%c5] : memref<99xf32, #tpu.memory_space<smem>>
      %c54 = arith.constant 54 : index
      %282 = memref.load %arg9[%c54] : memref<99xf32, #tpu.memory_space<smem>>
      %283 = vector.extract_strided_slice %280 {offsets = [0, 0], sizes = [1, 256], strides = [1, 1]} : vector<2x256xf32> to vector<1x256xf32>
      %284 = vector.broadcast %281 : f32 to vector<1x256xf32>
      %285 = arith.mulf %284, %283 : vector<1x256xf32>
      %286 = arith.addf %274, %285 : vector<1x256xf32>
      %287 = vector.extract_strided_slice %280 {offsets = [1, 0], sizes = [1, 256], strides = [1, 1]} : vector<2x256xf32> to vector<1x256xf32>
      %288 = vector.broadcast %282 : f32 to vector<1x256xf32>
      %289 = arith.mulf %288, %287 : vector<1x256xf32>
      %290 = arith.addf %286, %289 : vector<1x256xf32>
      %291 = vector.extract_strided_slice %65 {offsets = [0, 6], sizes = [2, 256], strides = [1, 1]} : vector<2x358xf32> to vector<2x256xf32>
      %292 = arith.andi %76, %193 : vector<1x256xi1>
      %cst_107 = arith.constant 0.000000e+00 : f32
      %293 = vector.shape_cast %292 : vector<1x256xi1> to vector<1x256xi1>
      %294 = vector.broadcast %293 : vector<1x256xi1> to vector<2x256xi1>
      %295 = vector.broadcast %cst_107 : f32 to vector<2x256xf32>
      %296 = arith.select %294, %291, %295 : vector<2x256xi1>, vector<2x256xf32>
      %c6 = arith.constant 6 : index
      %297 = memref.load %arg9[%c6] : memref<99xf32, #tpu.memory_space<smem>>
      %c55 = arith.constant 55 : index
      %298 = memref.load %arg9[%c55] : memref<99xf32, #tpu.memory_space<smem>>
      %299 = vector.extract_strided_slice %296 {offsets = [0, 0], sizes = [1, 256], strides = [1, 1]} : vector<2x256xf32> to vector<1x256xf32>
      %300 = vector.broadcast %297 : f32 to vector<1x256xf32>
      %301 = arith.mulf %300, %299 : vector<1x256xf32>
      %302 = arith.addf %290, %301 : vector<1x256xf32>
      %303 = vector.extract_strided_slice %296 {offsets = [1, 0], sizes = [1, 256], strides = [1, 1]} : vector<2x256xf32> to vector<1x256xf32>
      %304 = vector.broadcast %298 : f32 to vector<1x256xf32>
      %305 = arith.mulf %304, %303 : vector<1x256xf32>
      %306 = arith.addf %302, %305 : vector<1x256xf32>
      %307 = vector.extract_strided_slice %65 {offsets = [0, 16], sizes = [2, 256], strides = [1, 1]} : vector<2x358xf32> to vector<2x256xf32>
      %308 = arith.andi %85, %139 : vector<1x256xi1>
      %cst_108 = arith.constant 0.000000e+00 : f32
      %309 = vector.shape_cast %308 : vector<1x256xi1> to vector<1x256xi1>
      %310 = vector.broadcast %309 : vector<1x256xi1> to vector<2x256xi1>
      %311 = vector.broadcast %cst_108 : f32 to vector<2x256xf32>
      %312 = arith.select %310, %307, %311 : vector<2x256xi1>, vector<2x256xf32>
      %c7 = arith.constant 7 : index
      %313 = memref.load %arg9[%c7] : memref<99xf32, #tpu.memory_space<smem>>
      %c56 = arith.constant 56 : index
      %314 = memref.load %arg9[%c56] : memref<99xf32, #tpu.memory_space<smem>>
      %315 = vector.extract_strided_slice %312 {offsets = [0, 0], sizes = [1, 256], strides = [1, 1]} : vector<2x256xf32> to vector<1x256xf32>
      %316 = vector.broadcast %313 : f32 to vector<1x256xf32>
      %317 = arith.mulf %316, %315 : vector<1x256xf32>
      %318 = arith.addf %306, %317 : vector<1x256xf32>
      %319 = vector.extract_strided_slice %312 {offsets = [1, 0], sizes = [1, 256], strides = [1, 1]} : vector<2x256xf32> to vector<1x256xf32>
      %320 = vector.broadcast %314 : f32 to vector<1x256xf32>
      %321 = arith.mulf %320, %319 : vector<1x256xf32>
      %322 = arith.addf %318, %321 : vector<1x256xf32>
      %323 = vector.extract_strided_slice %65 {offsets = [0, 17], sizes = [2, 256], strides = [1, 1]} : vector<2x358xf32> to vector<2x256xf32>
      %324 = arith.andi %85, %148 : vector<1x256xi1>
      %cst_109 = arith.constant 0.000000e+00 : f32
      %325 = vector.shape_cast %324 : vector<1x256xi1> to vector<1x256xi1>
      %326 = vector.broadcast %325 : vector<1x256xi1> to vector<2x256xi1>
      %327 = vector.broadcast %cst_109 : f32 to vector<2x256xf32>
      %328 = arith.select %326, %323, %327 : vector<2x256xi1>, vector<2x256xf32>
      %c8 = arith.constant 8 : index
      %329 = memref.load %arg9[%c8] : memref<99xf32, #tpu.memory_space<smem>>
      %c57 = arith.constant 57 : index
      %330 = memref.load %arg9[%c57] : memref<99xf32, #tpu.memory_space<smem>>
      %331 = vector.extract_strided_slice %328 {offsets = [0, 0], sizes = [1, 256], strides = [1, 1]} : vector<2x256xf32> to vector<1x256xf32>
      %332 = vector.broadcast %329 : f32 to vector<1x256xf32>
      %333 = arith.mulf %332, %331 : vector<1x256xf32>
      %334 = arith.addf %322, %333 : vector<1x256xf32>
      %335 = vector.extract_strided_slice %328 {offsets = [1, 0], sizes = [1, 256], strides = [1, 1]} : vector<2x256xf32> to vector<1x256xf32>
      %336 = vector.broadcast %330 : f32 to vector<1x256xf32>
      %337 = arith.mulf %336, %335 : vector<1x256xf32>
      %338 = arith.addf %334, %337 : vector<1x256xf32>
      %339 = vector.extract_strided_slice %65 {offsets = [0, 18], sizes = [2, 256], strides = [1, 1]} : vector<2x358xf32> to vector<2x256xf32>
      %340 = arith.andi %85, %157 : vector<1x256xi1>
      %cst_110 = arith.constant 0.000000e+00 : f32
      %341 = vector.shape_cast %340 : vector<1x256xi1> to vector<1x256xi1>
      %342 = vector.broadcast %341 : vector<1x256xi1> to vector<2x256xi1>
      %343 = vector.broadcast %cst_110 : f32 to vector<2x256xf32>
      %344 = arith.select %342, %339, %343 : vector<2x256xi1>, vector<2x256xf32>
      %c9 = arith.constant 9 : index
      %345 = memref.load %arg9[%c9] : memref<99xf32, #tpu.memory_space<smem>>
      %c58 = arith.constant 58 : index
      %346 = memref.load %arg9[%c58] : memref<99xf32, #tpu.memory_space<smem>>
      %347 = vector.extract_strided_slice %344 {offsets = [0, 0], sizes = [1, 256], strides = [1, 1]} : vector<2x256xf32> to vector<1x256xf32>
      %348 = vector.broadcast %345 : f32 to vector<1x256xf32>
      %349 = arith.mulf %348, %347 : vector<1x256xf32>
      %350 = arith.addf %338, %349 : vector<1x256xf32>
      %351 = vector.extract_strided_slice %344 {offsets = [1, 0], sizes = [1, 256], strides = [1, 1]} : vector<2x256xf32> to vector<1x256xf32>
      %352 = vector.broadcast %346 : f32 to vector<1x256xf32>
      %353 = arith.mulf %352, %351 : vector<1x256xf32>
      %354 = arith.addf %350, %353 : vector<1x256xf32>
      %355 = vector.extract_strided_slice %65 {offsets = [0, 19], sizes = [2, 256], strides = [1, 1]} : vector<2x358xf32> to vector<2x256xf32>
      %356 = arith.andi %85, %166 : vector<1x256xi1>
      %cst_111 = arith.constant 0.000000e+00 : f32
      %357 = vector.shape_cast %356 : vector<1x256xi1> to vector<1x256xi1>
      %358 = vector.broadcast %357 : vector<1x256xi1> to vector<2x256xi1>
      %359 = vector.broadcast %cst_111 : f32 to vector<2x256xf32>
      %360 = arith.select %358, %355, %359 : vector<2x256xi1>, vector<2x256xf32>
      %c10 = arith.constant 10 : index
      %361 = memref.load %arg9[%c10] : memref<99xf32, #tpu.memory_space<smem>>
      %c59 = arith.constant 59 : index
      %362 = memref.load %arg9[%c59] : memref<99xf32, #tpu.memory_space<smem>>
      %363 = vector.extract_strided_slice %360 {offsets = [0, 0], sizes = [1, 256], strides = [1, 1]} : vector<2x256xf32> to vector<1x256xf32>
      %364 = vector.broadcast %361 : f32 to vector<1x256xf32>
      %365 = arith.mulf %364, %363 : vector<1x256xf32>
      %366 = arith.addf %354, %365 : vector<1x256xf32>
      %367 = vector.extract_strided_slice %360 {offsets = [1, 0], sizes = [1, 256], strides = [1, 1]} : vector<2x256xf32> to vector<1x256xf32>
      %368 = vector.broadcast %362 : f32 to vector<1x256xf32>
      %369 = arith.mulf %368, %367 : vector<1x256xf32>
      %370 = arith.addf %366, %369 : vector<1x256xf32>
      %371 = vector.extract_strided_slice %65 {offsets = [0, 20], sizes = [2, 256], strides = [1, 1]} : vector<2x358xf32> to vector<2x256xf32>
      %372 = arith.andi %85, %175 : vector<1x256xi1>
      %cst_112 = arith.constant 0.000000e+00 : f32
      %373 = vector.shape_cast %372 : vector<1x256xi1> to vector<1x256xi1>
      %374 = vector.broadcast %373 : vector<1x256xi1> to vector<2x256xi1>
      %375 = vector.broadcast %cst_112 : f32 to vector<2x256xf32>
      %376 = arith.select %374, %371, %375 : vector<2x256xi1>, vector<2x256xf32>
      %c11 = arith.constant 11 : index
      %377 = memref.load %arg9[%c11] : memref<99xf32, #tpu.memory_space<smem>>
      %c60 = arith.constant 60 : index
      %378 = memref.load %arg9[%c60] : memref<99xf32, #tpu.memory_space<smem>>
      %379 = vector.extract_strided_slice %376 {offsets = [0, 0], sizes = [1, 256], strides = [1, 1]} : vector<2x256xf32> to vector<1x256xf32>
      %380 = vector.broadcast %377 : f32 to vector<1x256xf32>
      %381 = arith.mulf %380, %379 : vector<1x256xf32>
      %382 = arith.addf %370, %381 : vector<1x256xf32>
      %383 = vector.extract_strided_slice %376 {offsets = [1, 0], sizes = [1, 256], strides = [1, 1]} : vector<2x256xf32> to vector<1x256xf32>
      %384 = vector.broadcast %378 : f32 to vector<1x256xf32>
      %385 = arith.mulf %384, %383 : vector<1x256xf32>
      %386 = arith.addf %382, %385 : vector<1x256xf32>
      %387 = vector.extract_strided_slice %65 {offsets = [0, 21], sizes = [2, 256], strides = [1, 1]} : vector<2x358xf32> to vector<2x256xf32>
      %388 = arith.andi %85, %184 : vector<1x256xi1>
      %cst_113 = arith.constant 0.000000e+00 : f32
      %389 = vector.shape_cast %388 : vector<1x256xi1> to vector<1x256xi1>
      %390 = vector.broadcast %389 : vector<1x256xi1> to vector<2x256xi1>
      %391 = vector.broadcast %cst_113 : f32 to vector<2x256xf32>
      %392 = arith.select %390, %387, %391 : vector<2x256xi1>, vector<2x256xf32>
      %c12 = arith.constant 12 : index
      %393 = memref.load %arg9[%c12] : memref<99xf32, #tpu.memory_space<smem>>
      %c61 = arith.constant 61 : index
      %394 = memref.load %arg9[%c61] : memref<99xf32, #tpu.memory_space<smem>>
      %395 = vector.extract_strided_slice %392 {offsets = [0, 0], sizes = [1, 256], strides = [1, 1]} : vector<2x256xf32> to vector<1x256xf32>
      %396 = vector.broadcast %393 : f32 to vector<1x256xf32>
      %397 = arith.mulf %396, %395 : vector<1x256xf32>
      %398 = arith.addf %386, %397 : vector<1x256xf32>
      %399 = vector.extract_strided_slice %392 {offsets = [1, 0], sizes = [1, 256], strides = [1, 1]} : vector<2x256xf32> to vector<1x256xf32>
      %400 = vector.broadcast %394 : f32 to vector<1x256xf32>
      %401 = arith.mulf %400, %399 : vector<1x256xf32>
      %402 = arith.addf %398, %401 : vector<1x256xf32>
      %403 = vector.extract_strided_slice %65 {offsets = [0, 22], sizes = [2, 256], strides = [1, 1]} : vector<2x358xf32> to vector<2x256xf32>
      %404 = arith.andi %85, %193 : vector<1x256xi1>
      %cst_114 = arith.constant 0.000000e+00 : f32
      %405 = vector.shape_cast %404 : vector<1x256xi1> to vector<1x256xi1>
      %406 = vector.broadcast %405 : vector<1x256xi1> to vector<2x256xi1>
      %407 = vector.broadcast %cst_114 : f32 to vector<2x256xf32>
      %408 = arith.select %406, %403, %407 : vector<2x256xi1>, vector<2x256xf32>
      %c13 = arith.constant 13 : index
      %409 = memref.load %arg9[%c13] : memref<99xf32, #tpu.memory_space<smem>>
      %c62 = arith.constant 62 : index
      %410 = memref.load %arg9[%c62] : memref<99xf32, #tpu.memory_space<smem>>
      %411 = vector.extract_strided_slice %408 {offsets = [0, 0], sizes = [1, 256], strides = [1, 1]} : vector<2x256xf32> to vector<1x256xf32>
      %412 = vector.broadcast %409 : f32 to vector<1x256xf32>
      %413 = arith.mulf %412, %411 : vector<1x256xf32>
      %414 = arith.addf %402, %413 : vector<1x256xf32>
      %415 = vector.extract_strided_slice %408 {offsets = [1, 0], sizes = [1, 256], strides = [1, 1]} : vector<2x256xf32> to vector<1x256xf32>
      %416 = vector.broadcast %410 : f32 to vector<1x256xf32>
      %417 = arith.mulf %416, %415 : vector<1x256xf32>
      %418 = arith.addf %414, %417 : vector<1x256xf32>
      %419 = vector.extract_strided_slice %65 {offsets = [0, 32], sizes = [2, 256], strides = [1, 1]} : vector<2x358xf32> to vector<2x256xf32>
      %420 = arith.andi %94, %139 : vector<1x256xi1>
      %cst_115 = arith.constant 0.000000e+00 : f32
      %421 = vector.shape_cast %420 : vector<1x256xi1> to vector<1x256xi1>
      %422 = vector.broadcast %421 : vector<1x256xi1> to vector<2x256xi1>
      %423 = vector.broadcast %cst_115 : f32 to vector<2x256xf32>
      %424 = arith.select %422, %419, %423 : vector<2x256xi1>, vector<2x256xf32>
      %c14 = arith.constant 14 : index
      %425 = memref.load %arg9[%c14] : memref<99xf32, #tpu.memory_space<smem>>
      %c63 = arith.constant 63 : index
      %426 = memref.load %arg9[%c63] : memref<99xf32, #tpu.memory_space<smem>>
      %427 = vector.extract_strided_slice %424 {offsets = [0, 0], sizes = [1, 256], strides = [1, 1]} : vector<2x256xf32> to vector<1x256xf32>
      %428 = vector.broadcast %425 : f32 to vector<1x256xf32>
      %429 = arith.mulf %428, %427 : vector<1x256xf32>
      %430 = arith.addf %418, %429 : vector<1x256xf32>
      %431 = vector.extract_strided_slice %424 {offsets = [1, 0], sizes = [1, 256], strides = [1, 1]} : vector<2x256xf32> to vector<1x256xf32>
      %432 = vector.broadcast %426 : f32 to vector<1x256xf32>
      %433 = arith.mulf %432, %431 : vector<1x256xf32>
      %434 = arith.addf %430, %433 : vector<1x256xf32>
      %435 = vector.extract_strided_slice %65 {offsets = [0, 33], sizes = [2, 256], strides = [1, 1]} : vector<2x358xf32> to vector<2x256xf32>
      %436 = arith.andi %94, %148 : vector<1x256xi1>
      %cst_116 = arith.constant 0.000000e+00 : f32
      %437 = vector.shape_cast %436 : vector<1x256xi1> to vector<1x256xi1>
      %438 = vector.broadcast %437 : vector<1x256xi1> to vector<2x256xi1>
      %439 = vector.broadcast %cst_116 : f32 to vector<2x256xf32>
      %440 = arith.select %438, %435, %439 : vector<2x256xi1>, vector<2x256xf32>
      %c15 = arith.constant 15 : index
      %441 = memref.load %arg9[%c15] : memref<99xf32, #tpu.memory_space<smem>>
      %c64 = arith.constant 64 : index
      %442 = memref.load %arg9[%c64] : memref<99xf32, #tpu.memory_space<smem>>
      %443 = vector.extract_strided_slice %440 {offsets = [0, 0], sizes = [1, 256], strides = [1, 1]} : vector<2x256xf32> to vector<1x256xf32>
      %444 = vector.broadcast %441 : f32 to vector<1x256xf32>
      %445 = arith.mulf %444, %443 : vector<1x256xf32>
      %446 = arith.addf %434, %445 : vector<1x256xf32>
      %447 = vector.extract_strided_slice %440 {offsets = [1, 0], sizes = [1, 256], strides = [1, 1]} : vector<2x256xf32> to vector<1x256xf32>
      %448 = vector.broadcast %442 : f32 to vector<1x256xf32>
      %449 = arith.mulf %448, %447 : vector<1x256xf32>
      %450 = arith.addf %446, %449 : vector<1x256xf32>
      %451 = vector.extract_strided_slice %65 {offsets = [0, 34], sizes = [2, 256], strides = [1, 1]} : vector<2x358xf32> to vector<2x256xf32>
      %452 = arith.andi %94, %157 : vector<1x256xi1>
      %cst_117 = arith.constant 0.000000e+00 : f32
      %453 = vector.shape_cast %452 : vector<1x256xi1> to vector<1x256xi1>
      %454 = vector.broadcast %453 : vector<1x256xi1> to vector<2x256xi1>
      %455 = vector.broadcast %cst_117 : f32 to vector<2x256xf32>
      %456 = arith.select %454, %451, %455 : vector<2x256xi1>, vector<2x256xf32>
      %c16 = arith.constant 16 : index
      %457 = memref.load %arg9[%c16] : memref<99xf32, #tpu.memory_space<smem>>
      %c65 = arith.constant 65 : index
      %458 = memref.load %arg9[%c65] : memref<99xf32, #tpu.memory_space<smem>>
      %459 = vector.extract_strided_slice %456 {offsets = [0, 0], sizes = [1, 256], strides = [1, 1]} : vector<2x256xf32> to vector<1x256xf32>
      %460 = vector.broadcast %457 : f32 to vector<1x256xf32>
      %461 = arith.mulf %460, %459 : vector<1x256xf32>
      %462 = arith.addf %450, %461 : vector<1x256xf32>
      %463 = vector.extract_strided_slice %456 {offsets = [1, 0], sizes = [1, 256], strides = [1, 1]} : vector<2x256xf32> to vector<1x256xf32>
      %464 = vector.broadcast %458 : f32 to vector<1x256xf32>
      %465 = arith.mulf %464, %463 : vector<1x256xf32>
      %466 = arith.addf %462, %465 : vector<1x256xf32>
      %467 = vector.extract_strided_slice %65 {offsets = [0, 35], sizes = [2, 256], strides = [1, 1]} : vector<2x358xf32> to vector<2x256xf32>
      %468 = arith.andi %94, %166 : vector<1x256xi1>
      %cst_118 = arith.constant 0.000000e+00 : f32
      %469 = vector.shape_cast %468 : vector<1x256xi1> to vector<1x256xi1>
      %470 = vector.broadcast %469 : vector<1x256xi1> to vector<2x256xi1>
      %471 = vector.broadcast %cst_118 : f32 to vector<2x256xf32>
      %472 = arith.select %470, %467, %471 : vector<2x256xi1>, vector<2x256xf32>
      %c17 = arith.constant 17 : index
      %473 = memref.load %arg9[%c17] : memref<99xf32, #tpu.memory_space<smem>>
      %c66 = arith.constant 66 : index
      %474 = memref.load %arg9[%c66] : memref<99xf32, #tpu.memory_space<smem>>
      %475 = vector.extract_strided_slice %472 {offsets = [0, 0], sizes = [1, 256], strides = [1, 1]} : vector<2x256xf32> to vector<1x256xf32>
      %476 = vector.broadcast %473 : f32 to vector<1x256xf32>
      %477 = arith.mulf %476, %475 : vector<1x256xf32>
      %478 = arith.addf %466, %477 : vector<1x256xf32>
      %479 = vector.extract_strided_slice %472 {offsets = [1, 0], sizes = [1, 256], strides = [1, 1]} : vector<2x256xf32> to vector<1x256xf32>
      %480 = vector.broadcast %474 : f32 to vector<1x256xf32>
      %481 = arith.mulf %480, %479 : vector<1x256xf32>
      %482 = arith.addf %478, %481 : vector<1x256xf32>
      %483 = vector.extract_strided_slice %65 {offsets = [0, 36], sizes = [2, 256], strides = [1, 1]} : vector<2x358xf32> to vector<2x256xf32>
      %484 = arith.andi %94, %175 : vector<1x256xi1>
      %cst_119 = arith.constant 0.000000e+00 : f32
      %485 = vector.shape_cast %484 : vector<1x256xi1> to vector<1x256xi1>
      %486 = vector.broadcast %485 : vector<1x256xi1> to vector<2x256xi1>
      %487 = vector.broadcast %cst_119 : f32 to vector<2x256xf32>
      %488 = arith.select %486, %483, %487 : vector<2x256xi1>, vector<2x256xf32>
      %c18 = arith.constant 18 : index
      %489 = memref.load %arg9[%c18] : memref<99xf32, #tpu.memory_space<smem>>
      %c67 = arith.constant 67 : index
      %490 = memref.load %arg9[%c67] : memref<99xf32, #tpu.memory_space<smem>>
      %491 = vector.extract_strided_slice %488 {offsets = [0, 0], sizes = [1, 256], strides = [1, 1]} : vector<2x256xf32> to vector<1x256xf32>
      %492 = vector.broadcast %489 : f32 to vector<1x256xf32>
      %493 = arith.mulf %492, %491 : vector<1x256xf32>
      %494 = arith.addf %482, %493 : vector<1x256xf32>
      %495 = vector.extract_strided_slice %488 {offsets = [1, 0], sizes = [1, 256], strides = [1, 1]} : vector<2x256xf32> to vector<1x256xf32>
      %496 = vector.broadcast %490 : f32 to vector<1x256xf32>
      %497 = arith.mulf %496, %495 : vector<1x256xf32>
      %498 = arith.addf %494, %497 : vector<1x256xf32>
      %499 = vector.extract_strided_slice %65 {offsets = [0, 37], sizes = [2, 256], strides = [1, 1]} : vector<2x358xf32> to vector<2x256xf32>
      %500 = arith.andi %94, %184 : vector<1x256xi1>
      %cst_120 = arith.constant 0.000000e+00 : f32
      %501 = vector.shape_cast %500 : vector<1x256xi1> to vector<1x256xi1>
      %502 = vector.broadcast %501 : vector<1x256xi1> to vector<2x256xi1>
      %503 = vector.broadcast %cst_120 : f32 to vector<2x256xf32>
      %504 = arith.select %502, %499, %503 : vector<2x256xi1>, vector<2x256xf32>
      %c19 = arith.constant 19 : index
      %505 = memref.load %arg9[%c19] : memref<99xf32, #tpu.memory_space<smem>>
      %c68 = arith.constant 68 : index
      %506 = memref.load %arg9[%c68] : memref<99xf32, #tpu.memory_space<smem>>
      %507 = vector.extract_strided_slice %504 {offsets = [0, 0], sizes = [1, 256], strides = [1, 1]} : vector<2x256xf32> to vector<1x256xf32>
      %508 = vector.broadcast %505 : f32 to vector<1x256xf32>
      %509 = arith.mulf %508, %507 : vector<1x256xf32>
      %510 = arith.addf %498, %509 : vector<1x256xf32>
      %511 = vector.extract_strided_slice %504 {offsets = [1, 0], sizes = [1, 256], strides = [1, 1]} : vector<2x256xf32> to vector<1x256xf32>
      %512 = vector.broadcast %506 : f32 to vector<1x256xf32>
      %513 = arith.mulf %512, %511 : vector<1x256xf32>
      %514 = arith.addf %510, %513 : vector<1x256xf32>
      %515 = vector.extract_strided_slice %65 {offsets = [0, 38], sizes = [2, 256], strides = [1, 1]} : vector<2x358xf32> to vector<2x256xf32>
      %516 = arith.andi %94, %193 : vector<1x256xi1>
      %cst_121 = arith.constant 0.000000e+00 : f32
      %517 = vector.shape_cast %516 : vector<1x256xi1> to vector<1x256xi1>
      %518 = vector.broadcast %517 : vector<1x256xi1> to vector<2x256xi1>
      %519 = vector.broadcast %cst_121 : f32 to vector<2x256xf32>
      %520 = arith.select %518, %515, %519 : vector<2x256xi1>, vector<2x256xf32>
      %c20 = arith.constant 20 : index
      %521 = memref.load %arg9[%c20] : memref<99xf32, #tpu.memory_space<smem>>
      %c69 = arith.constant 69 : index
      %522 = memref.load %arg9[%c69] : memref<99xf32, #tpu.memory_space<smem>>
      %523 = vector.extract_strided_slice %520 {offsets = [0, 0], sizes = [1, 256], strides = [1, 1]} : vector<2x256xf32> to vector<1x256xf32>
      %524 = vector.broadcast %521 : f32 to vector<1x256xf32>
      %525 = arith.mulf %524, %523 : vector<1x256xf32>
      %526 = arith.addf %514, %525 : vector<1x256xf32>
      %527 = vector.extract_strided_slice %520 {offsets = [1, 0], sizes = [1, 256], strides = [1, 1]} : vector<2x256xf32> to vector<1x256xf32>
      %528 = vector.broadcast %522 : f32 to vector<1x256xf32>
      %529 = arith.mulf %528, %527 : vector<1x256xf32>
      %530 = arith.addf %526, %529 : vector<1x256xf32>
      %531 = vector.extract_strided_slice %65 {offsets = [0, 48], sizes = [2, 256], strides = [1, 1]} : vector<2x358xf32> to vector<2x256xf32>
      %532 = arith.andi %103, %139 : vector<1x256xi1>
      %cst_122 = arith.constant 0.000000e+00 : f32
      %533 = vector.shape_cast %532 : vector<1x256xi1> to vector<1x256xi1>
      %534 = vector.broadcast %533 : vector<1x256xi1> to vector<2x256xi1>
      %535 = vector.broadcast %cst_122 : f32 to vector<2x256xf32>
      %536 = arith.select %534, %531, %535 : vector<2x256xi1>, vector<2x256xf32>
      %c21 = arith.constant 21 : index
      %537 = memref.load %arg9[%c21] : memref<99xf32, #tpu.memory_space<smem>>
      %c70 = arith.constant 70 : index
      %538 = memref.load %arg9[%c70] : memref<99xf32, #tpu.memory_space<smem>>
      %539 = vector.extract_strided_slice %536 {offsets = [0, 0], sizes = [1, 256], strides = [1, 1]} : vector<2x256xf32> to vector<1x256xf32>
      %540 = vector.broadcast %537 : f32 to vector<1x256xf32>
      %541 = arith.mulf %540, %539 : vector<1x256xf32>
      %542 = arith.addf %530, %541 : vector<1x256xf32>
      %543 = vector.extract_strided_slice %536 {offsets = [1, 0], sizes = [1, 256], strides = [1, 1]} : vector<2x256xf32> to vector<1x256xf32>
      %544 = vector.broadcast %538 : f32 to vector<1x256xf32>
      %545 = arith.mulf %544, %543 : vector<1x256xf32>
      %546 = arith.addf %542, %545 : vector<1x256xf32>
      %547 = vector.extract_strided_slice %65 {offsets = [0, 49], sizes = [2, 256], strides = [1, 1]} : vector<2x358xf32> to vector<2x256xf32>
      %548 = arith.andi %103, %148 : vector<1x256xi1>
      %cst_123 = arith.constant 0.000000e+00 : f32
      %549 = vector.shape_cast %548 : vector<1x256xi1> to vector<1x256xi1>
      %550 = vector.broadcast %549 : vector<1x256xi1> to vector<2x256xi1>
      %551 = vector.broadcast %cst_123 : f32 to vector<2x256xf32>
      %552 = arith.select %550, %547, %551 : vector<2x256xi1>, vector<2x256xf32>
      %c22 = arith.constant 22 : index
      %553 = memref.load %arg9[%c22] : memref<99xf32, #tpu.memory_space<smem>>
      %c71 = arith.constant 71 : index
      %554 = memref.load %arg9[%c71] : memref<99xf32, #tpu.memory_space<smem>>
      %555 = vector.extract_strided_slice %552 {offsets = [0, 0], sizes = [1, 256], strides = [1, 1]} : vector<2x256xf32> to vector<1x256xf32>
      %556 = vector.broadcast %553 : f32 to vector<1x256xf32>
      %557 = arith.mulf %556, %555 : vector<1x256xf32>
      %558 = arith.addf %546, %557 : vector<1x256xf32>
      %559 = vector.extract_strided_slice %552 {offsets = [1, 0], sizes = [1, 256], strides = [1, 1]} : vector<2x256xf32> to vector<1x256xf32>
      %560 = vector.broadcast %554 : f32 to vector<1x256xf32>
      %561 = arith.mulf %560, %559 : vector<1x256xf32>
      %562 = arith.addf %558, %561 : vector<1x256xf32>
      %563 = vector.extract_strided_slice %65 {offsets = [0, 50], sizes = [2, 256], strides = [1, 1]} : vector<2x358xf32> to vector<2x256xf32>
      %564 = arith.andi %103, %157 : vector<1x256xi1>
      %cst_124 = arith.constant 0.000000e+00 : f32
      %565 = vector.shape_cast %564 : vector<1x256xi1> to vector<1x256xi1>
      %566 = vector.broadcast %565 : vector<1x256xi1> to vector<2x256xi1>
      %567 = vector.broadcast %cst_124 : f32 to vector<2x256xf32>
      %568 = arith.select %566, %563, %567 : vector<2x256xi1>, vector<2x256xf32>
      %c23 = arith.constant 23 : index
      %569 = memref.load %arg9[%c23] : memref<99xf32, #tpu.memory_space<smem>>
      %c72 = arith.constant 72 : index
      %570 = memref.load %arg9[%c72] : memref<99xf32, #tpu.memory_space<smem>>
      %571 = vector.extract_strided_slice %568 {offsets = [0, 0], sizes = [1, 256], strides = [1, 1]} : vector<2x256xf32> to vector<1x256xf32>
      %572 = vector.broadcast %569 : f32 to vector<1x256xf32>
      %573 = arith.mulf %572, %571 : vector<1x256xf32>
      %574 = arith.addf %562, %573 : vector<1x256xf32>
      %575 = vector.extract_strided_slice %568 {offsets = [1, 0], sizes = [1, 256], strides = [1, 1]} : vector<2x256xf32> to vector<1x256xf32>
      %576 = vector.broadcast %570 : f32 to vector<1x256xf32>
      %577 = arith.mulf %576, %575 : vector<1x256xf32>
      %578 = arith.addf %574, %577 : vector<1x256xf32>
      %579 = vector.extract_strided_slice %65 {offsets = [0, 51], sizes = [2, 256], strides = [1, 1]} : vector<2x358xf32> to vector<2x256xf32>
      %580 = arith.andi %103, %166 : vector<1x256xi1>
      %cst_125 = arith.constant 0.000000e+00 : f32
      %581 = vector.shape_cast %580 : vector<1x256xi1> to vector<1x256xi1>
      %582 = vector.broadcast %581 : vector<1x256xi1> to vector<2x256xi1>
      %583 = vector.broadcast %cst_125 : f32 to vector<2x256xf32>
      %584 = arith.select %582, %579, %583 : vector<2x256xi1>, vector<2x256xf32>
      %c24 = arith.constant 24 : index
      %585 = memref.load %arg9[%c24] : memref<99xf32, #tpu.memory_space<smem>>
      %c73 = arith.constant 73 : index
      %586 = memref.load %arg9[%c73] : memref<99xf32, #tpu.memory_space<smem>>
      %587 = vector.extract_strided_slice %584 {offsets = [0, 0], sizes = [1, 256], strides = [1, 1]} : vector<2x256xf32> to vector<1x256xf32>
      %588 = vector.broadcast %585 : f32 to vector<1x256xf32>
      %589 = arith.mulf %588, %587 : vector<1x256xf32>
      %590 = arith.addf %578, %589 : vector<1x256xf32>
      %591 = vector.extract_strided_slice %584 {offsets = [1, 0], sizes = [1, 256], strides = [1, 1]} : vector<2x256xf32> to vector<1x256xf32>
      %592 = vector.broadcast %586 : f32 to vector<1x256xf32>
      %593 = arith.mulf %592, %591 : vector<1x256xf32>
      %594 = arith.addf %590, %593 : vector<1x256xf32>
      %595 = vector.extract_strided_slice %65 {offsets = [0, 52], sizes = [2, 256], strides = [1, 1]} : vector<2x358xf32> to vector<2x256xf32>
      %596 = arith.andi %103, %175 : vector<1x256xi1>
      %cst_126 = arith.constant 0.000000e+00 : f32
      %597 = vector.shape_cast %596 : vector<1x256xi1> to vector<1x256xi1>
      %598 = vector.broadcast %597 : vector<1x256xi1> to vector<2x256xi1>
      %599 = vector.broadcast %cst_126 : f32 to vector<2x256xf32>
      %600 = arith.select %598, %595, %599 : vector<2x256xi1>, vector<2x256xf32>
      %c25 = arith.constant 25 : index
      %601 = memref.load %arg9[%c25] : memref<99xf32, #tpu.memory_space<smem>>
      %c74 = arith.constant 74 : index
      %602 = memref.load %arg9[%c74] : memref<99xf32, #tpu.memory_space<smem>>
      %603 = vector.extract_strided_slice %600 {offsets = [0, 0], sizes = [1, 256], strides = [1, 1]} : vector<2x256xf32> to vector<1x256xf32>
      %604 = vector.broadcast %601 : f32 to vector<1x256xf32>
      %605 = arith.mulf %604, %603 : vector<1x256xf32>
      %606 = arith.addf %594, %605 : vector<1x256xf32>
      %607 = vector.extract_strided_slice %600 {offsets = [1, 0], sizes = [1, 256], strides = [1, 1]} : vector<2x256xf32> to vector<1x256xf32>
      %608 = vector.broadcast %602 : f32 to vector<1x256xf32>
      %609 = arith.mulf %608, %607 : vector<1x256xf32>
      %610 = arith.addf %606, %609 : vector<1x256xf32>
      %611 = vector.extract_strided_slice %65 {offsets = [0, 53], sizes = [2, 256], strides = [1, 1]} : vector<2x358xf32> to vector<2x256xf32>
      %612 = arith.andi %103, %184 : vector<1x256xi1>
      %cst_127 = arith.constant 0.000000e+00 : f32
      %613 = vector.shape_cast %612 : vector<1x256xi1> to vector<1x256xi1>
      %614 = vector.broadcast %613 : vector<1x256xi1> to vector<2x256xi1>
      %615 = vector.broadcast %cst_127 : f32 to vector<2x256xf32>
      %616 = arith.select %614, %611, %615 : vector<2x256xi1>, vector<2x256xf32>
      %c26 = arith.constant 26 : index
      %617 = memref.load %arg9[%c26] : memref<99xf32, #tpu.memory_space<smem>>
      %c75 = arith.constant 75 : index
      %618 = memref.load %arg9[%c75] : memref<99xf32, #tpu.memory_space<smem>>
      %619 = vector.extract_strided_slice %616 {offsets = [0, 0], sizes = [1, 256], strides = [1, 1]} : vector<2x256xf32> to vector<1x256xf32>
      %620 = vector.broadcast %617 : f32 to vector<1x256xf32>
      %621 = arith.mulf %620, %619 : vector<1x256xf32>
      %622 = arith.addf %610, %621 : vector<1x256xf32>
      %623 = vector.extract_strided_slice %616 {offsets = [1, 0], sizes = [1, 256], strides = [1, 1]} : vector<2x256xf32> to vector<1x256xf32>
      %624 = vector.broadcast %618 : f32 to vector<1x256xf32>
      %625 = arith.mulf %624, %623 : vector<1x256xf32>
      %626 = arith.addf %622, %625 : vector<1x256xf32>
      %627 = vector.extract_strided_slice %65 {offsets = [0, 54], sizes = [2, 256], strides = [1, 1]} : vector<2x358xf32> to vector<2x256xf32>
      %628 = arith.andi %103, %193 : vector<1x256xi1>
      %cst_128 = arith.constant 0.000000e+00 : f32
      %629 = vector.shape_cast %628 : vector<1x256xi1> to vector<1x256xi1>
      %630 = vector.broadcast %629 : vector<1x256xi1> to vector<2x256xi1>
      %631 = vector.broadcast %cst_128 : f32 to vector<2x256xf32>
      %632 = arith.select %630, %627, %631 : vector<2x256xi1>, vector<2x256xf32>
      %c27 = arith.constant 27 : index
      %633 = memref.load %arg9[%c27] : memref<99xf32, #tpu.memory_space<smem>>
      %c76 = arith.constant 76 : index
      %634 = memref.load %arg9[%c76] : memref<99xf32, #tpu.memory_space<smem>>
      %635 = vector.extract_strided_slice %632 {offsets = [0, 0], sizes = [1, 256], strides = [1, 1]} : vector<2x256xf32> to vector<1x256xf32>
      %636 = vector.broadcast %633 : f32 to vector<1x256xf32>
      %637 = arith.mulf %636, %635 : vector<1x256xf32>
      %638 = arith.addf %626, %637 : vector<1x256xf32>
      %639 = vector.extract_strided_slice %632 {offsets = [1, 0], sizes = [1, 256], strides = [1, 1]} : vector<2x256xf32> to vector<1x256xf32>
      %640 = vector.broadcast %634 : f32 to vector<1x256xf32>
      %641 = arith.mulf %640, %639 : vector<1x256xf32>
      %642 = arith.addf %638, %641 : vector<1x256xf32>
      %643 = vector.extract_strided_slice %65 {offsets = [0, 64], sizes = [2, 256], strides = [1, 1]} : vector<2x358xf32> to vector<2x256xf32>
      %644 = arith.andi %112, %139 : vector<1x256xi1>
      %cst_129 = arith.constant 0.000000e+00 : f32
      %645 = vector.shape_cast %644 : vector<1x256xi1> to vector<1x256xi1>
      %646 = vector.broadcast %645 : vector<1x256xi1> to vector<2x256xi1>
      %647 = vector.broadcast %cst_129 : f32 to vector<2x256xf32>
      %648 = arith.select %646, %643, %647 : vector<2x256xi1>, vector<2x256xf32>
      %c28 = arith.constant 28 : index
      %649 = memref.load %arg9[%c28] : memref<99xf32, #tpu.memory_space<smem>>
      %c77 = arith.constant 77 : index
      %650 = memref.load %arg9[%c77] : memref<99xf32, #tpu.memory_space<smem>>
      %651 = vector.extract_strided_slice %648 {offsets = [0, 0], sizes = [1, 256], strides = [1, 1]} : vector<2x256xf32> to vector<1x256xf32>
      %652 = vector.broadcast %649 : f32 to vector<1x256xf32>
      %653 = arith.mulf %652, %651 : vector<1x256xf32>
      %654 = arith.addf %642, %653 : vector<1x256xf32>
      %655 = vector.extract_strided_slice %648 {offsets = [1, 0], sizes = [1, 256], strides = [1, 1]} : vector<2x256xf32> to vector<1x256xf32>
      %656 = vector.broadcast %650 : f32 to vector<1x256xf32>
      %657 = arith.mulf %656, %655 : vector<1x256xf32>
      %658 = arith.addf %654, %657 : vector<1x256xf32>
      %659 = vector.extract_strided_slice %65 {offsets = [0, 65], sizes = [2, 256], strides = [1, 1]} : vector<2x358xf32> to vector<2x256xf32>
      %660 = arith.andi %112, %148 : vector<1x256xi1>
      %cst_130 = arith.constant 0.000000e+00 : f32
      %661 = vector.shape_cast %660 : vector<1x256xi1> to vector<1x256xi1>
      %662 = vector.broadcast %661 : vector<1x256xi1> to vector<2x256xi1>
      %663 = vector.broadcast %cst_130 : f32 to vector<2x256xf32>
      %664 = arith.select %662, %659, %663 : vector<2x256xi1>, vector<2x256xf32>
      %c29 = arith.constant 29 : index
      %665 = memref.load %arg9[%c29] : memref<99xf32, #tpu.memory_space<smem>>
      %c78 = arith.constant 78 : index
      %666 = memref.load %arg9[%c78] : memref<99xf32, #tpu.memory_space<smem>>
      %667 = vector.extract_strided_slice %664 {offsets = [0, 0], sizes = [1, 256], strides = [1, 1]} : vector<2x256xf32> to vector<1x256xf32>
      %668 = vector.broadcast %665 : f32 to vector<1x256xf32>
      %669 = arith.mulf %668, %667 : vector<1x256xf32>
      %670 = arith.addf %658, %669 : vector<1x256xf32>
      %671 = vector.extract_strided_slice %664 {offsets = [1, 0], sizes = [1, 256], strides = [1, 1]} : vector<2x256xf32> to vector<1x256xf32>
      %672 = vector.broadcast %666 : f32 to vector<1x256xf32>
      %673 = arith.mulf %672, %671 : vector<1x256xf32>
      %674 = arith.addf %670, %673 : vector<1x256xf32>
      %675 = vector.extract_strided_slice %65 {offsets = [0, 66], sizes = [2, 256], strides = [1, 1]} : vector<2x358xf32> to vector<2x256xf32>
      %676 = arith.andi %112, %157 : vector<1x256xi1>
      %cst_131 = arith.constant 0.000000e+00 : f32
      %677 = vector.shape_cast %676 : vector<1x256xi1> to vector<1x256xi1>
      %678 = vector.broadcast %677 : vector<1x256xi1> to vector<2x256xi1>
      %679 = vector.broadcast %cst_131 : f32 to vector<2x256xf32>
      %680 = arith.select %678, %675, %679 : vector<2x256xi1>, vector<2x256xf32>
      %c30 = arith.constant 30 : index
      %681 = memref.load %arg9[%c30] : memref<99xf32, #tpu.memory_space<smem>>
      %c79 = arith.constant 79 : index
      %682 = memref.load %arg9[%c79] : memref<99xf32, #tpu.memory_space<smem>>
      %683 = vector.extract_strided_slice %680 {offsets = [0, 0], sizes = [1, 256], strides = [1, 1]} : vector<2x256xf32> to vector<1x256xf32>
      %684 = vector.broadcast %681 : f32 to vector<1x256xf32>
      %685 = arith.mulf %684, %683 : vector<1x256xf32>
      %686 = arith.addf %674, %685 : vector<1x256xf32>
      %687 = vector.extract_strided_slice %680 {offsets = [1, 0], sizes = [1, 256], strides = [1, 1]} : vector<2x256xf32> to vector<1x256xf32>
      %688 = vector.broadcast %682 : f32 to vector<1x256xf32>
      %689 = arith.mulf %688, %687 : vector<1x256xf32>
      %690 = arith.addf %686, %689 : vector<1x256xf32>
      %691 = vector.extract_strided_slice %65 {offsets = [0, 67], sizes = [2, 256], strides = [1, 1]} : vector<2x358xf32> to vector<2x256xf32>
      %692 = arith.andi %112, %166 : vector<1x256xi1>
      %cst_132 = arith.constant 0.000000e+00 : f32
      %693 = vector.shape_cast %692 : vector<1x256xi1> to vector<1x256xi1>
      %694 = vector.broadcast %693 : vector<1x256xi1> to vector<2x256xi1>
      %695 = vector.broadcast %cst_132 : f32 to vector<2x256xf32>
      %696 = arith.select %694, %691, %695 : vector<2x256xi1>, vector<2x256xf32>
      %c31 = arith.constant 31 : index
      %697 = memref.load %arg9[%c31] : memref<99xf32, #tpu.memory_space<smem>>
      %c80 = arith.constant 80 : index
      %698 = memref.load %arg9[%c80] : memref<99xf32, #tpu.memory_space<smem>>
      %699 = vector.extract_strided_slice %696 {offsets = [0, 0], sizes = [1, 256], strides = [1, 1]} : vector<2x256xf32> to vector<1x256xf32>
      %700 = vector.broadcast %697 : f32 to vector<1x256xf32>
      %701 = arith.mulf %700, %699 : vector<1x256xf32>
      %702 = arith.addf %690, %701 : vector<1x256xf32>
      %703 = vector.extract_strided_slice %696 {offsets = [1, 0], sizes = [1, 256], strides = [1, 1]} : vector<2x256xf32> to vector<1x256xf32>
      %704 = vector.broadcast %698 : f32 to vector<1x256xf32>
      %705 = arith.mulf %704, %703 : vector<1x256xf32>
      %706 = arith.addf %702, %705 : vector<1x256xf32>
      %707 = vector.extract_strided_slice %65 {offsets = [0, 68], sizes = [2, 256], strides = [1, 1]} : vector<2x358xf32> to vector<2x256xf32>
      %708 = arith.andi %112, %175 : vector<1x256xi1>
      %cst_133 = arith.constant 0.000000e+00 : f32
      %709 = vector.shape_cast %708 : vector<1x256xi1> to vector<1x256xi1>
      %710 = vector.broadcast %709 : vector<1x256xi1> to vector<2x256xi1>
      %711 = vector.broadcast %cst_133 : f32 to vector<2x256xf32>
      %712 = arith.select %710, %707, %711 : vector<2x256xi1>, vector<2x256xf32>
      %c32 = arith.constant 32 : index
      %713 = memref.load %arg9[%c32] : memref<99xf32, #tpu.memory_space<smem>>
      %c81 = arith.constant 81 : index
      %714 = memref.load %arg9[%c81] : memref<99xf32, #tpu.memory_space<smem>>
      %715 = vector.extract_strided_slice %712 {offsets = [0, 0], sizes = [1, 256], strides = [1, 1]} : vector<2x256xf32> to vector<1x256xf32>
      %716 = vector.broadcast %713 : f32 to vector<1x256xf32>
      %717 = arith.mulf %716, %715 : vector<1x256xf32>
      %718 = arith.addf %706, %717 : vector<1x256xf32>
      %719 = vector.extract_strided_slice %712 {offsets = [1, 0], sizes = [1, 256], strides = [1, 1]} : vector<2x256xf32> to vector<1x256xf32>
      %720 = vector.broadcast %714 : f32 to vector<1x256xf32>
      %721 = arith.mulf %720, %719 : vector<1x256xf32>
      %722 = arith.addf %718, %721 : vector<1x256xf32>
      %723 = vector.extract_strided_slice %65 {offsets = [0, 69], sizes = [2, 256], strides = [1, 1]} : vector<2x358xf32> to vector<2x256xf32>
      %724 = arith.andi %112, %184 : vector<1x256xi1>
      %cst_134 = arith.constant 0.000000e+00 : f32
      %725 = vector.shape_cast %724 : vector<1x256xi1> to vector<1x256xi1>
      %726 = vector.broadcast %725 : vector<1x256xi1> to vector<2x256xi1>
      %727 = vector.broadcast %cst_134 : f32 to vector<2x256xf32>
      %728 = arith.select %726, %723, %727 : vector<2x256xi1>, vector<2x256xf32>
      %c33 = arith.constant 33 : index
      %729 = memref.load %arg9[%c33] : memref<99xf32, #tpu.memory_space<smem>>
      %c82 = arith.constant 82 : index
      %730 = memref.load %arg9[%c82] : memref<99xf32, #tpu.memory_space<smem>>
      %731 = vector.extract_strided_slice %728 {offsets = [0, 0], sizes = [1, 256], strides = [1, 1]} : vector<2x256xf32> to vector<1x256xf32>
      %732 = vector.broadcast %729 : f32 to vector<1x256xf32>
      %733 = arith.mulf %732, %731 : vector<1x256xf32>
      %734 = arith.addf %722, %733 : vector<1x256xf32>
      %735 = vector.extract_strided_slice %728 {offsets = [1, 0], sizes = [1, 256], strides = [1, 1]} : vector<2x256xf32> to vector<1x256xf32>
      %736 = vector.broadcast %730 : f32 to vector<1x256xf32>
      %737 = arith.mulf %736, %735 : vector<1x256xf32>
      %738 = arith.addf %734, %737 : vector<1x256xf32>
      %739 = vector.extract_strided_slice %65 {offsets = [0, 70], sizes = [2, 256], strides = [1, 1]} : vector<2x358xf32> to vector<2x256xf32>
      %740 = arith.andi %112, %193 : vector<1x256xi1>
      %cst_135 = arith.constant 0.000000e+00 : f32
      %741 = vector.shape_cast %740 : vector<1x256xi1> to vector<1x256xi1>
      %742 = vector.broadcast %741 : vector<1x256xi1> to vector<2x256xi1>
      %743 = vector.broadcast %cst_135 : f32 to vector<2x256xf32>
      %744 = arith.select %742, %739, %743 : vector<2x256xi1>, vector<2x256xf32>
      %c34 = arith.constant 34 : index
      %745 = memref.load %arg9[%c34] : memref<99xf32, #tpu.memory_space<smem>>
      %c83 = arith.constant 83 : index
      %746 = memref.load %arg9[%c83] : memref<99xf32, #tpu.memory_space<smem>>
      %747 = vector.extract_strided_slice %744 {offsets = [0, 0], sizes = [1, 256], strides = [1, 1]} : vector<2x256xf32> to vector<1x256xf32>
      %748 = vector.broadcast %745 : f32 to vector<1x256xf32>
      %749 = arith.mulf %748, %747 : vector<1x256xf32>
      %750 = arith.addf %738, %749 : vector<1x256xf32>
      %751 = vector.extract_strided_slice %744 {offsets = [1, 0], sizes = [1, 256], strides = [1, 1]} : vector<2x256xf32> to vector<1x256xf32>
      %752 = vector.broadcast %746 : f32 to vector<1x256xf32>
      %753 = arith.mulf %752, %751 : vector<1x256xf32>
      %754 = arith.addf %750, %753 : vector<1x256xf32>
      %755 = vector.extract_strided_slice %65 {offsets = [0, 80], sizes = [2, 256], strides = [1, 1]} : vector<2x358xf32> to vector<2x256xf32>
      %756 = arith.andi %121, %139 : vector<1x256xi1>
      %cst_136 = arith.constant 0.000000e+00 : f32
      %757 = vector.shape_cast %756 : vector<1x256xi1> to vector<1x256xi1>
      %758 = vector.broadcast %757 : vector<1x256xi1> to vector<2x256xi1>
      %759 = vector.broadcast %cst_136 : f32 to vector<2x256xf32>
      %760 = arith.select %758, %755, %759 : vector<2x256xi1>, vector<2x256xf32>
      %c35 = arith.constant 35 : index
      %761 = memref.load %arg9[%c35] : memref<99xf32, #tpu.memory_space<smem>>
      %c84 = arith.constant 84 : index
      %762 = memref.load %arg9[%c84] : memref<99xf32, #tpu.memory_space<smem>>
      %763 = vector.extract_strided_slice %760 {offsets = [0, 0], sizes = [1, 256], strides = [1, 1]} : vector<2x256xf32> to vector<1x256xf32>
      %764 = vector.broadcast %761 : f32 to vector<1x256xf32>
      %765 = arith.mulf %764, %763 : vector<1x256xf32>
      %766 = arith.addf %754, %765 : vector<1x256xf32>
      %767 = vector.extract_strided_slice %760 {offsets = [1, 0], sizes = [1, 256], strides = [1, 1]} : vector<2x256xf32> to vector<1x256xf32>
      %768 = vector.broadcast %762 : f32 to vector<1x256xf32>
      %769 = arith.mulf %768, %767 : vector<1x256xf32>
      %770 = arith.addf %766, %769 : vector<1x256xf32>
      %771 = vector.extract_strided_slice %65 {offsets = [0, 81], sizes = [2, 256], strides = [1, 1]} : vector<2x358xf32> to vector<2x256xf32>
      %772 = arith.andi %121, %148 : vector<1x256xi1>
      %cst_137 = arith.constant 0.000000e+00 : f32
      %773 = vector.shape_cast %772 : vector<1x256xi1> to vector<1x256xi1>
      %774 = vector.broadcast %773 : vector<1x256xi1> to vector<2x256xi1>
      %775 = vector.broadcast %cst_137 : f32 to vector<2x256xf32>
      %776 = arith.select %774, %771, %775 : vector<2x256xi1>, vector<2x256xf32>
      %c36 = arith.constant 36 : index
      %777 = memref.load %arg9[%c36] : memref<99xf32, #tpu.memory_space<smem>>
      %c85 = arith.constant 85 : index
      %778 = memref.load %arg9[%c85] : memref<99xf32, #tpu.memory_space<smem>>
      %779 = vector.extract_strided_slice %776 {offsets = [0, 0], sizes = [1, 256], strides = [1, 1]} : vector<2x256xf32> to vector<1x256xf32>
      %780 = vector.broadcast %777 : f32 to vector<1x256xf32>
      %781 = arith.mulf %780, %779 : vector<1x256xf32>
      %782 = arith.addf %770, %781 : vector<1x256xf32>
      %783 = vector.extract_strided_slice %776 {offsets = [1, 0], sizes = [1, 256], strides = [1, 1]} : vector<2x256xf32> to vector<1x256xf32>
      %784 = vector.broadcast %778 : f32 to vector<1x256xf32>
      %785 = arith.mulf %784, %783 : vector<1x256xf32>
      %786 = arith.addf %782, %785 : vector<1x256xf32>
      %787 = vector.extract_strided_slice %65 {offsets = [0, 82], sizes = [2, 256], strides = [1, 1]} : vector<2x358xf32> to vector<2x256xf32>
      %788 = arith.andi %121, %157 : vector<1x256xi1>
      %cst_138 = arith.constant 0.000000e+00 : f32
      %789 = vector.shape_cast %788 : vector<1x256xi1> to vector<1x256xi1>
      %790 = vector.broadcast %789 : vector<1x256xi1> to vector<2x256xi1>
      %791 = vector.broadcast %cst_138 : f32 to vector<2x256xf32>
      %792 = arith.select %790, %787, %791 : vector<2x256xi1>, vector<2x256xf32>
      %c37 = arith.constant 37 : index
      %793 = memref.load %arg9[%c37] : memref<99xf32, #tpu.memory_space<smem>>
      %c86 = arith.constant 86 : index
      %794 = memref.load %arg9[%c86] : memref<99xf32, #tpu.memory_space<smem>>
      %795 = vector.extract_strided_slice %792 {offsets = [0, 0], sizes = [1, 256], strides = [1, 1]} : vector<2x256xf32> to vector<1x256xf32>
      %796 = vector.broadcast %793 : f32 to vector<1x256xf32>
      %797 = arith.mulf %796, %795 : vector<1x256xf32>
      %798 = arith.addf %786, %797 : vector<1x256xf32>
      %799 = vector.extract_strided_slice %792 {offsets = [1, 0], sizes = [1, 256], strides = [1, 1]} : vector<2x256xf32> to vector<1x256xf32>
      %800 = vector.broadcast %794 : f32 to vector<1x256xf32>
      %801 = arith.mulf %800, %799 : vector<1x256xf32>
      %802 = arith.addf %798, %801 : vector<1x256xf32>
      %803 = vector.extract_strided_slice %65 {offsets = [0, 83], sizes = [2, 256], strides = [1, 1]} : vector<2x358xf32> to vector<2x256xf32>
      %804 = arith.andi %121, %166 : vector<1x256xi1>
      %cst_139 = arith.constant 0.000000e+00 : f32
      %805 = vector.shape_cast %804 : vector<1x256xi1> to vector<1x256xi1>
      %806 = vector.broadcast %805 : vector<1x256xi1> to vector<2x256xi1>
      %807 = vector.broadcast %cst_139 : f32 to vector<2x256xf32>
      %808 = arith.select %806, %803, %807 : vector<2x256xi1>, vector<2x256xf32>
      %c38 = arith.constant 38 : index
      %809 = memref.load %arg9[%c38] : memref<99xf32, #tpu.memory_space<smem>>
      %c87 = arith.constant 87 : index
      %810 = memref.load %arg9[%c87] : memref<99xf32, #tpu.memory_space<smem>>
      %811 = vector.extract_strided_slice %808 {offsets = [0, 0], sizes = [1, 256], strides = [1, 1]} : vector<2x256xf32> to vector<1x256xf32>
      %812 = vector.broadcast %809 : f32 to vector<1x256xf32>
      %813 = arith.mulf %812, %811 : vector<1x256xf32>
      %814 = arith.addf %802, %813 : vector<1x256xf32>
      %815 = vector.extract_strided_slice %808 {offsets = [1, 0], sizes = [1, 256], strides = [1, 1]} : vector<2x256xf32> to vector<1x256xf32>
      %816 = vector.broadcast %810 : f32 to vector<1x256xf32>
      %817 = arith.mulf %816, %815 : vector<1x256xf32>
      %818 = arith.addf %814, %817 : vector<1x256xf32>
      %819 = vector.extract_strided_slice %65 {offsets = [0, 84], sizes = [2, 256], strides = [1, 1]} : vector<2x358xf32> to vector<2x256xf32>
      %820 = arith.andi %121, %175 : vector<1x256xi1>
      %cst_140 = arith.constant 0.000000e+00 : f32
      %821 = vector.shape_cast %820 : vector<1x256xi1> to vector<1x256xi1>
      %822 = vector.broadcast %821 : vector<1x256xi1> to vector<2x256xi1>
      %823 = vector.broadcast %cst_140 : f32 to vector<2x256xf32>
      %824 = arith.select %822, %819, %823 : vector<2x256xi1>, vector<2x256xf32>
      %c39 = arith.constant 39 : index
      %825 = memref.load %arg9[%c39] : memref<99xf32, #tpu.memory_space<smem>>
      %c88 = arith.constant 88 : index
      %826 = memref.load %arg9[%c88] : memref<99xf32, #tpu.memory_space<smem>>
      %827 = vector.extract_strided_slice %824 {offsets = [0, 0], sizes = [1, 256], strides = [1, 1]} : vector<2x256xf32> to vector<1x256xf32>
      %828 = vector.broadcast %825 : f32 to vector<1x256xf32>
      %829 = arith.mulf %828, %827 : vector<1x256xf32>
      %830 = arith.addf %818, %829 : vector<1x256xf32>
      %831 = vector.extract_strided_slice %824 {offsets = [1, 0], sizes = [1, 256], strides = [1, 1]} : vector<2x256xf32> to vector<1x256xf32>
      %832 = vector.broadcast %826 : f32 to vector<1x256xf32>
      %833 = arith.mulf %832, %831 : vector<1x256xf32>
      %834 = arith.addf %830, %833 : vector<1x256xf32>
      %835 = vector.extract_strided_slice %65 {offsets = [0, 85], sizes = [2, 256], strides = [1, 1]} : vector<2x358xf32> to vector<2x256xf32>
      %836 = arith.andi %121, %184 : vector<1x256xi1>
      %cst_141 = arith.constant 0.000000e+00 : f32
      %837 = vector.shape_cast %836 : vector<1x256xi1> to vector<1x256xi1>
      %838 = vector.broadcast %837 : vector<1x256xi1> to vector<2x256xi1>
      %839 = vector.broadcast %cst_141 : f32 to vector<2x256xf32>
      %840 = arith.select %838, %835, %839 : vector<2x256xi1>, vector<2x256xf32>
      %c40 = arith.constant 40 : index
      %841 = memref.load %arg9[%c40] : memref<99xf32, #tpu.memory_space<smem>>
      %c89 = arith.constant 89 : index
      %842 = memref.load %arg9[%c89] : memref<99xf32, #tpu.memory_space<smem>>
      %843 = vector.extract_strided_slice %840 {offsets = [0, 0], sizes = [1, 256], strides = [1, 1]} : vector<2x256xf32> to vector<1x256xf32>
      %844 = vector.broadcast %841 : f32 to vector<1x256xf32>
      %845 = arith.mulf %844, %843 : vector<1x256xf32>
      %846 = arith.addf %834, %845 : vector<1x256xf32>
      %847 = vector.extract_strided_slice %840 {offsets = [1, 0], sizes = [1, 256], strides = [1, 1]} : vector<2x256xf32> to vector<1x256xf32>
      %848 = vector.broadcast %842 : f32 to vector<1x256xf32>
      %849 = arith.mulf %848, %847 : vector<1x256xf32>
      %850 = arith.addf %846, %849 : vector<1x256xf32>
      %851 = vector.extract_strided_slice %65 {offsets = [0, 86], sizes = [2, 256], strides = [1, 1]} : vector<2x358xf32> to vector<2x256xf32>
      %852 = arith.andi %121, %193 : vector<1x256xi1>
      %cst_142 = arith.constant 0.000000e+00 : f32
      %853 = vector.shape_cast %852 : vector<1x256xi1> to vector<1x256xi1>
      %854 = vector.broadcast %853 : vector<1x256xi1> to vector<2x256xi1>
      %855 = vector.broadcast %cst_142 : f32 to vector<2x256xf32>
      %856 = arith.select %854, %851, %855 : vector<2x256xi1>, vector<2x256xf32>
      %c41 = arith.constant 41 : index
      %857 = memref.load %arg9[%c41] : memref<99xf32, #tpu.memory_space<smem>>
      %c90 = arith.constant 90 : index
      %858 = memref.load %arg9[%c90] : memref<99xf32, #tpu.memory_space<smem>>
      %859 = vector.extract_strided_slice %856 {offsets = [0, 0], sizes = [1, 256], strides = [1, 1]} : vector<2x256xf32> to vector<1x256xf32>
      %860 = vector.broadcast %857 : f32 to vector<1x256xf32>
      %861 = arith.mulf %860, %859 : vector<1x256xf32>
      %862 = arith.addf %850, %861 : vector<1x256xf32>
      %863 = vector.extract_strided_slice %856 {offsets = [1, 0], sizes = [1, 256], strides = [1, 1]} : vector<2x256xf32> to vector<1x256xf32>
      %864 = vector.broadcast %858 : f32 to vector<1x256xf32>
      %865 = arith.mulf %864, %863 : vector<1x256xf32>
      %866 = arith.addf %862, %865 : vector<1x256xf32>
      %867 = vector.extract_strided_slice %65 {offsets = [0, 96], sizes = [2, 256], strides = [1, 1]} : vector<2x358xf32> to vector<2x256xf32>
      %868 = arith.andi %130, %139 : vector<1x256xi1>
      %cst_143 = arith.constant 0.000000e+00 : f32
      %869 = vector.shape_cast %868 : vector<1x256xi1> to vector<1x256xi1>
      %870 = vector.broadcast %869 : vector<1x256xi1> to vector<2x256xi1>
      %871 = vector.broadcast %cst_143 : f32 to vector<2x256xf32>
      %872 = arith.select %870, %867, %871 : vector<2x256xi1>, vector<2x256xf32>
      %c42 = arith.constant 42 : index
      %873 = memref.load %arg9[%c42] : memref<99xf32, #tpu.memory_space<smem>>
      %c91 = arith.constant 91 : index
      %874 = memref.load %arg9[%c91] : memref<99xf32, #tpu.memory_space<smem>>
      %875 = vector.extract_strided_slice %872 {offsets = [0, 0], sizes = [1, 256], strides = [1, 1]} : vector<2x256xf32> to vector<1x256xf32>
      %876 = vector.broadcast %873 : f32 to vector<1x256xf32>
      %877 = arith.mulf %876, %875 : vector<1x256xf32>
      %878 = arith.addf %866, %877 : vector<1x256xf32>
      %879 = vector.extract_strided_slice %872 {offsets = [1, 0], sizes = [1, 256], strides = [1, 1]} : vector<2x256xf32> to vector<1x256xf32>
      %880 = vector.broadcast %874 : f32 to vector<1x256xf32>
      %881 = arith.mulf %880, %879 : vector<1x256xf32>
      %882 = arith.addf %878, %881 : vector<1x256xf32>
      %883 = vector.extract_strided_slice %65 {offsets = [0, 97], sizes = [2, 256], strides = [1, 1]} : vector<2x358xf32> to vector<2x256xf32>
      %884 = arith.andi %130, %148 : vector<1x256xi1>
      %cst_144 = arith.constant 0.000000e+00 : f32
      %885 = vector.shape_cast %884 : vector<1x256xi1> to vector<1x256xi1>
      %886 = vector.broadcast %885 : vector<1x256xi1> to vector<2x256xi1>
      %887 = vector.broadcast %cst_144 : f32 to vector<2x256xf32>
      %888 = arith.select %886, %883, %887 : vector<2x256xi1>, vector<2x256xf32>
      %c43 = arith.constant 43 : index
      %889 = memref.load %arg9[%c43] : memref<99xf32, #tpu.memory_space<smem>>
      %c92 = arith.constant 92 : index
      %890 = memref.load %arg9[%c92] : memref<99xf32, #tpu.memory_space<smem>>
      %891 = vector.extract_strided_slice %888 {offsets = [0, 0], sizes = [1, 256], strides = [1, 1]} : vector<2x256xf32> to vector<1x256xf32>
      %892 = vector.broadcast %889 : f32 to vector<1x256xf32>
      %893 = arith.mulf %892, %891 : vector<1x256xf32>
      %894 = arith.addf %882, %893 : vector<1x256xf32>
      %895 = vector.extract_strided_slice %888 {offsets = [1, 0], sizes = [1, 256], strides = [1, 1]} : vector<2x256xf32> to vector<1x256xf32>
      %896 = vector.broadcast %890 : f32 to vector<1x256xf32>
      %897 = arith.mulf %896, %895 : vector<1x256xf32>
      %898 = arith.addf %894, %897 : vector<1x256xf32>
      %899 = vector.extract_strided_slice %65 {offsets = [0, 98], sizes = [2, 256], strides = [1, 1]} : vector<2x358xf32> to vector<2x256xf32>
      %900 = arith.andi %130, %157 : vector<1x256xi1>
      %cst_145 = arith.constant 0.000000e+00 : f32
      %901 = vector.shape_cast %900 : vector<1x256xi1> to vector<1x256xi1>
      %902 = vector.broadcast %901 : vector<1x256xi1> to vector<2x256xi1>
      %903 = vector.broadcast %cst_145 : f32 to vector<2x256xf32>
      %904 = arith.select %902, %899, %903 : vector<2x256xi1>, vector<2x256xf32>
      %c44 = arith.constant 44 : index
      %905 = memref.load %arg9[%c44] : memref<99xf32, #tpu.memory_space<smem>>
      %c93 = arith.constant 93 : index
      %906 = memref.load %arg9[%c93] : memref<99xf32, #tpu.memory_space<smem>>
      %907 = vector.extract_strided_slice %904 {offsets = [0, 0], sizes = [1, 256], strides = [1, 1]} : vector<2x256xf32> to vector<1x256xf32>
      %908 = vector.broadcast %905 : f32 to vector<1x256xf32>
      %909 = arith.mulf %908, %907 : vector<1x256xf32>
      %910 = arith.addf %898, %909 : vector<1x256xf32>
      %911 = vector.extract_strided_slice %904 {offsets = [1, 0], sizes = [1, 256], strides = [1, 1]} : vector<2x256xf32> to vector<1x256xf32>
      %912 = vector.broadcast %906 : f32 to vector<1x256xf32>
      %913 = arith.mulf %912, %911 : vector<1x256xf32>
      %914 = arith.addf %910, %913 : vector<1x256xf32>
      %915 = vector.extract_strided_slice %65 {offsets = [0, 99], sizes = [2, 256], strides = [1, 1]} : vector<2x358xf32> to vector<2x256xf32>
      %916 = arith.andi %130, %166 : vector<1x256xi1>
      %cst_146 = arith.constant 0.000000e+00 : f32
      %917 = vector.shape_cast %916 : vector<1x256xi1> to vector<1x256xi1>
      %918 = vector.broadcast %917 : vector<1x256xi1> to vector<2x256xi1>
      %919 = vector.broadcast %cst_146 : f32 to vector<2x256xf32>
      %920 = arith.select %918, %915, %919 : vector<2x256xi1>, vector<2x256xf32>
      %c45 = arith.constant 45 : index
      %921 = memref.load %arg9[%c45] : memref<99xf32, #tpu.memory_space<smem>>
      %c94 = arith.constant 94 : index
      %922 = memref.load %arg9[%c94] : memref<99xf32, #tpu.memory_space<smem>>
      %923 = vector.extract_strided_slice %920 {offsets = [0, 0], sizes = [1, 256], strides = [1, 1]} : vector<2x256xf32> to vector<1x256xf32>
      %924 = vector.broadcast %921 : f32 to vector<1x256xf32>
      %925 = arith.mulf %924, %923 : vector<1x256xf32>
      %926 = arith.addf %914, %925 : vector<1x256xf32>
      %927 = vector.extract_strided_slice %920 {offsets = [1, 0], sizes = [1, 256], strides = [1, 1]} : vector<2x256xf32> to vector<1x256xf32>
      %928 = vector.broadcast %922 : f32 to vector<1x256xf32>
      %929 = arith.mulf %928, %927 : vector<1x256xf32>
      %930 = arith.addf %926, %929 : vector<1x256xf32>
      %931 = vector.extract_strided_slice %65 {offsets = [0, 100], sizes = [2, 256], strides = [1, 1]} : vector<2x358xf32> to vector<2x256xf32>
      %932 = arith.andi %130, %175 : vector<1x256xi1>
      %cst_147 = arith.constant 0.000000e+00 : f32
      %933 = vector.shape_cast %932 : vector<1x256xi1> to vector<1x256xi1>
      %934 = vector.broadcast %933 : vector<1x256xi1> to vector<2x256xi1>
      %935 = vector.broadcast %cst_147 : f32 to vector<2x256xf32>
      %936 = arith.select %934, %931, %935 : vector<2x256xi1>, vector<2x256xf32>
      %c46 = arith.constant 46 : index
      %937 = memref.load %arg9[%c46] : memref<99xf32, #tpu.memory_space<smem>>
      %c95 = arith.constant 95 : index
      %938 = memref.load %arg9[%c95] : memref<99xf32, #tpu.memory_space<smem>>
      %939 = vector.extract_strided_slice %936 {offsets = [0, 0], sizes = [1, 256], strides = [1, 1]} : vector<2x256xf32> to vector<1x256xf32>
      %940 = vector.broadcast %937 : f32 to vector<1x256xf32>
      %941 = arith.mulf %940, %939 : vector<1x256xf32>
      %942 = arith.addf %930, %941 : vector<1x256xf32>
      %943 = vector.extract_strided_slice %936 {offsets = [1, 0], sizes = [1, 256], strides = [1, 1]} : vector<2x256xf32> to vector<1x256xf32>
      %944 = vector.broadcast %938 : f32 to vector<1x256xf32>
      %945 = arith.mulf %944, %943 : vector<1x256xf32>
      %946 = arith.addf %942, %945 : vector<1x256xf32>
      %947 = vector.extract_strided_slice %65 {offsets = [0, 101], sizes = [2, 256], strides = [1, 1]} : vector<2x358xf32> to vector<2x256xf32>
      %948 = arith.andi %130, %184 : vector<1x256xi1>
      %cst_148 = arith.constant 0.000000e+00 : f32
      %949 = vector.shape_cast %948 : vector<1x256xi1> to vector<1x256xi1>
      %950 = vector.broadcast %949 : vector<1x256xi1> to vector<2x256xi1>
      %951 = vector.broadcast %cst_148 : f32 to vector<2x256xf32>
      %952 = arith.select %950, %947, %951 : vector<2x256xi1>, vector<2x256xf32>
      %c47 = arith.constant 47 : index
      %953 = memref.load %arg9[%c47] : memref<99xf32, #tpu.memory_space<smem>>
      %c96 = arith.constant 96 : index
      %954 = memref.load %arg9[%c96] : memref<99xf32, #tpu.memory_space<smem>>
      %955 = vector.extract_strided_slice %952 {offsets = [0, 0], sizes = [1, 256], strides = [1, 1]} : vector<2x256xf32> to vector<1x256xf32>
      %956 = vector.broadcast %953 : f32 to vector<1x256xf32>
      %957 = arith.mulf %956, %955 : vector<1x256xf32>
      %958 = arith.addf %946, %957 : vector<1x256xf32>
      %959 = vector.extract_strided_slice %952 {offsets = [1, 0], sizes = [1, 256], strides = [1, 1]} : vector<2x256xf32> to vector<1x256xf32>
      %960 = vector.broadcast %954 : f32 to vector<1x256xf32>
      %961 = arith.mulf %960, %959 : vector<1x256xf32>
      %962 = arith.addf %958, %961 : vector<1x256xf32>
      %963 = vector.extract_strided_slice %65 {offsets = [0, 102], sizes = [2, 256], strides = [1, 1]} : vector<2x358xf32> to vector<2x256xf32>
      %964 = arith.andi %130, %193 : vector<1x256xi1>
      %cst_149 = arith.constant 0.000000e+00 : f32
      %965 = vector.shape_cast %964 : vector<1x256xi1> to vector<1x256xi1>
      %966 = vector.broadcast %965 : vector<1x256xi1> to vector<2x256xi1>
      %967 = vector.broadcast %cst_149 : f32 to vector<2x256xf32>
      %968 = arith.select %966, %963, %967 : vector<2x256xi1>, vector<2x256xf32>
      %c48 = arith.constant 48 : index
      %969 = memref.load %arg9[%c48] : memref<99xf32, #tpu.memory_space<smem>>
      %c97 = arith.constant 97 : index
      %970 = memref.load %arg9[%c97] : memref<99xf32, #tpu.memory_space<smem>>
      %971 = vector.extract_strided_slice %968 {offsets = [0, 0], sizes = [1, 256], strides = [1, 1]} : vector<2x256xf32> to vector<1x256xf32>
      %972 = vector.broadcast %969 : f32 to vector<1x256xf32>
      %973 = arith.mulf %972, %971 : vector<1x256xf32>
      %974 = arith.addf %962, %973 : vector<1x256xf32>
      %975 = vector.extract_strided_slice %968 {offsets = [1, 0], sizes = [1, 256], strides = [1, 1]} : vector<2x256xf32> to vector<1x256xf32>
      %976 = vector.broadcast %970 : f32 to vector<1x256xf32>
      %977 = arith.mulf %976, %975 : vector<1x256xf32>
      %978 = arith.addf %974, %977 : vector<1x256xf32>
      %c98 = arith.constant 98 : index
      %979 = memref.load %arg9[%c98] : memref<99xf32, #tpu.memory_space<smem>>
      %980 = vector.broadcast %979 : f32 to vector<1x256xf32>
      %981 = arith.addf %978, %980 : vector<1x256xf32>
      %cst_150 = arith.constant 0.000000e+00 : f32
      %982 = vector.broadcast %cst_150 : f32 to vector<1x256xf32>
      %983 = arith.subf %982, %981 : vector<1x256xf32>
      %984 = math.exp %983 : vector<1x256xf32>
      %cst_151 = arith.constant 1.000000e+00 : f32
      %985 = vector.broadcast %cst_151 : f32 to vector<1x256xf32>
      %986 = arith.addf %985, %984 : vector<1x256xf32>
      %cst_152 = arith.constant 1.000000e+00 : f32
      %987 = vector.broadcast %cst_152 : f32 to vector<1x256xf32>
      %988 = arith.divf %987, %986 : vector<1x256xf32>
      %989 = vector.broadcast %988 : vector<1x256xf32> to vector<32x256xf32>
      %990 = arith.mulf %56, %989 : vector<32x256xf32>
      %991 = arith.index_cast %arg15 : i32 to index
      %c0_153 = arith.constant 0 : index
      %c0_154 = arith.constant 0 : index
      %992 = vector.load %arg14[%991, %c0_153, %c0_154] : memref<2x32x256xf32, #tpu.memory_space<vmem>>, vector<1x32x256xf32>
      %993 = vector.shape_cast %992 : vector<1x32x256xf32> to vector<32x256xf32>
      %994 = vector.shape_cast %990 : vector<32x256xf32> to vector<1x32x256xf32>
      tpu.vector_store %arg14[%991, %c0_153, %c0_154], %994 {strides = array<i32>} : memref<2x32x256xf32, #tpu.memory_space<vmem>>, vector<1x32x256xf32>,
      %cst_155 = arith.constant dense<0.000000e+00> : vector<32xf32>
      %995 = vector.multi_reduction <add>, %990, %cst_155 [1] : vector<32x256xf32> to vector<32xf32>
      %996 = vector.shape_cast %995 : vector<32xf32> to vector<32x1xf32>
      %997 = arith.addf %arg16, %996 : vector<32x1xf32>
      %998 = arith.mulf %990, %990 : vector<32x256xf32>
      %cst_156 = arith.constant dense<0.000000e+00> : vector<32xf32>
      %999 = vector.multi_reduction <add>, %998, %cst_156 [1] : vector<32x256xf32> to vector<32xf32>
      %1000 = vector.shape_cast %999 : vector<32xf32> to vector<32x1xf32>
      %1001 = arith.addf %arg17, %1000 : vector<32x1xf32>
      scf.yield %997, %1001 : vector<32x1xf32>, vector<32x1xf32>
    }
    %c2_i32_0 = arith.constant 2 : i32
    %cst_1 = arith.constant 0.001953125 : f32
    %3 = vector.broadcast %cst_1 : f32 to vector<32x1xf32>
    %4 = arith.mulf %2#0, %3 : vector<32x1xf32>
    %cst_2 = arith.constant 0.001953125 : f32
    %5 = vector.broadcast %cst_2 : f32 to vector<32x1xf32>
    %6 = arith.mulf %2#1, %5 : vector<32x1xf32>
    %7 = arith.mulf %4, %4 : vector<32x1xf32>
    %8 = arith.subf %6, %7 : vector<32x1xf32>
    %cst_3 = arith.constant 0.000000e+00 : f32
    %9 = vector.broadcast %cst_3 : f32 to vector<32x1xf32>
    %10 = arith.maximumf %8, %9 : vector<32x1xf32>
    %cst_4 = arith.constant 9.99999974E-6 : f32
    %11 = vector.broadcast %cst_4 : f32 to vector<32x1xf32>
    %12 = arith.addf %10, %11 : vector<32x1xf32>
    %13 = math.rsqrt %12 : vector<32x1xf32>
    %c0 = arith.constant 0 : index
    %c0_5 = arith.constant 0 : index
    %14 = vector.load %arg10[%c0, %c0_5] : memref<32x1xf32, #tpu.memory_space<vmem>>, vector<32x1xf32>
    %15 = arith.mulf %14, %13 : vector<32x1xf32>
    %c0_6 = arith.constant 0 : index
    %c0_7 = arith.constant 0 : index
    %16 = vector.load %arg11[%c0_6, %c0_7] : memref<32x1xf32, #tpu.memory_space<vmem>>, vector<32x1xf32>
    %17 = arith.mulf %4, %15 : vector<32x1xf32>
    %18 = arith.subf %16, %17 : vector<32x1xf32>
    %c0_i32_8 = arith.constant 0 : i32
    %c2_i32_9 = arith.constant 2 : i32
    %19 = arith.addi %c0_i32_8, %c2_i32_9 : i32
    %c1_i32_10 = arith.constant 1 : i32
    scf.for %arg15 = %c0_i32_8 to %19 step %c1_i32_10  : i32 {
      %20 = arith.index_cast %arg15 : i32 to index
      %c0_12 = arith.constant 0 : index
      %c0_13 = arith.constant 0 : index
      %21 = vector.load %arg14[%20, %c0_12, %c0_13] : memref<2x32x256xf32, #tpu.memory_space<vmem>>, vector<1x32x256xf32>
      %22 = vector.shape_cast %21 : vector<1x32x256xf32> to vector<32x256xf32>
      %23 = vector.broadcast %15 : vector<32x1xf32> to vector<32x256xf32>
      %24 = arith.mulf %22, %23 : vector<32x256xf32>
      %25 = vector.broadcast %18 : vector<32x1xf32> to vector<32x256xf32>
      %26 = arith.addf %24, %25 : vector<32x256xf32>
      %cst_14 = arith.constant 0.000000e+00 : f32
      %27 = vector.broadcast %cst_14 : f32 to vector<32x256xf32>
      %28 = arith.maximumf %26, %27 : vector<32x256xf32>
      %29 = arith.index_cast %arg15 : i32 to index
      %c0_15 = arith.constant 0 : index
      %c0_16 = arith.constant 0 : index
      %30 = vector.load %arg14[%29, %c0_15, %c0_16] : memref<2x32x256xf32, #tpu.memory_space<vmem>>, vector<1x32x256xf32>
      %31 = vector.shape_cast %30 : vector<1x32x256xf32> to vector<32x256xf32>
      %32 = vector.shape_cast %28 : vector<32x256xf32> to vector<1x32x256xf32>
      tpu.vector_store %arg14[%29, %c0_15, %c0_16], %32 {strides = array<i32>} : memref<2x32x256xf32, #tpu.memory_space<vmem>>, vector<1x32x256xf32>,
    }
    %c2_i32_11 = arith.constant 2 : i32
    return
  }
}

</mosaic_0001>

<llo_original>
// kernel: tpu_custom_call.1
$region0: #{tpu_custom_call.1}
  #allocation0 [shape = 'u32[]', space=smem, size = 0x4, offset = 0x4, fixed_abs, tag = 'smem constant byte address 0x4 - core index']
  #allocation1 [shape = 'u32[144,128]{1,0:T(1,128)}', space=vmem, size = 0x12000, scoped, tag = 'internal scratch']
  %s0 = inlined_call_operand.vmem [shape: f32[2,32,256], index: 0, kind: input, shape index: {}]
  %s1 = inlined_call_operand.hbm [shape: f32[2,32,256], index: 1, kind: input, shape index: {}]
  %s2 = inlined_call_operand.vmem [shape: f32[32,32], index: 2, kind: input, shape index: {}]
  %s3 = inlined_call_operand.hbm [shape: f32[32,32], index: 3, kind: input, shape index: {}]
  %s4 = inlined_call_operand.vmem [shape: f32[32,1], index: 4, kind: input, shape index: {}]
  %s5 = inlined_call_operand.vmem [shape: f32[2,32], index: 5, kind: input, shape index: {}]
  %s6 = inlined_call_operand.vmem [shape: f32[2,1], index: 6, kind: input, shape index: {}]
  %s7 = inlined_call_operand.vmem [shape: f32[32,2], index: 7, kind: input, shape index: {}]
  %s8 = inlined_call_operand.vmem [shape: f32[32,1], index: 8, kind: input, shape index: {}]
  %s9 = inlined_call_operand.vmem [shape: f32[99], index: 9, kind: input, shape index: {}]
  %s10 = inlined_call_operand.vmem [shape: f32[32,1], index: 10, kind: input, shape index: {}]
  %s11 = inlined_call_operand.vmem [shape: f32[32,1], index: 11, kind: input, shape index: {}]
  %s12 = inlined_call_operand.vmem [shape: s32[1,256], index: 12, kind: input, shape index: {}]
  %s13 = inlined_call_operand.vmem [shape: s32[1,256], index: 13, kind: input, shape index: {}]
  %s14 = inlined_call_operand.hbm [shape: f32[2,32,256], index: 14, kind: output, shape index: {}]
  %s15 = sld [smem:[#allocation0]]
  $region92: #{tpu_custom_call.1} parent=0
    _
  %s17 = ssub.s32 1, %s15
  %s18 = scalar_select 0, %s17, %s15
  $region1: #{tpu_custom_call.1} parent=0
    #allocation2 [shape = 'u8[65536]{0}', space=vmem, size = 0x10000, scoped, tag = 'input window, operand 1, single buffered']
    #allocation3 [shape = 's32[1]{0}', space=sflag, size = 0x4, scoped, tag = 'scoped memory for tpu_custom_call.1']
    #allocation4 [shape = 's32[1]{0}', space=sflag, size = 0x4, scoped, tag = 'scoped memory for tpu_custom_call.1']
    #allocation5 [shape = 's32[1]{0}', space=sflag, size = 0x4, scoped, tag = 'scoped memory for tpu_custom_call.1']
    #allocation6 [shape = 'u8[16384]{0}', space=vmem, size = 0x4000, scoped, tag = 'input window, operand 3, single buffered']
    #allocation7 [shape = 's32[1]{0}', space=sflag, size = 0x4, scoped, tag = 'scoped memory for tpu_custom_call.1']
    #allocation8 [shape = 'u8[512]{0}', space=smem, size = 0x200, scoped, tag = 'input window, operand 9, single buffered']
    #allocation9 [shape = 'u8[65536]{0}', space=vmem, size = 0x10000, scoped, tag = 'output window, operand 0, single buffered']
    %19 = vsyncpa [#allocation3], 0
    %20 = vsyncpa [#allocation7], 0
    %21 = vsyncpa [#allocation5], 0
    %22 = vsyncpa [#allocation4], 0
    // Predicated region
    $region2: #{tpu_custom_call.1} parent=1 // pred_check
      _
    $region3: #{tpu_custom_call.1} parent=1 // pred_check_branch
      %24 = sbr.rel (0) target = $region5
    $region4: #{tpu_custom_call.1} parent=1 // pred_region
      _
    $region5: #{tpu_custom_call.1} parent=1 // pred_fallthru
      _
    // Predicated region
    $region6: #{tpu_custom_call.1} parent=1 // pred_check
      _
    $region7: #{tpu_custom_call.1} parent=1 // pred_check_branch
      %26 = sbr.rel (0) target = $region9
    $region8: #{tpu_custom_call.1} parent=1 // pred_region
      %s28 = ssub.s32 2048, 2048
      %29 = vsyncadd [#allocation3], %s28
      %s30 = sshll.u32 [#allocation2], 4
      %s31 = int_to_ptr.vmem [resolvable:$true] %s30
      %36 = dma.hbm_to_vmem [thread:$0]  %s1, 2048, %s31, [#allocation3], 256, 256, 16
    $region9: #{tpu_custom_call.1} parent=1 // pred_fallthru
      _
    // Predicated region
    $region10: #{tpu_custom_call.1} parent=1 // pred_check
      _
    $region11: #{tpu_custom_call.1} parent=1 // pred_check_branch
      %38 = sbr.rel (0) target = $region13
    $region12: #{tpu_custom_call.1} parent=1 // pred_region
      _
    $region13: #{tpu_custom_call.1} parent=1 // pred_fallthru
      _
    // Predicated region
    $region14: #{tpu_custom_call.1} parent=1 // pred_check
      _
    $region15: #{tpu_custom_call.1} parent=1 // pred_check_branch
      %40 = sbr.rel (0) target = $region17
    $region16: #{tpu_custom_call.1} parent=1 // pred_region
      %s42 = ssub.s32 512, 512
      %43 = vsyncadd [#allocation7], %s42
      %s44 = sshll.u32 [#allocation6], 4
      %s45 = int_to_ptr.vmem [resolvable:$true] %s44
      %50 = dma.hbm_to_vmem [thread:$0]  %s3, 512, %s45, [#allocation7], 128, 128, 8
    $region17: #{tpu_custom_call.1} parent=1 // pred_fallthru
      _
    // Predicated region
    $region18: #{tpu_custom_call.1} parent=1 // pred_check
      _
    $region19: #{tpu_custom_call.1} parent=1 // pred_check_branch
      %52 = sbr.rel (0) target = $region21
    $region20: #{tpu_custom_call.1} parent=1 // pred_region
      _
    $region21: #{tpu_custom_call.1} parent=1 // pred_fallthru
      _
    // Predicated region
    $region22: #{tpu_custom_call.1} parent=1 // pred_check
      _
    $region23: #{tpu_custom_call.1} parent=1 // pred_check_branch
      %54 = sbr.rel (0) target = $region25
    $region24: #{tpu_custom_call.1} parent=1 // pred_region
      _
    $region25: #{tpu_custom_call.1} parent=1 // pred_fallthru
      _
    // Predicated region
    $region26: #{tpu_custom_call.1} parent=1 // pred_check
      _
    $region27: #{tpu_custom_call.1} parent=1 // pred_check_branch
      %56 = sbr.rel (0) target = $region29
    $region28: #{tpu_custom_call.1} parent=1 // pred_region
      _
    $region29: #{tpu_custom_call.1} parent=1 // pred_fallthru
      _
    // Predicated region
    $region30: #{tpu_custom_call.1} parent=1 // pred_check
      _
    $region31: #{tpu_custom_call.1} parent=1 // pred_check_branch
      %58 = sbr.rel (0) target = $region33
    $region32: #{tpu_custom_call.1} parent=1 // pred_region
      _
    $region33: #{tpu_custom_call.1} parent=1 // pred_fallthru
      _
    // Predicated region
    $region34: #{tpu_custom_call.1} parent=1 // pred_check
      _
    $region35: #{tpu_custom_call.1} parent=1 // pred_check_branch
      %60 = sbr.rel (0) target = $region37
    $region36: #{tpu_custom_call.1} parent=1 // pred_region
      _
    $region37: #{tpu_custom_call.1} parent=1 // pred_fallthru
      _
    // Predicated region
    $region38: #{tpu_custom_call.1} parent=1 // pred_check
      _
    $region39: #{tpu_custom_call.1} parent=1 // pred_check_branch
      %62 = sbr.rel (0) target = $region41
    $region40: #{tpu_custom_call.1} parent=1 // pred_region
      %s64 = ssub.s32 16, 16
      %65 = vsyncadd [#allocation5], %s64
      %s67 = sshll.u32 %s9, 4
      %s68 = int_to_ptr.vmem [resolvable:$true] %s67
      %70 = dma.vmem_to_smem %s68, 16, [#allocation8], [#allocation5]
    $region41: #{tpu_custom_call.1} parent=1 // pred_fallthru
      _
    // Predicated region
    $region42: #{tpu_custom_call.1} parent=1 // pred_check
      _
    $region43: #{tpu_custom_call.1} parent=1 // pred_check_branch
      %72 = sbr.rel (0) target = $region45
    $region44: #{tpu_custom_call.1} parent=1 // pred_region
      _
    $region45: #{tpu_custom_call.1} parent=1 // pred_fallthru
      _
    // Predicated region
    $region46: #{tpu_custom_call.1} parent=1 // pred_check
      _
    $region47: #{tpu_custom_call.1} parent=1 // pred_check_branch
      %74 = sbr.rel (0) target = $region49
    $region48: #{tpu_custom_call.1} parent=1 // pred_region
      _
    $region49: #{tpu_custom_call.1} parent=1 // pred_fallthru
      _
    // Predicated region
    $region50: #{tpu_custom_call.1} parent=1 // pred_check
      _
    $region51: #{tpu_custom_call.1} parent=1 // pred_check_branch
      %76 = sbr.rel (0) target = $region53
    $region52: #{tpu_custom_call.1} parent=1 // pred_region
      _
    $region53: #{tpu_custom_call.1} parent=1 // pred_fallthru
      _
    // Predicated region
    $region54: #{tpu_custom_call.1} parent=1 // pred_check
      _
    $region55: #{tpu_custom_call.1} parent=1 // pred_check_branch
      %78 = sbr.rel (0) target = $region57
    $region56: #{tpu_custom_call.1} parent=1 // pred_region
      _
    $region57: #{tpu_custom_call.1} parent=1 // pred_fallthru
      _
    // Predicated region
    $region58: #{tpu_custom_call.1} parent=1 // pred_check
      _
    $region59: #{tpu_custom_call.1} parent=1 // pred_check_branch
      %80 = sbr.rel (0) target = $region61
    $region60: #{tpu_custom_call.1} parent=1 // pred_region
      %81 = dma.done [#allocation3], 2048
    $region61: #{tpu_custom_call.1} parent=1 // pred_fallthru
      _
    // Predicated region
    $region62: #{tpu_custom_call.1} parent=1 // pred_check
      _
    $region63: #{tpu_custom_call.1} parent=1 // pred_check_branch
      %83 = sbr.rel (0) target = $region65
    $region64: #{tpu_custom_call.1} parent=1 // pred_region
      %84 = dma.done [#allocation7], 512
    $region65: #{tpu_custom_call.1} parent=1 // pred_fallthru
      _
    // Predicated region
    $region66: #{tpu_custom_call.1} parent=1 // pred_check
      _
    $region67: #{tpu_custom_call.1} parent=1 // pred_check_branch
      %86 = sbr.rel (0) target = $region69
    $region68: #{tpu_custom_call.1} parent=1 // pred_region
      %87 = dma.done [#allocation5], 16
    $region69: #{tpu_custom_call.1} parent=1 // pred_fallthru
      _
    %88 = sfence
    loop: start=0, step=1, limit=2
    $region70: #{tpu_custom_call.1} parent=1 // loop_pre_header
      _
    $region71: #{tpu_custom_call.1} parent=1 // loop_header
      %s90 = sphi 0, %s94
      %p91 = scmp.ge.s32.totalorder %s90, 2
      %v95 = vphi 0.0, %v2884
      %v96 = vphi 0.0, %v2885
      %v97 = vphi 0.0, %v2886
      %v98 = vphi 0.0, %v2887
      %v99 = vphi 0.0, %v2908
      %v100 = vphi 0.0, %v2909
      %v101 = vphi 0.0, %v2910
      %v102 = vphi 0.0, %v2911
    $region72: #{tpu_custom_call.1} parent=1 // loop_header_branch
      %93 = sbr.rel (%p91) target = $region76
    $region73: #{tpu_custom_call.1} parent=1 // loop_body
      %v103 = vld [vmem:[%s2] sm:$0xff]
      %v104 = vld [vmem:[%s2 + $0x8] sm:$0xff]
      %v105 = vld [vmem:[%s2 + $0x10] sm:$0xff]
      %v106 = vld [vmem:[%s2 + $0x18] sm:$0xff]
      %s107 = smul.u32 %s90, 8
      %s108 = smul.addr %s107, 8
      %s109 = scalar_lea.vmem %s0, %s108
      %v110 = vld [vmem:[%s109] sm:$0xff]
      %v111 = vld [vmem:[%s109 + $0x8] sm:$0xff]
      %v112 = vld [vmem:[%s109 + $0x10] sm:$0xff]
      %v113 = vld [vmem:[%s109 + $0x18] sm:$0xff]
      %v114 = vld [vmem:[%s109 + $0x20] sm:$0xff]
      %v115 = vld [vmem:[%s109 + $0x28] sm:$0xff]
      %v116 = vld [vmem:[%s109 + $0x30] sm:$0xff]
      %v117 = vld [vmem:[%s109 + $0x38] sm:$0xff]
      %v118 = vld [vmem:[#allocation6] sm:$0xff]
      %v119 = vld [vmem:[#allocation6 + $0x8] sm:$0xff]
      %v120 = vld [vmem:[#allocation6 + $0x10] sm:$0xff]
      %v121 = vld [vmem:[#allocation6 + $0x18] sm:$0xff]
      %s122 = smul.addr %s107, 8
      %s123 = scalar_lea.vmem [#allocation2], %s122
      %v124 = vld [vmem:[%s123] sm:$0xff]
      %v125 = vld [vmem:[%s123 + $0x8] sm:$0xff]
      %v126 = vld [vmem:[%s123 + $0x10] sm:$0xff]
      %v127 = vld [vmem:[%s123 + $0x18] sm:$0xff]
      %v128 = vld [vmem:[%s123 + $0x20] sm:$0xff]
      %v129 = vld [vmem:[%s123 + $0x28] sm:$0xff]
      %v130 = vld [vmem:[%s123 + $0x30] sm:$0xff]
      %v131 = vld [vmem:[%s123 + $0x38] sm:$0xff]
      %vm132 = vcmask 261120
      %v134 = vsel %vm132, %v118, 0
      %v137 = vsel %vm132, %v119, 0
      %v140 = vsel %vm132, %v120, 0
      %v143 = vsel %vm132, %v121, 0
      %145 = vmatprep.subr.mxu0 %v125
      %146 = vmatpush1.msra.mxu0 %v124
      %147 = vmatprep.subr.mxu0 %v127
      %148 = vmatpush1.msra.mxu0 %v126
      %149 = vmatprep.subr.mxu0 %v129
      %150 = vmatpush1.msra.mxu0 %v128
      %151 = vmatprep.subr.mxu0 %v131
      %152 = vmatpush1.msra.mxu0 %v130
      %153 = vmatprep.subr.mxu0 0.0
      %154 = vmatpush1.msra.mxu0 0.0
      %155 = vmatprep.subr.mxu0 0.0
      %156 = vmatpush1.msra.mxu0 0.0
      %157 = vmatprep.subr.mxu0 0.0
      %158 = vmatpush1.msra.mxu0 0.0
      %159 = vmatprep.subr.mxu0 0.0
      %160 = vmatpush1.msra.mxu0 0.0
      %161 = vmatprep.subr.mxu0 0.0
      %162 = vmatpush1.msra.mxu0 0.0
      %163 = vmatprep.subr.mxu0 0.0
      %164 = vmatpush1.msra.mxu0 0.0
      %165 = vmatprep.subr.mxu0 0.0
      %166 = vmatpush1.msra.mxu0 0.0
      %167 = vmatprep.subr.mxu0 0.0
      %168 = vmatpush1.msra.mxu0 0.0
      %169 = vmatprep.subr.mxu0 0.0
      %170 = vmatpush1.msra.mxu0 0.0
      %171 = vmatprep.subr.mxu0 0.0
      %172 = vmatpush1.msra.mxu0 0.0
      %173 = vmatprep.subr.mxu0 0.0
      %174 = vmatpush1.msra.mxu0 0.0
      %175 = vmatprep.subr.mxu0 0.0
      %176 = vmatpush1.msra.mxu0 0.0
      %177 = vmatprep.subr.mxu0 0.0
      %178 = vmatpush1.msra.mxu0 0.0
      %179 = vmatprep.subr.mxu0 0.0
      %180 = vmatpush1.msra.mxu0 0.0
      %181 = vmatprep.subr.mxu0 0.0
      %182 = vmatpush1.msra.mxu0 0.0
      %183 = vmatprep.subr.mxu0 0.0
      %184 = vmatpush1.msra.mxu0 0.0
      %185 = vmatprep.subr.mxu0 0.0
      %186 = vmatpush1.msra.mxu0 0.0
      %187 = vmatprep.subr.mxu0 0.0
      %188 = vmatpush1.msra.mxu0 0.0
      %189 = vmatprep.subr.mxu0 0.0
      %190 = vmatpush1.msra.mxu0 0.0
      %191 = vmatprep.subr.mxu0 0.0
      %192 = vmatpush1.msra.mxu0 0.0
      %193 = vmatprep.subr.mxu0 0.0
      %194 = vmatpush1.msra.mxu0 0.0
      %195 = vmatprep.subr.mxu0 0.0
      %196 = vmatpush1.msra.mxu0 0.0
      %197 = vmatprep.subr.mxu0 0.0
      %198 = vmatpush1.msra.mxu0 0.0
      %199 = vmatprep.subr.mxu0 0.0
      %200 = vmatpush1.msra.mxu0 0.0
      %201 = vmatprep.subr.mxu0 0.0
      %202 = vmatpush1.msra.mxu0 0.0
      %203 = vmatprep.subr.mxu0 0.0
      %204 = vmatpush1.msra.mxu0 0.0
      %205 = vmatprep.subr.mxu0 0.0
      %206 = vmatpush1.msra.mxu0 0.0
      %207 = vmatprep.subr.mxu0 0.0
      %208 = vmatpush1.msra.mxu0 0.0
      %209 = vmatprep.mubr.f32.mxu0 0.0
      %210 = vmatmul.mubr.f32.gmra.mrb[0].mxu0 %v134
      %v211 = vpop.f32.mrb[0].mxu0
      %v212 = vadd.f32 0.0, %v211
      %v213 = vpop.f32.mrb[0].mxu0
      %v214 = vadd.f32 0.0, %v213
      %215 = vmatprep.mubr.f32.mxu0 0.0
      %216 = vmatmul.mubr.f32.gmra.mrb[0].mxu0 %v137
      %v217 = vpop.f32.mrb[0].mxu0
      %v218 = vadd.f32 0.0, %v217
      %v219 = vpop.f32.mrb[0].mxu0
      %v220 = vadd.f32 0.0, %v219
      %221 = vmatprep.mubr.f32.mxu0 0.0
      %222 = vmatmul.mubr.f32.gmra.mrb[0].mxu0 %v140
      %v223 = vpop.f32.mrb[0].mxu0
      %v224 = vadd.f32 0.0, %v223
      %v225 = vpop.f32.mrb[0].mxu0
      %v226 = vadd.f32 0.0, %v225
      %227 = vmatprep.mubr.f32.mxu0 0.0
      %228 = vmatmul.mubr.f32.gmra.mrb[0].mxu0 %v143
      %v229 = vpop.f32.mrb[0].mxu0
      %v230 = vadd.f32 0.0, %v229
      %v231 = vpop.f32.mrb[0].mxu0
      %v232 = vadd.f32 0.0, %v231
      %233 = vdwg.mxu0
      %v235 = vsel %vm132, %v103, 0
      %v238 = vsel %vm132, %v104, 0
      %v241 = vsel %vm132, %v105, 0
      %v244 = vsel %vm132, %v106, 0
      %246 = vmatprep.subr.mxu0 %v111
      %247 = vmatpush1.msra.mxu0 %v110
      %248 = vmatprep.subr.mxu0 %v113
      %249 = vmatpush1.msra.mxu0 %v112
      %250 = vmatprep.subr.mxu0 %v115
      %251 = vmatpush1.msra.mxu0 %v114
      %252 = vmatprep.subr.mxu0 %v117
      %253 = vmatpush1.msra.mxu0 %v116
      %254 = vmatprep.subr.mxu0 0.0
      %255 = vmatpush1.msra.mxu0 0.0
      %256 = vmatprep.subr.mxu0 0.0
      %257 = vmatpush1.msra.mxu0 0.0
      %258 = vmatprep.subr.mxu0 0.0
      %259 = vmatpush1.msra.mxu0 0.0
      %260 = vmatprep.subr.mxu0 0.0
      %261 = vmatpush1.msra.mxu0 0.0
      %262 = vmatprep.subr.mxu0 0.0
      %263 = vmatpush1.msra.mxu0 0.0
      %264 = vmatprep.subr.mxu0 0.0
      %265 = vmatpush1.msra.mxu0 0.0
      %266 = vmatprep.subr.mxu0 0.0
      %267 = vmatpush1.msra.mxu0 0.0
      %268 = vmatprep.subr.mxu0 0.0
      %269 = vmatpush1.msra.mxu0 0.0
      %270 = vmatprep.subr.mxu0 0.0
      %271 = vmatpush1.msra.mxu0 0.0
      %272 = vmatprep.subr.mxu0 0.0
      %273 = vmatpush1.msra.mxu0 0.0
      %274 = vmatprep.subr.mxu0 0.0
      %275 = vmatpush1.msra.mxu0 0.0
      %276 = vmatprep.subr.mxu0 0.0
      %277 = vmatpush1.msra.mxu0 0.0
      %278 = vmatprep.subr.mxu0 0.0
      %279 = vmatpush1.msra.mxu0 0.0
      %280 = vmatprep.subr.mxu0 0.0
      %281 = vmatpush1.msra.mxu0 0.0
      %282 = vmatprep.subr.mxu0 0.0
      %283 = vmatpush1.msra.mxu0 0.0
      %284 = vmatprep.subr.mxu0 0.0
      %285 = vmatpush1.msra.mxu0 0.0
      %286 = vmatprep.subr.mxu0 0.0
      %287 = vmatpush1.msra.mxu0 0.0
      %288 = vmatprep.subr.mxu0 0.0
      %289 = vmatpush1.msra.mxu0 0.0
      %290 = vmatprep.subr.mxu0 0.0
      %291 = vmatpush1.msra.mxu0 0.0
      %292 = vmatprep.subr.mxu0 0.0
      %293 = vmatpush1.msra.mxu0 0.0
      %294 = vmatprep.subr.mxu0 0.0
      %295 = vmatpush1.msra.mxu0 0.0
      %296 = vmatprep.subr.mxu0 0.0
      %297 = vmatpush1.msra.mxu0 0.0
      %298 = vmatprep.subr.mxu0 0.0
      %299 = vmatpush1.msra.mxu0 0.0
      %300 = vmatprep.subr.mxu0 0.0
      %301 = vmatpush1.msra.mxu0 0.0
      %302 = vmatprep.subr.mxu0 0.0
      %303 = vmatpush1.msra.mxu0 0.0
      %304 = vmatprep.subr.mxu0 0.0
      %305 = vmatpush1.msra.mxu0 0.0
      %306 = vmatprep.subr.mxu0 0.0
      %307 = vmatpush1.msra.mxu0 0.0
      %308 = vmatprep.subr.mxu0 0.0
      %309 = vmatpush1.msra.mxu0 0.0
      %310 = vmatprep.mubr.f32.mxu0 0.0
      %311 = vmatmul.mubr.f32.gmra.mrb[0].mxu0 %v235
      %v312 = vpop.f32.mrb[0].mxu0
      %v313 = vadd.f32 %v212, %v312
      %v314 = vpop.f32.mrb[0].mxu0
      %v315 = vadd.f32 %v214, %v314
      %316 = vmatprep.mubr.f32.mxu0 0.0
      %317 = vmatmul.mubr.f32.gmra.mrb[0].mxu0 %v238
      %v318 = vpop.f32.mrb[0].mxu0
      %v319 = vadd.f32 %v218, %v318
      %v320 = vpop.f32.mrb[0].mxu0
      %v321 = vadd.f32 %v220, %v320
      %322 = vmatprep.mubr.f32.mxu0 0.0
      %323 = vmatmul.mubr.f32.gmra.mrb[0].mxu0 %v241
      %v324 = vpop.f32.mrb[0].mxu0
      %v325 = vadd.f32 %v224, %v324
      %v326 = vpop.f32.mrb[0].mxu0
      %v327 = vadd.f32 %v226, %v326
      %328 = vmatprep.mubr.f32.mxu0 0.0
      %329 = vmatmul.mubr.f32.gmra.mrb[0].mxu0 %v244
      %v330 = vpop.f32.mrb[0].mxu0
      %v331 = vadd.f32 %v230, %v330
      %v332 = vpop.f32.mrb[0].mxu0
      %v333 = vadd.f32 %v232, %v332
      %334 = vdwg.mxu0
      %v335 = vld [vmem:[%s4] sm:$0xff]
      %v336 = vld [vmem:[%s4 + $0x8] sm:$0xff]
      %v337 = vld [vmem:[%s4 + $0x10] sm:$0xff]
      %v338 = vld [vmem:[%s4 + $0x18] sm:$0xff]
      %340 = vset.pattern.permute.xlu0 0
      %341 = vperm.xlu0 %340, %v335
      %v342 = vpop.permute.xlu0 %341
      %345 = vset.pattern.permute.xlu0 0
      %346 = vperm.xlu0 %345, %v336
      %v347 = vpop.permute.xlu0 %346
      %350 = vset.pattern.permute.xlu0 0
      %351 = vperm.xlu0 %350, %v337
      %v352 = vpop.permute.xlu0 %351
      %355 = vset.pattern.permute.xlu0 0
      %356 = vperm.xlu0 %355, %v338
      %v357 = vpop.permute.xlu0 %356
      %v359 = vadd.f32 %v313, %v342
      %v360 = vadd.f32 %v315, %v342
      %v361 = vadd.f32 %v319, %v347
      %v362 = vadd.f32 %v321, %v347
      %v363 = vadd.f32 %v325, %v352
      %v364 = vadd.f32 %v327, %v352
      %v365 = vadd.f32 %v331, %v357
      %v366 = vadd.f32 %v333, %v357
      %v367 = vadd.f32 %v359, %v360
      %368 = vadd.xlane.f32.xlu0 %v367
      %v369 = vpop.xlane.xlu0 %368
      %v370 = vadd.f32 %v361, %v362
      %371 = vadd.xlane.f32.xlu0 %v370
      %v372 = vpop.xlane.xlu0 %371
      %v373 = vadd.f32 %v363, %v364
      %374 = vadd.xlane.f32.xlu0 %v373
      %v375 = vpop.xlane.xlu0 %374
      %v376 = vadd.f32 %v365, %v366
      %377 = vadd.xlane.f32.xlu0 %v376
      %v378 = vpop.xlane.xlu0 %377
      %v379 = vrcp.pop 256.0
      %v380 = vmul.f32 %v369, %v379
      %v381 = vmul.f32 %v372, %v379
      %v382 = vmul.f32 %v375, %v379
      %v383 = vmul.f32 %v378, %v379
      %v384 = vld [vmem:[%s5] sm:$0x3]
      %v385 = vld [vmem:[%s6] sm:$0x3]
      %v387 = vsel %vm132, %v384, 0
      %389 = vmatprep.subr.mxu0 0.0
      %390 = vmatpush1.msra.mxu0 %v380
      %391 = vmatprep.subr.mxu0 0.0
      %392 = vmatpush1.msra.mxu0 %v381
      %393 = vmatprep.subr.mxu0 0.0
      %394 = vmatpush1.msra.mxu0 %v382
      %395 = vmatprep.subr.mxu0 0.0
      %396 = vmatpush1.msra.mxu0 %v383
      %397 = vmatprep.subr.mxu0 0.0
      %398 = vmatpush1.msra.mxu0 0.0
      %399 = vmatprep.subr.mxu0 0.0
      %400 = vmatpush1.msra.mxu0 0.0
      %401 = vmatprep.subr.mxu0 0.0
      %402 = vmatpush1.msra.mxu0 0.0
      %403 = vmatprep.subr.mxu0 0.0
      %404 = vmatpush1.msra.mxu0 0.0
      %405 = vmatprep.subr.mxu0 0.0
      %406 = vmatpush1.msra.mxu0 0.0
      %407 = vmatprep.subr.mxu0 0.0
      %408 = vmatpush1.msra.mxu0 0.0
      %409 = vmatprep.subr.mxu0 0.0
      %410 = vmatpush1.msra.mxu0 0.0
      %411 = vmatprep.subr.mxu0 0.0
      %412 = vmatpush1.msra.mxu0 0.0
      %413 = vmatprep.subr.mxu0 0.0
      %414 = vmatpush1.msra.mxu0 0.0
      %415 = vmatprep.subr.mxu0 0.0
      %416 = vmatpush1.msra.mxu0 0.0
      %417 = vmatprep.subr.mxu0 0.0
      %418 = vmatpush1.msra.mxu0 0.0
      %419 = vmatprep.subr.mxu0 0.0
      %420 = vmatpush1.msra.mxu0 0.0
      %421 = vmatprep.subr.mxu0 0.0
      %422 = vmatpush1.msra.mxu0 0.0
      %423 = vmatprep.subr.mxu0 0.0
      %424 = vmatpush1.msra.mxu0 0.0
      %425 = vmatprep.subr.mxu0 0.0
      %426 = vmatpush1.msra.mxu0 0.0
      %427 = vmatprep.subr.mxu0 0.0
      %428 = vmatpush1.msra.mxu0 0.0
      %429 = vmatprep.subr.mxu0 0.0
      %430 = vmatpush1.msra.mxu0 0.0
      %431 = vmatprep.subr.mxu0 0.0
      %432 = vmatpush1.msra.mxu0 0.0
      %433 = vmatprep.subr.mxu0 0.0
      %434 = vmatpush1.msra.mxu0 0.0
      %435 = vmatprep.subr.mxu0 0.0
      %436 = vmatpush1.msra.mxu0 0.0
      %437 = vmatprep.subr.mxu0 0.0
      %438 = vmatpush1.msra.mxu0 0.0
      %439 = vmatprep.subr.mxu0 0.0
      %440 = vmatpush1.msra.mxu0 0.0
      %441 = vmatprep.subr.mxu0 0.0
      %442 = vmatpush1.msra.mxu0 0.0
      %443 = vmatprep.subr.mxu0 0.0
      %444 = vmatpush1.msra.mxu0 0.0
      %445 = vmatprep.subr.mxu0 0.0
      %446 = vmatpush1.msra.mxu0 0.0
      %447 = vmatprep.subr.mxu0 0.0
      %448 = vmatpush1.msra.mxu0 0.0
      %449 = vmatprep.subr.mxu0 0.0
      %450 = vmatpush1.msra.mxu0 0.0
      %451 = vmatprep.subr.mxu0 0.0
      %452 = vmatpush1.msra.mxu0 0.0
      %453 = vmatprep.mubr.f32.mxu0 0.0
      %454 = vmatmul.mubr.f32.gmra.mrb[0].mxu0 %v387
      %v455 = vpop.f32.mrb[0].mxu0
      %v456 = vadd.f32 %v385, %v455
      %v457 = vpop.f32.mrb[0].mxu0
      %458 = vdwg.mxu0
      %v459 = vmax.f32 %v456, 0.0
      %v460 = vld [vmem:[%s7] sm:$0xff]
      %v461 = vld [vmem:[%s7 + $0x8] sm:$0xff]
      %v462 = vld [vmem:[%s7 + $0x10] sm:$0xff]
      %v463 = vld [vmem:[%s7 + $0x18] sm:$0xff]
      %v464 = vld [vmem:[%s8] sm:$0xff]
      %v465 = vld [vmem:[%s8 + $0x8] sm:$0xff]
      %v466 = vld [vmem:[%s8 + $0x10] sm:$0xff]
      %v467 = vld [vmem:[%s8 + $0x18] sm:$0xff]
      %vm468 = vcmask 15360
      %v470 = vsel %vm468, %v460, 0
      %v473 = vsel %vm468, %v461, 0
      %v476 = vsel %vm468, %v462, 0
      %v479 = vsel %vm468, %v463, 0
      %vm481 = vcmask 1041408
      %v483 = vsel %vm481, %v459, 0
      %485 = vmatprep.subr.mxu0 0.0
      %486 = vmatpush1.msra.mxu0 %v483
      %487 = vmatprep.subr.mxu0 0.0
      %488 = vmatpush1.msra.mxu0 0.0
      %489 = vmatprep.subr.mxu0 0.0
      %490 = vmatpush1.msra.mxu0 0.0
      %491 = vmatprep.subr.mxu0 0.0
      %492 = vmatpush1.msra.mxu0 0.0
      %493 = vmatprep.subr.mxu0 0.0
      %494 = vmatpush1.msra.mxu0 0.0
      %495 = vmatprep.subr.mxu0 0.0
      %496 = vmatpush1.msra.mxu0 0.0
      %497 = vmatprep.subr.mxu0 0.0
      %498 = vmatpush1.msra.mxu0 0.0
      %499 = vmatprep.subr.mxu0 0.0
      %500 = vmatpush1.msra.mxu0 0.0
      %501 = vmatprep.subr.mxu0 0.0
      %502 = vmatpush1.msra.mxu0 0.0
      %503 = vmatprep.subr.mxu0 0.0
      %504 = vmatpush1.msra.mxu0 0.0
      %505 = vmatprep.subr.mxu0 0.0
      %506 = vmatpush1.msra.mxu0 0.0
      %507 = vmatprep.subr.mxu0 0.0
      %508 = vmatpush1.msra.mxu0 0.0
      %509 = vmatprep.subr.mxu0 0.0
      %510 = vmatpush1.msra.mxu0 0.0
      %511 = vmatprep.subr.mxu0 0.0
      %512 = vmatpush1.msra.mxu0 0.0
      %513 = vmatprep.subr.mxu0 0.0
      %514 = vmatpush1.msra.mxu0 0.0
      %515 = vmatprep.subr.mxu0 0.0
      %516 = vmatpush1.msra.mxu0 0.0
      %517 = vmatprep.subr.mxu0 0.0
      %518 = vmatpush1.msra.mxu0 0.0
      %519 = vmatprep.subr.mxu0 0.0
      %520 = vmatpush1.msra.mxu0 0.0
      %521 = vmatprep.subr.mxu0 0.0
      %522 = vmatpush1.msra.mxu0 0.0
      %523 = vmatprep.subr.mxu0 0.0
      %524 = vmatpush1.msra.mxu0 0.0
      %525 = vmatprep.subr.mxu0 0.0
      %526 = vmatpush1.msra.mxu0 0.0
      %527 = vmatprep.subr.mxu0 0.0
      %528 = vmatpush1.msra.mxu0 0.0
      %529 = vmatprep.subr.mxu0 0.0
      %530 = vmatpush1.msra.mxu0 0.0
      %531 = vmatprep.subr.mxu0 0.0
      %532 = vmatpush1.msra.mxu0 0.0
      %533 = vmatprep.subr.mxu0 0.0
      %534 = vmatpush1.msra.mxu0 0.0
      %535 = vmatprep.subr.mxu0 0.0
      %536 = vmatpush1.msra.mxu0 0.0
      %537 = vmatprep.subr.mxu0 0.0
      %538 = vmatpush1.msra.mxu0 0.0
      %539 = vmatprep.subr.mxu0 0.0
      %540 = vmatpush1.msra.mxu0 0.0
      %541 = vmatprep.subr.mxu0 0.0
      %542 = vmatpush1.msra.mxu0 0.0
      %543 = vmatprep.subr.mxu0 0.0
      %544 = vmatpush1.msra.mxu0 0.0
      %545 = vmatprep.subr.mxu0 0.0
      %546 = vmatpush1.msra.mxu0 0.0
      %547 = vmatprep.subr.mxu0 0.0
      %548 = vmatpush1.msra.mxu0 0.0
      %549 = vmatprep.mubr.f32.mxu0 0.0
      %550 = vmatmul.mubr.f32.gmra.mrb[0].mxu0 %v470
      %v551 = vpop.f32.mrb[0].mxu0
      %v552 = vadd.f32 %v464, %v551
      %v553 = vpop.f32.mrb[0].mxu0
      %554 = vmatprep.mubr.f32.mxu0 0.0
      %555 = vmatmul.mubr.f32.gmra.mrb[0].mxu0 %v473
      %v556 = vpop.f32.mrb[0].mxu0
      %v557 = vadd.f32 %v465, %v556
      %v558 = vpop.f32.mrb[0].mxu0
      %559 = vmatprep.mubr.f32.mxu0 0.0
      %560 = vmatmul.mubr.f32.gmra.mrb[0].mxu0 %v476
      %v561 = vpop.f32.mrb[0].mxu0
      %v562 = vadd.f32 %v466, %v561
      %v563 = vpop.f32.mrb[0].mxu0
      %564 = vmatprep.mubr.f32.mxu0 0.0
      %565 = vmatmul.mubr.f32.gmra.mrb[0].mxu0 %v479
      %v566 = vpop.f32.mrb[0].mxu0
      %v567 = vadd.f32 %v467, %v566
      %v568 = vpop.f32.mrb[0].mxu0
      %569 = vdwg.mxu0
      %v570 = vsub.f32 0.0, %v552
      %v571 = vsub.f32 0.0, %v557
      %v572 = vsub.f32 0.0, %v562
      %v573 = vsub.f32 0.0, %v567
      %v574 = vmul.f32 %v570, 1.442695
      %v575 = vpow.pop %v574
      %v576 = vmul.f32 %v571, 1.442695
      %v577 = vpow.pop %v576
      %v578 = vmul.f32 %v572, 1.442695
      %v579 = vpow.pop %v578
      %v580 = vmul.f32 %v573, 1.442695
      %v581 = vpow.pop %v580
      %v582 = vadd.f32 %v575, 1.0
      %v583 = vadd.f32 %v577, 1.0
      %v584 = vadd.f32 %v579, 1.0
      %v585 = vadd.f32 %v581, 1.0
      %v586 = vrcp.pop %v582
      %v587 = vmul.f32 1.0, %v586
      %v588 = vrcp.pop %v583
      %v589 = vmul.f32 1.0, %v588
      %v590 = vrcp.pop %v584
      %v591 = vmul.f32 1.0, %v590
      %v592 = vrcp.pop %v585
      %v593 = vmul.f32 1.0, %v592
      %595 = vset.pattern.permute.xlu0 0
      %596 = vperm.xlu0 %595, %v587
      %v597 = vpop.permute.xlu0 %596
      %600 = vset.pattern.permute.xlu0 0
      %601 = vperm.xlu0 %600, %v589
      %v602 = vpop.permute.xlu0 %601
      %605 = vset.pattern.permute.xlu0 0
      %606 = vperm.xlu0 %605, %v591
      %v607 = vpop.permute.xlu0 %606
      %610 = vset.pattern.permute.xlu0 0
      %611 = vperm.xlu0 %610, %v593
      %v612 = vpop.permute.xlu0 %611
      %v614 = vmul.f32 %v359, %v597
      %v615 = vmul.f32 %v360, %v597
      %v616 = vmul.f32 %v361, %v602
      %v617 = vmul.f32 %v362, %v602
      %v618 = vmul.f32 %v363, %v607
      %v619 = vmul.f32 %v364, %v607
      %v620 = vmul.f32 %v365, %v612
      %v621 = vmul.f32 %v366, %v612
      %v622 = vadd.f32 %v614, %v616
      %v623 = vadd.f32 %v622, %v618
      %v624 = vadd.f32 %v623, %v620
      %v625 = vrot.slane %v624, 4
      %v626 = vadd.f32 %v624, %v625
      %v627 = vrot.slane %v626, 2
      %v628 = vadd.f32 %v626, %v627
      %v629 = vrot.slane %v628, 1
      %v630 = vadd.f32 %v628, %v629
      %v631 = vadd.f32 %v615, %v617
      %v632 = vadd.f32 %v631, %v619
      %v633 = vadd.f32 %v632, %v621
      %v634 = vrot.slane %v633, 4
      %v635 = vadd.f32 %v633, %v634
      %v636 = vrot.slane %v635, 2
      %v637 = vadd.f32 %v635, %v636
      %v638 = vrot.slane %v637, 1
      %v639 = vadd.f32 %v637, %v638
      %v640 = vrcp.pop 32.0
      %v641 = vmul.f32 %v630, %v640
      %v642 = vmul.f32 %v639, %v640
      %v643 = vmax.f32 %v614, %v618
      %v644 = vmax.f32 %v616, %v620
      %v645 = vmax.f32 %v643, %v644
      %v646 = vrot.slane %v645, 4
      %v647 = vmax.f32 %v645, %v646
      %v648 = vrot.slane %v647, 2
      %v649 = vmax.f32 %v647, %v648
      %v650 = vrot.slane %v649, 1
      %v651 = vmax.f32 %v649, %v650
      %v652 = vmax.f32 %v615, %v619
      %v653 = vmax.f32 %v617, %v621
      %v654 = vmax.f32 %v652, %v653
      %v655 = vrot.slane %v654, 4
      %v656 = vmax.f32 %v654, %v655
      %v657 = vrot.slane %v656, 2
      %v658 = vmax.f32 %v656, %v657
      %v659 = vrot.slane %v658, 1
      %v660 = vmax.f32 %v658, %v659
      %vm661 = vcmask 1040384
      %v662 = vsel %vm661, %v641, %v651
      %v663 = vsel %vm661, %v642, %v660
      %666 = vrot.lane.b32.xlu0 %v662, 51
      %v667 = vpop.permute.xlu0 %666
      %668 = vrot.lane.b32.xlu0 %v663, 51
      %v669 = vpop.permute.xlu0 %668
      %vm670 = vcmask 416768
      %v671 = vsel %vm670, %v667, %v669
      %v675 = vsel %vm670, 0.0, %v667
      %v676 = vsel %vm670, %v669, 0.0
      %v677 = vld [vmem:[%s12] sm:$0x3]
      %v678 = vld [vmem:[%s13] sm:$0x3]
      %v679 = vadd.s32 %v677, 4294967293
      %vm680 = vcmp.ge.s32.totalorder %v679, 0
      %vm681 = vcmp.lt.s32.totalorder %v679, 16
      %vm682 = vmand %vm680, %vm681
      %v683 = vadd.s32 %v677, 4294967294
      %vm684 = vcmp.ge.s32.totalorder %v683, 0
      %vm685 = vcmp.lt.s32.totalorder %v683, 16
      %vm686 = vmand %vm684, %vm685
      %v687 = vadd.s32 %v677, 4294967295
      %vm688 = vcmp.ge.s32.totalorder %v687, 0
      %vm689 = vcmp.lt.s32.totalorder %v687, 16
      %vm690 = vmand %vm688, %vm689
      %vm691 = vcmp.ge.s32.totalorder %v677, 0
      %vm692 = vcmp.lt.s32.totalorder %v677, 16
      %vm693 = vmand %vm691, %vm692
      %v694 = vadd.s32 %v677, 1
      %vm695 = vcmp.ge.s32.totalorder %v694, 0
      %vm696 = vcmp.lt.s32.totalorder %v694, 16
      %vm697 = vmand %vm695, %vm696
      %v698 = vadd.s32 %v677, 2
      %vm699 = vcmp.ge.s32.totalorder %v698, 0
      %vm700 = vcmp.lt.s32.totalorder %v698, 16
      %vm701 = vmand %vm699, %vm700
      %v702 = vadd.s32 %v677, 3
      %vm703 = vcmp.ge.s32.totalorder %v702, 0
      %vm704 = vcmp.lt.s32.totalorder %v702, 16
      %vm705 = vmand %vm703, %vm704
      %v706 = vadd.s32 %v678, 4294967293
      %vm707 = vcmp.ge.s32.totalorder %v706, 0
      %vm708 = vcmp.lt.s32.totalorder %v706, 16
      %vm709 = vmand %vm707, %vm708
      %v710 = vadd.s32 %v678, 4294967294
      %vm711 = vcmp.ge.s32.totalorder %v710, 0
      %vm712 = vcmp.lt.s32.totalorder %v710, 16
      %vm713 = vmand %vm711, %vm712
      %v714 = vadd.s32 %v678, 4294967295
      %vm715 = vcmp.ge.s32.totalorder %v714, 0
      %vm716 = vcmp.lt.s32.totalorder %v714, 16
      %vm717 = vmand %vm715, %vm716
      %vm718 = vcmp.ge.s32.totalorder %v678, 0
      %vm719 = vcmp.lt.s32.totalorder %v678, 16
      %vm720 = vmand %vm718, %vm719
      %v721 = vadd.s32 %v678, 1
      %vm722 = vcmp.ge.s32.totalorder %v721, 0
      %vm723 = vcmp.lt.s32.totalorder %v721, 16
      %vm724 = vmand %vm722, %vm723
      %v725 = vadd.s32 %v678, 2
      %vm726 = vcmp.ge.s32.totalorder %v725, 0
      %vm727 = vcmp.lt.s32.totalorder %v725, 16
      %vm728 = vmand %vm726, %vm727
      %v729 = vadd.s32 %v678, 3
      %vm730 = vcmp.ge.s32.totalorder %v729, 0
      %vm731 = vcmp.lt.s32.totalorder %v729, 16
      %vm732 = vmand %vm730, %vm731
      %vm733 = vmand %vm682, %vm709
      %v734 = vsel %vm733, 1, 0
      %v735 = vlaneseq
      %v736 = vshrl.u32 %v735, 7
      %v737 = vsub.s32 0, %v736
      %v738 = vrot.slane %v734, %v737
      %v739 = vlaneseq
      %v740 = vshrl.u32 %v739, 7
      %v741 = vsub.s32 1, %v740
      %v742 = vrot.slane %v734, %v741
      %vm743 = vcmp.eq.s32.totalorder %v738, 1
      %vm744 = vcmp.eq.s32.totalorder %v742, 1
      %v745 = vsel %vm743, %v675, 0.0
      %v746 = vsel %vm744, %v671, 0.0
      %s747 = sld [smem:[#allocation8]]
      %s748 = sld [smem:[#allocation8 + $0x31]]
      %v749 = vstv %s747
      %v750 = vmul.f32 %v749, %v745
      %v751 = vmul.f32 %v749, %v746
      %v752 = vadd.f32 %v750, 0.0
      %v753 = vadd.f32 %v751, 0.0
      %v754 = vstv %s748
      %v755 = vmul.f32 %v754, %v745
      %v756 = vmul.f32 %v754, %v746
      %v759 = vrot.slane %v755, 1
      %v760 = vrot.slane %v756, 1
      %v763 = vadd.f32 %v752, %v759
      %v764 = vadd.f32 %v753, %v760
      %vm765 = vmand %vm682, %vm713
      %v766 = vsel %vm765, 1, 0
      %v767 = vlaneseq
      %v768 = vshrl.u32 %v767, 7
      %v769 = vsub.s32 0, %v768
      %v770 = vrot.slane %v766, %v769
      %v771 = vlaneseq
      %v772 = vshrl.u32 %v771, 7
      %v773 = vsub.s32 1, %v772
      %v774 = vrot.slane %v766, %v773
      %vm775 = vcmp.eq.s32.totalorder %v770, 1
      %vm776 = vcmp.eq.s32.totalorder %v774, 1
      %779 = vrot.lane.b32.xlu0 %v675, 127
      %v780 = vpop.permute.xlu0 %779
      %781 = vrot.lane.b32.xlu0 %v671, 127
      %v782 = vpop.permute.xlu0 %781
      %783 = vrot.lane.b32.xlu0 %v676, 127
      %v784 = vpop.permute.xlu0 %783
      %vm785 = vcmask 1039360
      %v786 = vsel %vm785, %v780, %v782
      %v787 = vsel %vm785, %v782, %v784
      %v790 = vsel %vm775, %v786, 0.0
      %v791 = vsel %vm776, %v787, 0.0
      %s792 = sld [smem:[#allocation8 + $0x1]]
      %s793 = sld [smem:[#allocation8 + $0x32]]
      %v794 = vstv %s792
      %v795 = vmul.f32 %v794, %v790
      %v796 = vmul.f32 %v794, %v791
      %v797 = vadd.f32 %v763, %v795
      %v798 = vadd.f32 %v764, %v796
      %v799 = vstv %s793
      %v800 = vmul.f32 %v799, %v790
      %v801 = vmul.f32 %v799, %v791
      %v804 = vrot.slane %v800, 1
      %v805 = vrot.slane %v801, 1
      %v808 = vadd.f32 %v797, %v804
      %v809 = vadd.f32 %v798, %v805
      %vm810 = vmand %vm682, %vm717
      %v811 = vsel %vm810, 1, 0
      %v812 = vlaneseq
      %v813 = vshrl.u32 %v812, 7
      %v814 = vsub.s32 0, %v813
      %v815 = vrot.slane %v811, %v814
      %v816 = vlaneseq
      %v817 = vshrl.u32 %v816, 7
      %v818 = vsub.s32 1, %v817
      %v819 = vrot.slane %v811, %v818
      %vm820 = vcmp.eq.s32.totalorder %v815, 1
      %vm821 = vcmp.eq.s32.totalorder %v819, 1
      %822 = vrot.lane.b32.xlu0 %v675, 126
      %v823 = vpop.permute.xlu0 %822
      %824 = vrot.lane.b32.xlu0 %v671, 126
      %v825 = vpop.permute.xlu0 %824
      %826 = vrot.lane.b32.xlu0 %v676, 126
      %v827 = vpop.permute.xlu0 %826
      %vm828 = vcmask 1031168
      %v829 = vsel %vm828, %v823, %v825
      %v830 = vsel %vm828, %v825, %v827
      %v833 = vsel %vm820, %v829, 0.0
      %v834 = vsel %vm821, %v830, 0.0
      %s835 = sld [smem:[#allocation8 + $0x2]]
      %s836 = sld [smem:[#allocation8 + $0x33]]
      %v837 = vstv %s835
      %v838 = vmul.f32 %v837, %v833
      %v839 = vmul.f32 %v837, %v834
      %v840 = vadd.f32 %v808, %v838
      %v841 = vadd.f32 %v809, %v839
      %v842 = vstv %s836
      %v843 = vmul.f32 %v842, %v833
      %v844 = vmul.f32 %v842, %v834
      %v847 = vrot.slane %v843, 1
      %v848 = vrot.slane %v844, 1
      %v851 = vadd.f32 %v840, %v847
      %v852 = vadd.f32 %v841, %v848
      %vm853 = vmand %vm682, %vm720
      %v854 = vsel %vm853, 1, 0
      %v855 = vlaneseq
      %v856 = vshrl.u32 %v855, 7
      %v857 = vsub.s32 0, %v856
      %v858 = vrot.slane %v854, %v857
      %v859 = vlaneseq
      %v860 = vshrl.u32 %v859, 7
      %v861 = vsub.s32 1, %v860
      %v862 = vrot.slane %v854, %v861
      %vm863 = vcmp.eq.s32.totalorder %v858, 1
      %vm864 = vcmp.eq.s32.totalorder %v862, 1
      %865 = vrot.lane.b32.xlu0 %v675, 125
      %v866 = vpop.permute.xlu0 %865
      %867 = vrot.lane.b32.xlu0 %v671, 125
      %v868 = vpop.permute.xlu0 %867
      %869 = vrot.lane.b32.xlu0 %v676, 125
      %v870 = vpop.permute.xlu0 %869
      %vm871 = vcmask 1022976
      %v872 = vsel %vm871, %v866, %v868
      %v873 = vsel %vm871, %v868, %v870
      %v876 = vsel %vm863, %v872, 0.0
      %v877 = vsel %vm864, %v873, 0.0
      %s878 = sld [smem:[#allocation8 + $0x3]]
      %s879 = sld [smem:[#allocation8 + $0x34]]
      %v880 = vstv %s878
      %v881 = vmul.f32 %v880, %v876
      %v882 = vmul.f32 %v880, %v877
      %v883 = vadd.f32 %v851, %v881
      %v884 = vadd.f32 %v852, %v882
      %v885 = vstv %s879
      %v886 = vmul.f32 %v885, %v876
      %v887 = vmul.f32 %v885, %v877
      %v890 = vrot.slane %v886, 1
      %v891 = vrot.slane %v887, 1
      %v894 = vadd.f32 %v883, %v890
      %v895 = vadd.f32 %v884, %v891
      %vm896 = vmand %vm682, %vm724
      %v897 = vsel %vm896, 1, 0
      %v898 = vlaneseq
      %v899 = vshrl.u32 %v898, 7
      %v900 = vsub.s32 0, %v899
      %v901 = vrot.slane %v897, %v900
      %v902 = vlaneseq
      %v903 = vshrl.u32 %v902, 7
      %v904 = vsub.s32 1, %v903
      %v905 = vrot.slane %v897, %v904
      %vm906 = vcmp.eq.s32.totalorder %v901, 1
      %vm907 = vcmp.eq.s32.totalorder %v905, 1
      %908 = vrot.lane.b32.xlu0 %v675, 124
      %v909 = vpop.permute.xlu0 %908
      %910 = vrot.lane.b32.xlu0 %v671, 124
      %v911 = vpop.permute.xlu0 %910
      %912 = vrot.lane.b32.xlu0 %v676, 124
      %v913 = vpop.permute.xlu0 %912
      %vm914 = vcmask 1014784
      %v915 = vsel %vm914, %v909, %v911
      %v916 = vsel %vm914, %v911, %v913
      %v919 = vsel %vm906, %v915, 0.0
      %v920 = vsel %vm907, %v916, 0.0
      %s921 = sld [smem:[#allocation8 + $0x4]]
      %s922 = sld [smem:[#allocation8 + $0x35]]
      %v923 = vstv %s921
      %v924 = vmul.f32 %v923, %v919
      %v925 = vmul.f32 %v923, %v920
      %v926 = vadd.f32 %v894, %v924
      %v927 = vadd.f32 %v895, %v925
      %v928 = vstv %s922
      %v929 = vmul.f32 %v928, %v919
      %v930 = vmul.f32 %v928, %v920
      %v933 = vrot.slane %v929, 1
      %v934 = vrot.slane %v930, 1
      %v937 = vadd.f32 %v926, %v933
      %v938 = vadd.f32 %v927, %v934
      %vm939 = vmand %vm682, %vm728
      %v940 = vsel %vm939, 1, 0
      %v941 = vlaneseq
      %v942 = vshrl.u32 %v941, 7
      %v943 = vsub.s32 0, %v942
      %v944 = vrot.slane %v940, %v943
      %v945 = vlaneseq
      %v946 = vshrl.u32 %v945, 7
      %v947 = vsub.s32 1, %v946
      %v948 = vrot.slane %v940, %v947
      %vm949 = vcmp.eq.s32.totalorder %v944, 1
      %vm950 = vcmp.eq.s32.totalorder %v948, 1
      %951 = vrot.lane.b32.xlu0 %v675, 123
      %v952 = vpop.permute.xlu0 %951
      %953 = vrot.lane.b32.xlu0 %v671, 123
      %v954 = vpop.permute.xlu0 %953
      %955 = vrot.lane.b32.xlu0 %v676, 123
      %v956 = vpop.permute.xlu0 %955
      %vm957 = vcmask 1006592
      %v958 = vsel %vm957, %v952, %v954
      %v959 = vsel %vm957, %v954, %v956
      %v962 = vsel %vm949, %v958, 0.0
      %v963 = vsel %vm950, %v959, 0.0
      %s964 = sld [smem:[#allocation8 + $0x5]]
      %s965 = sld [smem:[#allocation8 + $0x36]]
      %v966 = vstv %s964
      %v967 = vmul.f32 %v966, %v962
      %v968 = vmul.f32 %v966, %v963
      %v969 = vadd.f32 %v937, %v967
      %v970 = vadd.f32 %v938, %v968
      %v971 = vstv %s965
      %v972 = vmul.f32 %v971, %v962
      %v973 = vmul.f32 %v971, %v963
      %v976 = vrot.slane %v972, 1
      %v977 = vrot.slane %v973, 1
      %v980 = vadd.f32 %v969, %v976
      %v981 = vadd.f32 %v970, %v977
      %vm982 = vmand %vm682, %vm732
      %v983 = vsel %vm982, 1, 0
      %v984 = vlaneseq
      %v985 = vshrl.u32 %v984, 7
      %v986 = vsub.s32 0, %v985
      %v987 = vrot.slane %v983, %v986
      %v988 = vlaneseq
      %v989 = vshrl.u32 %v988, 7
      %v990 = vsub.s32 1, %v989
      %v991 = vrot.slane %v983, %v990
      %vm992 = vcmp.eq.s32.totalorder %v987, 1
      %vm993 = vcmp.eq.s32.totalorder %v991, 1
      %994 = vrot.lane.b32.xlu0 %v675, 122
      %v995 = vpop.permute.xlu0 %994
      %996 = vrot.lane.b32.xlu0 %v671, 122
      %v997 = vpop.permute.xlu0 %996
      %998 = vrot.lane.b32.xlu0 %v676, 122
      %v999 = vpop.permute.xlu0 %998
      %vm1000 = vcmask 998400
      %v1001 = vsel %vm1000, %v995, %v997
      %v1002 = vsel %vm1000, %v997, %v999
      %v1005 = vsel %vm992, %v1001, 0.0
      %v1006 = vsel %vm993, %v1002, 0.0
      %s1007 = sld [smem:[#allocation8 + $0x6]]
      %s1008 = sld [smem:[#allocation8 + $0x37]]
      %v1009 = vstv %s1007
      %v1010 = vmul.f32 %v1009, %v1005
      %v1011 = vmul.f32 %v1009, %v1006
      %v1012 = vadd.f32 %v980, %v1010
      %v1013 = vadd.f32 %v981, %v1011
      %v1014 = vstv %s1008
      %v1015 = vmul.f32 %v1014, %v1005
      %v1016 = vmul.f32 %v1014, %v1006
      %v1019 = vrot.slane %v1015, 1
      %v1020 = vrot.slane %v1016, 1
      %v1023 = vadd.f32 %v1012, %v1019
      %v1024 = vadd.f32 %v1013, %v1020
      %vm1025 = vmand %vm686, %vm709
      %v1026 = vsel %vm1025, 1, 0
      %v1027 = vlaneseq
      %v1028 = vshrl.u32 %v1027, 7
      %v1029 = vsub.s32 0, %v1028
      %v1030 = vrot.slane %v1026, %v1029
      %v1031 = vlaneseq
      %v1032 = vshrl.u32 %v1031, 7
      %v1033 = vsub.s32 1, %v1032
      %v1034 = vrot.slane %v1026, %v1033
      %vm1035 = vcmp.eq.s32.totalorder %v1030, 1
      %vm1036 = vcmp.eq.s32.totalorder %v1034, 1
      %1037 = vrot.lane.b32.xlu0 %v675, 112
      %v1038 = vpop.permute.xlu0 %1037
      %1039 = vrot.lane.b32.xlu0 %v671, 112
      %v1040 = vpop.permute.xlu0 %1039
      %1041 = vrot.lane.b32.xlu0 %v676, 112
      %v1042 = vpop.permute.xlu0 %1041
      %vm1043 = vcmask 916480
      %v1044 = vsel %vm1043, %v1038, %v1040
      %v1045 = vsel %vm1043, %v1040, %v1042
      %v1048 = vsel %vm1035, %v1044, 0.0
      %v1049 = vsel %vm1036, %v1045, 0.0
      %s1050 = sld [smem:[#allocation8 + $0x7]]
      %s1051 = sld [smem:[#allocation8 + $0x38]]
      %v1052 = vstv %s1050
      %v1053 = vmul.f32 %v1052, %v1048
      %v1054 = vmul.f32 %v1052, %v1049
      %v1055 = vadd.f32 %v1023, %v1053
      %v1056 = vadd.f32 %v1024, %v1054
      %v1057 = vstv %s1051
      %v1058 = vmul.f32 %v1057, %v1048
      %v1059 = vmul.f32 %v1057, %v1049
      %v1062 = vrot.slane %v1058, 1
      %v1063 = vrot.slane %v1059, 1
      %v1066 = vadd.f32 %v1055, %v1062
      %v1067 = vadd.f32 %v1056, %v1063
      %vm1068 = vmand %vm686, %vm713
      %v1069 = vsel %vm1068, 1, 0
      %v1070 = vlaneseq
      %v1071 = vshrl.u32 %v1070, 7
      %v1072 = vsub.s32 0, %v1071
      %v1073 = vrot.slane %v1069, %v1072
      %v1074 = vlaneseq
      %v1075 = vshrl.u32 %v1074, 7
      %v1076 = vsub.s32 1, %v1075
      %v1077 = vrot.slane %v1069, %v1076
      %vm1078 = vcmp.eq.s32.totalorder %v1073, 1
      %vm1079 = vcmp.eq.s32.totalorder %v1077, 1
      %1080 = vrot.lane.b32.xlu0 %v675, 111
      %v1081 = vpop.permute.xlu0 %1080
      %1082 = vrot.lane.b32.xlu0 %v671, 111
      %v1083 = vpop.permute.xlu0 %1082
      %1084 = vrot.lane.b32.xlu0 %v676, 111
      %v1085 = vpop.permute.xlu0 %1084
      %vm1086 = vcmask 908288
      %v1087 = vsel %vm1086, %v1081, %v1083
      %v1088 = vsel %vm1086, %v1083, %v1085
      %v1091 = vsel %vm1078, %v1087, 0.0
      %v1092 = vsel %vm1079, %v1088, 0.0
      %s1093 = sld [smem:[#allocation8 + $0x8]]
      %s1094 = sld [smem:[#allocation8 + $0x39]]
      %v1095 = vstv %s1093
      %v1096 = vmul.f32 %v1095, %v1091
      %v1097 = vmul.f32 %v1095, %v1092
      %v1098 = vadd.f32 %v1066, %v1096
      %v1099 = vadd.f32 %v1067, %v1097
      %v1100 = vstv %s1094
      %v1101 = vmul.f32 %v1100, %v1091
      %v1102 = vmul.f32 %v1100, %v1092
      %v1105 = vrot.slane %v1101, 1
      %v1106 = vrot.slane %v1102, 1
      %v1109 = vadd.f32 %v1098, %v1105
      %v1110 = vadd.f32 %v1099, %v1106
      %vm1111 = vmand %vm686, %vm717
      %v1112 = vsel %vm1111, 1, 0
      %v1113 = vlaneseq
      %v1114 = vshrl.u32 %v1113, 7
      %v1115 = vsub.s32 0, %v1114
      %v1116 = vrot.slane %v1112, %v1115
      %v1117 = vlaneseq
      %v1118 = vshrl.u32 %v1117, 7
      %v1119 = vsub.s32 1, %v1118
      %v1120 = vrot.slane %v1112, %v1119
      %vm1121 = vcmp.eq.s32.totalorder %v1116, 1
      %vm1122 = vcmp.eq.s32.totalorder %v1120, 1
      %1123 = vrot.lane.b32.xlu0 %v675, 110
      %v1124 = vpop.permute.xlu0 %1123
      %1125 = vrot.lane.b32.xlu0 %v671, 110
      %v1126 = vpop.permute.xlu0 %1125
      %1127 = vrot.lane.b32.xlu0 %v676, 110
      %v1128 = vpop.permute.xlu0 %1127
      %vm1129 = vcmask 900096
      %v1130 = vsel %vm1129, %v1124, %v1126
      %v1131 = vsel %vm1129, %v1126, %v1128
      %v1134 = vsel %vm1121, %v1130, 0.0
      %v1135 = vsel %vm1122, %v1131, 0.0
      %s1136 = sld [smem:[#allocation8 + $0x9]]
      %s1137 = sld [smem:[#allocation8 + $0x3a]]
      %v1138 = vstv %s1136
      %v1139 = vmul.f32 %v1138, %v1134
      %v1140 = vmul.f32 %v1138, %v1135
      %v1141 = vadd.f32 %v1109, %v1139
      %v1142 = vadd.f32 %v1110, %v1140
      %v1143 = vstv %s1137
      %v1144 = vmul.f32 %v1143, %v1134
      %v1145 = vmul.f32 %v1143, %v1135
      %v1148 = vrot.slane %v1144, 1
      %v1149 = vrot.slane %v1145, 1
      %v1152 = vadd.f32 %v1141, %v1148
      %v1153 = vadd.f32 %v1142, %v1149
      %vm1154 = vmand %vm686, %vm720
      %v1155 = vsel %vm1154, 1, 0
      %v1156 = vlaneseq
      %v1157 = vshrl.u32 %v1156, 7
      %v1158 = vsub.s32 0, %v1157
      %v1159 = vrot.slane %v1155, %v1158
      %v1160 = vlaneseq
      %v1161 = vshrl.u32 %v1160, 7
      %v1162 = vsub.s32 1, %v1161
      %v1163 = vrot.slane %v1155, %v1162
      %vm1164 = vcmp.eq.s32.totalorder %v1159, 1
      %vm1165 = vcmp.eq.s32.totalorder %v1163, 1
      %1166 = vrot.lane.b32.xlu0 %v675, 109
      %v1167 = vpop.permute.xlu0 %1166
      %1168 = vrot.lane.b32.xlu0 %v671, 109
      %v1169 = vpop.permute.xlu0 %1168
      %1170 = vrot.lane.b32.xlu0 %v676, 109
      %v1171 = vpop.permute.xlu0 %1170
      %vm1172 = vcmask 891904
      %v1173 = vsel %vm1172, %v1167, %v1169
      %v1174 = vsel %vm1172, %v1169, %v1171
      %v1177 = vsel %vm1164, %v1173, 0.0
      %v1178 = vsel %vm1165, %v1174, 0.0
      %s1179 = sld [smem:[#allocation8 + $0xa]]
      %s1180 = sld [smem:[#allocation8 + $0x3b]]
      %v1181 = vstv %s1179
      %v1182 = vmul.f32 %v1181, %v1177
      %v1183 = vmul.f32 %v1181, %v1178
      %v1184 = vadd.f32 %v1152, %v1182
      %v1185 = vadd.f32 %v1153, %v1183
      %v1186 = vstv %s1180
      %v1187 = vmul.f32 %v1186, %v1177
      %v1188 = vmul.f32 %v1186, %v1178
      %v1191 = vrot.slane %v1187, 1
      %v1192 = vrot.slane %v1188, 1
      %v1195 = vadd.f32 %v1184, %v1191
      %v1196 = vadd.f32 %v1185, %v1192
      %vm1197 = vmand %vm686, %vm724
      %v1198 = vsel %vm1197, 1, 0
      %v1199 = vlaneseq
      %v1200 = vshrl.u32 %v1199, 7
      %v1201 = vsub.s32 0, %v1200
      %v1202 = vrot.slane %v1198, %v1201
      %v1203 = vlaneseq
      %v1204 = vshrl.u32 %v1203, 7
      %v1205 = vsub.s32 1, %v1204
      %v1206 = vrot.slane %v1198, %v1205
      %vm1207 = vcmp.eq.s32.totalorder %v1202, 1
      %vm1208 = vcmp.eq.s32.totalorder %v1206, 1
      %1209 = vrot.lane.b32.xlu0 %v675, 108
      %v1210 = vpop.permute.xlu0 %1209
      %1211 = vrot.lane.b32.xlu0 %v671, 108
      %v1212 = vpop.permute.xlu0 %1211
      %1213 = vrot.lane.b32.xlu0 %v676, 108
      %v1214 = vpop.permute.xlu0 %1213
      %vm1215 = vcmask 883712
      %v1216 = vsel %vm1215, %v1210, %v1212
      %v1217 = vsel %vm1215, %v1212, %v1214
      %v1220 = vsel %vm1207, %v1216, 0.0
      %v1221 = vsel %vm1208, %v1217, 0.0
      %s1222 = sld [smem:[#allocation8 + $0xb]]
      %s1223 = sld [smem:[#allocation8 + $0x3c]]
      %v1224 = vstv %s1222
      %v1225 = vmul.f32 %v1224, %v1220
      %v1226 = vmul.f32 %v1224, %v1221
      %v1227 = vadd.f32 %v1195, %v1225
      %v1228 = vadd.f32 %v1196, %v1226
      %v1229 = vstv %s1223
      %v1230 = vmul.f32 %v1229, %v1220
      %v1231 = vmul.f32 %v1229, %v1221
      %v1234 = vrot.slane %v1230, 1
      %v1235 = vrot.slane %v1231, 1
      %v1238 = vadd.f32 %v1227, %v1234
      %v1239 = vadd.f32 %v1228, %v1235
      %vm1240 = vmand %vm686, %vm728
      %v1241 = vsel %vm1240, 1, 0
      %v1242 = vlaneseq
      %v1243 = vshrl.u32 %v1242, 7
      %v1244 = vsub.s32 0, %v1243
      %v1245 = vrot.slane %v1241, %v1244
      %v1246 = vlaneseq
      %v1247 = vshrl.u32 %v1246, 7
      %v1248 = vsub.s32 1, %v1247
      %v1249 = vrot.slane %v1241, %v1248
      %vm1250 = vcmp.eq.s32.totalorder %v1245, 1
      %vm1251 = vcmp.eq.s32.totalorder %v1249, 1
      %1252 = vrot.lane.b32.xlu0 %v675, 107
      %v1253 = vpop.permute.xlu0 %1252
      %1254 = vrot.lane.b32.xlu0 %v671, 107
      %v1255 = vpop.permute.xlu0 %1254
      %1256 = vrot.lane.b32.xlu0 %v676, 107
      %v1257 = vpop.permute.xlu0 %1256
      %vm1258 = vcmask 875520
      %v1259 = vsel %vm1258, %v1253, %v1255
      %v1260 = vsel %vm1258, %v1255, %v1257
      %v1263 = vsel %vm1250, %v1259, 0.0
      %v1264 = vsel %vm1251, %v1260, 0.0
      %s1265 = sld [smem:[#allocation8 + $0xc]]
      %s1266 = sld [smem:[#allocation8 + $0x3d]]
      %v1267 = vstv %s1265
      %v1268 = vmul.f32 %v1267, %v1263
      %v1269 = vmul.f32 %v1267, %v1264
      %v1270 = vadd.f32 %v1238, %v1268
      %v1271 = vadd.f32 %v1239, %v1269
      %v1272 = vstv %s1266
      %v1273 = vmul.f32 %v1272, %v1263
      %v1274 = vmul.f32 %v1272, %v1264
      %v1277 = vrot.slane %v1273, 1
      %v1278 = vrot.slane %v1274, 1
      %v1281 = vadd.f32 %v1270, %v1277
      %v1282 = vadd.f32 %v1271, %v1278
      %vm1283 = vmand %vm686, %vm732
      %v1284 = vsel %vm1283, 1, 0
      %v1285 = vlaneseq
      %v1286 = vshrl.u32 %v1285, 7
      %v1287 = vsub.s32 0, %v1286
      %v1288 = vrot.slane %v1284, %v1287
      %v1289 = vlaneseq
      %v1290 = vshrl.u32 %v1289, 7
      %v1291 = vsub.s32 1, %v1290
      %v1292 = vrot.slane %v1284, %v1291
      %vm1293 = vcmp.eq.s32.totalorder %v1288, 1
      %vm1294 = vcmp.eq.s32.totalorder %v1292, 1
      %1295 = vrot.lane.b32.xlu0 %v675, 106
      %v1296 = vpop.permute.xlu0 %1295
      %1297 = vrot.lane.b32.xlu0 %v671, 106
      %v1298 = vpop.permute.xlu0 %1297
      %1299 = vrot.lane.b32.xlu0 %v676, 106
      %v1300 = vpop.permute.xlu0 %1299
      %vm1301 = vcmask 867328
      %v1302 = vsel %vm1301, %v1296, %v1298
      %v1303 = vsel %vm1301, %v1298, %v1300
      %v1306 = vsel %vm1293, %v1302, 0.0
      %v1307 = vsel %vm1294, %v1303, 0.0
      %s1308 = sld [smem:[#allocation8 + $0xd]]
      %s1309 = sld [smem:[#allocation8 + $0x3e]]
      %v1310 = vstv %s1308
      %v1311 = vmul.f32 %v1310, %v1306
      %v1312 = vmul.f32 %v1310, %v1307
      %v1313 = vadd.f32 %v1281, %v1311
      %v1314 = vadd.f32 %v1282, %v1312
      %v1315 = vstv %s1309
      %v1316 = vmul.f32 %v1315, %v1306
      %v1317 = vmul.f32 %v1315, %v1307
      %v1320 = vrot.slane %v1316, 1
      %v1321 = vrot.slane %v1317, 1
      %v1324 = vadd.f32 %v1313, %v1320
      %v1325 = vadd.f32 %v1314, %v1321
      %vm1326 = vmand %vm690, %vm709
      %v1327 = vsel %vm1326, 1, 0
      %v1328 = vlaneseq
      %v1329 = vshrl.u32 %v1328, 7
      %v1330 = vsub.s32 0, %v1329
      %v1331 = vrot.slane %v1327, %v1330
      %v1332 = vlaneseq
      %v1333 = vshrl.u32 %v1332, 7
      %v1334 = vsub.s32 1, %v1333
      %v1335 = vrot.slane %v1327, %v1334
      %vm1336 = vcmp.eq.s32.totalorder %v1331, 1
      %vm1337 = vcmp.eq.s32.totalorder %v1335, 1
      %1338 = vrot.lane.b32.xlu0 %v675, 96
      %v1339 = vpop.permute.xlu0 %1338
      %1340 = vrot.lane.b32.xlu0 %v671, 96
      %v1341 = vpop.permute.xlu0 %1340
      %1342 = vrot.lane.b32.xlu0 %v676, 96
      %v1343 = vpop.permute.xlu0 %1342
      %vm1344 = vcmask 785408
      %v1345 = vsel %vm1344, %v1339, %v1341
      %v1346 = vsel %vm1344, %v1341, %v1343
      %v1349 = vsel %vm1336, %v1345, 0.0
      %v1350 = vsel %vm1337, %v1346, 0.0
      %s1351 = sld [smem:[#allocation8 + $0xe]]
      %s1352 = sld [smem:[#allocation8 + $0x3f]]
      %v1353 = vstv %s1351
      %v1354 = vmul.f32 %v1353, %v1349
      %v1355 = vmul.f32 %v1353, %v1350
      %v1356 = vadd.f32 %v1324, %v1354
      %v1357 = vadd.f32 %v1325, %v1355
      %v1358 = vstv %s1352
      %v1359 = vmul.f32 %v1358, %v1349
      %v1360 = vmul.f32 %v1358, %v1350
      %v1363 = vrot.slane %v1359, 1
      %v1364 = vrot.slane %v1360, 1
      %v1367 = vadd.f32 %v1356, %v1363
      %v1368 = vadd.f32 %v1357, %v1364
      %vm1369 = vmand %vm690, %vm713
      %v1370 = vsel %vm1369, 1, 0
      %v1371 = vlaneseq
      %v1372 = vshrl.u32 %v1371, 7
      %v1373 = vsub.s32 0, %v1372
      %v1374 = vrot.slane %v1370, %v1373
      %v1375 = vlaneseq
      %v1376 = vshrl.u32 %v1375, 7
      %v1377 = vsub.s32 1, %v1376
      %v1378 = vrot.slane %v1370, %v1377
      %vm1379 = vcmp.eq.s32.totalorder %v1374, 1
      %vm1380 = vcmp.eq.s32.totalorder %v1378, 1
      %1381 = vrot.lane.b32.xlu0 %v675, 95
      %v1382 = vpop.permute.xlu0 %1381
      %1383 = vrot.lane.b32.xlu0 %v671, 95
      %v1384 = vpop.permute.xlu0 %1383
      %1385 = vrot.lane.b32.xlu0 %v676, 95
      %v1386 = vpop.permute.xlu0 %1385
      %vm1387 = vcmask 777216
      %v1388 = vsel %vm1387, %v1382, %v1384
      %v1389 = vsel %vm1387, %v1384, %v1386
      %v1392 = vsel %vm1379, %v1388, 0.0
      %v1393 = vsel %vm1380, %v1389, 0.0
      %s1394 = sld [smem:[#allocation8 + $0xf]]
      %s1395 = sld [smem:[#allocation8 + $0x40]]
      %v1396 = vstv %s1394
      %v1397 = vmul.f32 %v1396, %v1392
      %v1398 = vmul.f32 %v1396, %v1393
      %v1399 = vadd.f32 %v1367, %v1397
      %v1400 = vadd.f32 %v1368, %v1398
      %v1401 = vstv %s1395
      %v1402 = vmul.f32 %v1401, %v1392
      %v1403 = vmul.f32 %v1401, %v1393
      %v1406 = vrot.slane %v1402, 1
      %v1407 = vrot.slane %v1403, 1
      %v1410 = vadd.f32 %v1399, %v1406
      %v1411 = vadd.f32 %v1400, %v1407
      %vm1412 = vmand %vm690, %vm717
      %v1413 = vsel %vm1412, 1, 0
      %v1414 = vlaneseq
      %v1415 = vshrl.u32 %v1414, 7
      %v1416 = vsub.s32 0, %v1415
      %v1417 = vrot.slane %v1413, %v1416
      %v1418 = vlaneseq
      %v1419 = vshrl.u32 %v1418, 7
      %v1420 = vsub.s32 1, %v1419
      %v1421 = vrot.slane %v1413, %v1420
      %vm1422 = vcmp.eq.s32.totalorder %v1417, 1
      %vm1423 = vcmp.eq.s32.totalorder %v1421, 1
      %1424 = vrot.lane.b32.xlu0 %v675, 94
      %v1425 = vpop.permute.xlu0 %1424
      %1426 = vrot.lane.b32.xlu0 %v671, 94
      %v1427 = vpop.permute.xlu0 %1426
      %1428 = vrot.lane.b32.xlu0 %v676, 94
      %v1429 = vpop.permute.xlu0 %1428
      %vm1430 = vcmask 769024
      %v1431 = vsel %vm1430, %v1425, %v1427
      %v1432 = vsel %vm1430, %v1427, %v1429
      %v1435 = vsel %vm1422, %v1431, 0.0
      %v1436 = vsel %vm1423, %v1432, 0.0
      %s1437 = sld [smem:[#allocation8 + $0x10]]
      %s1438 = sld [smem:[#allocation8 + $0x41]]
      %v1439 = vstv %s1437
      %v1440 = vmul.f32 %v1439, %v1435
      %v1441 = vmul.f32 %v1439, %v1436
      %v1442 = vadd.f32 %v1410, %v1440
      %v1443 = vadd.f32 %v1411, %v1441
      %v1444 = vstv %s1438
      %v1445 = vmul.f32 %v1444, %v1435
      %v1446 = vmul.f32 %v1444, %v1436
      %v1449 = vrot.slane %v1445, 1
      %v1450 = vrot.slane %v1446, 1
      %v1453 = vadd.f32 %v1442, %v1449
      %v1454 = vadd.f32 %v1443, %v1450
      %vm1455 = vmand %vm690, %vm720
      %v1456 = vsel %vm1455, 1, 0
      %v1457 = vlaneseq
      %v1458 = vshrl.u32 %v1457, 7
      %v1459 = vsub.s32 0, %v1458
      %v1460 = vrot.slane %v1456, %v1459
      %v1461 = vlaneseq
      %v1462 = vshrl.u32 %v1461, 7
      %v1463 = vsub.s32 1, %v1462
      %v1464 = vrot.slane %v1456, %v1463
      %vm1465 = vcmp.eq.s32.totalorder %v1460, 1
      %vm1466 = vcmp.eq.s32.totalorder %v1464, 1
      %1467 = vrot.lane.b32.xlu0 %v675, 93
      %v1468 = vpop.permute.xlu0 %1467
      %1469 = vrot.lane.b32.xlu0 %v671, 93
      %v1470 = vpop.permute.xlu0 %1469
      %1471 = vrot.lane.b32.xlu0 %v676, 93
      %v1472 = vpop.permute.xlu0 %1471
      %vm1473 = vcmask 760832
      %v1474 = vsel %vm1473, %v1468, %v1470
      %v1475 = vsel %vm1473, %v1470, %v1472
      %v1478 = vsel %vm1465, %v1474, 0.0
      %v1479 = vsel %vm1466, %v1475, 0.0
      %s1480 = sld [smem:[#allocation8 + $0x11]]
      %s1481 = sld [smem:[#allocation8 + $0x42]]
      %v1482 = vstv %s1480
      %v1483 = vmul.f32 %v1482, %v1478
      %v1484 = vmul.f32 %v1482, %v1479
      %v1485 = vadd.f32 %v1453, %v1483
      %v1486 = vadd.f32 %v1454, %v1484
      %v1487 = vstv %s1481
      %v1488 = vmul.f32 %v1487, %v1478
      %v1489 = vmul.f32 %v1487, %v1479
      %v1492 = vrot.slane %v1488, 1
      %v1493 = vrot.slane %v1489, 1
      %v1496 = vadd.f32 %v1485, %v1492
      %v1497 = vadd.f32 %v1486, %v1493
      %vm1498 = vmand %vm690, %vm724
      %v1499 = vsel %vm1498, 1, 0
      %v1500 = vlaneseq
      %v1501 = vshrl.u32 %v1500, 7
      %v1502 = vsub.s32 0, %v1501
      %v1503 = vrot.slane %v1499, %v1502
      %v1504 = vlaneseq
      %v1505 = vshrl.u32 %v1504, 7
      %v1506 = vsub.s32 1, %v1505
      %v1507 = vrot.slane %v1499, %v1506
      %vm1508 = vcmp.eq.s32.totalorder %v1503, 1
      %vm1509 = vcmp.eq.s32.totalorder %v1507, 1
      %1510 = vrot.lane.b32.xlu0 %v675, 92
      %v1511 = vpop.permute.xlu0 %1510
      %1512 = vrot.lane.b32.xlu0 %v671, 92
      %v1513 = vpop.permute.xlu0 %1512
      %1514 = vrot.lane.b32.xlu0 %v676, 92
      %v1515 = vpop.permute.xlu0 %1514
      %vm1516 = vcmask 752640
      %v1517 = vsel %vm1516, %v1511, %v1513
      %v1518 = vsel %vm1516, %v1513, %v1515
      %v1521 = vsel %vm1508, %v1517, 0.0
      %v1522 = vsel %vm1509, %v1518, 0.0
      %s1523 = sld [smem:[#allocation8 + $0x12]]
      %s1524 = sld [smem:[#allocation8 + $0x43]]
      %v1525 = vstv %s1523
      %v1526 = vmul.f32 %v1525, %v1521
      %v1527 = vmul.f32 %v1525, %v1522
      %v1528 = vadd.f32 %v1496, %v1526
      %v1529 = vadd.f32 %v1497, %v1527
      %v1530 = vstv %s1524
      %v1531 = vmul.f32 %v1530, %v1521
      %v1532 = vmul.f32 %v1530, %v1522
      %v1535 = vrot.slane %v1531, 1
      %v1536 = vrot.slane %v1532, 1
      %v1539 = vadd.f32 %v1528, %v1535
      %v1540 = vadd.f32 %v1529, %v1536
      %vm1541 = vmand %vm690, %vm728
      %v1542 = vsel %vm1541, 1, 0
      %v1543 = vlaneseq
      %v1544 = vshrl.u32 %v1543, 7
      %v1545 = vsub.s32 0, %v1544
      %v1546 = vrot.slane %v1542, %v1545
      %v1547 = vlaneseq
      %v1548 = vshrl.u32 %v1547, 7
      %v1549 = vsub.s32 1, %v1548
      %v1550 = vrot.slane %v1542, %v1549
      %vm1551 = vcmp.eq.s32.totalorder %v1546, 1
      %vm1552 = vcmp.eq.s32.totalorder %v1550, 1
      %1553 = vrot.lane.b32.xlu0 %v675, 91
      %v1554 = vpop.permute.xlu0 %1553
      %1555 = vrot.lane.b32.xlu0 %v671, 91
      %v1556 = vpop.permute.xlu0 %1555
      %1557 = vrot.lane.b32.xlu0 %v676, 91
      %v1558 = vpop.permute.xlu0 %1557
      %vm1559 = vcmask 744448
      %v1560 = vsel %vm1559, %v1554, %v1556
      %v1561 = vsel %vm1559, %v1556, %v1558
      %v1564 = vsel %vm1551, %v1560, 0.0
      %v1565 = vsel %vm1552, %v1561, 0.0
      %s1566 = sld [smem:[#allocation8 + $0x13]]
      %s1567 = sld [smem:[#allocation8 + $0x44]]
      %v1568 = vstv %s1566
      %v1569 = vmul.f32 %v1568, %v1564
      %v1570 = vmul.f32 %v1568, %v1565
      %v1571 = vadd.f32 %v1539, %v1569
      %v1572 = vadd.f32 %v1540, %v1570
      %v1573 = vstv %s1567
      %v1574 = vmul.f32 %v1573, %v1564
      %v1575 = vmul.f32 %v1573, %v1565
      %v1578 = vrot.slane %v1574, 1
      %v1579 = vrot.slane %v1575, 1
      %v1582 = vadd.f32 %v1571, %v1578
      %v1583 = vadd.f32 %v1572, %v1579
      %vm1584 = vmand %vm690, %vm732
      %v1585 = vsel %vm1584, 1, 0
      %v1586 = vlaneseq
      %v1587 = vshrl.u32 %v1586, 7
      %v1588 = vsub.s32 0, %v1587
      %v1589 = vrot.slane %v1585, %v1588
      %v1590 = vlaneseq
      %v1591 = vshrl.u32 %v1590, 7
      %v1592 = vsub.s32 1, %v1591
      %v1593 = vrot.slane %v1585, %v1592
      %vm1594 = vcmp.eq.s32.totalorder %v1589, 1
      %vm1595 = vcmp.eq.s32.totalorder %v1593, 1
      %1596 = vrot.lane.b32.xlu0 %v675, 90
      %v1597 = vpop.permute.xlu0 %1596
      %1598 = vrot.lane.b32.xlu0 %v671, 90
      %v1599 = vpop.permute.xlu0 %1598
      %1600 = vrot.lane.b32.xlu0 %v676, 90
      %v1601 = vpop.permute.xlu0 %1600
      %vm1602 = vcmask 736256
      %v1603 = vsel %vm1602, %v1597, %v1599
      %v1604 = vsel %vm1602, %v1599, %v1601
      %v1607 = vsel %vm1594, %v1603, 0.0
      %v1608 = vsel %vm1595, %v1604, 0.0
      %s1609 = sld [smem:[#allocation8 + $0x14]]
      %s1610 = sld [smem:[#allocation8 + $0x45]]
      %v1611 = vstv %s1609
      %v1612 = vmul.f32 %v1611, %v1607
      %v1613 = vmul.f32 %v1611, %v1608
      %v1614 = vadd.f32 %v1582, %v1612
      %v1615 = vadd.f32 %v1583, %v1613
      %v1616 = vstv %s1610
      %v1617 = vmul.f32 %v1616, %v1607
      %v1618 = vmul.f32 %v1616, %v1608
      %v1621 = vrot.slane %v1617, 1
      %v1622 = vrot.slane %v1618, 1
      %v1625 = vadd.f32 %v1614, %v1621
      %v1626 = vadd.f32 %v1615, %v1622
      %vm1627 = vmand %vm693, %vm709
      %v1628 = vsel %vm1627, 1, 0
      %v1629 = vlaneseq
      %v1630 = vshrl.u32 %v1629, 7
      %v1631 = vsub.s32 0, %v1630
      %v1632 = vrot.slane %v1628, %v1631
      %v1633 = vlaneseq
      %v1634 = vshrl.u32 %v1633, 7
      %v1635 = vsub.s32 1, %v1634
      %v1636 = vrot.slane %v1628, %v1635
      %vm1637 = vcmp.eq.s32.totalorder %v1632, 1
      %vm1638 = vcmp.eq.s32.totalorder %v1636, 1
      %1639 = vrot.lane.b32.xlu0 %v675, 80
      %v1640 = vpop.permute.xlu0 %1639
      %1641 = vrot.lane.b32.xlu0 %v671, 80
      %v1642 = vpop.permute.xlu0 %1641
      %1643 = vrot.lane.b32.xlu0 %v676, 80
      %v1644 = vpop.permute.xlu0 %1643
      %vm1645 = vcmask 654336
      %v1646 = vsel %vm1645, %v1640, %v1642
      %v1647 = vsel %vm1645, %v1642, %v1644
      %v1650 = vsel %vm1637, %v1646, 0.0
      %v1651 = vsel %vm1638, %v1647, 0.0
      %s1652 = sld [smem:[#allocation8 + $0x15]]
      %s1653 = sld [smem:[#allocation8 + $0x46]]
      %v1654 = vstv %s1652
      %v1655 = vmul.f32 %v1654, %v1650
      %v1656 = vmul.f32 %v1654, %v1651
      %v1657 = vadd.f32 %v1625, %v1655
      %v1658 = vadd.f32 %v1626, %v1656
      %v1659 = vstv %s1653
      %v1660 = vmul.f32 %v1659, %v1650
      %v1661 = vmul.f32 %v1659, %v1651
      %v1664 = vrot.slane %v1660, 1
      %v1665 = vrot.slane %v1661, 1
      %v1668 = vadd.f32 %v1657, %v1664
      %v1669 = vadd.f32 %v1658, %v1665
      %vm1670 = vmand %vm693, %vm713
      %v1671 = vsel %vm1670, 1, 0
      %v1672 = vlaneseq
      %v1673 = vshrl.u32 %v1672, 7
      %v1674 = vsub.s32 0, %v1673
      %v1675 = vrot.slane %v1671, %v1674
      %v1676 = vlaneseq
      %v1677 = vshrl.u32 %v1676, 7
      %v1678 = vsub.s32 1, %v1677
      %v1679 = vrot.slane %v1671, %v1678
      %vm1680 = vcmp.eq.s32.totalorder %v1675, 1
      %vm1681 = vcmp.eq.s32.totalorder %v1679, 1
      %1682 = vrot.lane.b32.xlu0 %v675, 79
      %v1683 = vpop.permute.xlu0 %1682
      %1684 = vrot.lane.b32.xlu0 %v671, 79
      %v1685 = vpop.permute.xlu0 %1684
      %1686 = vrot.lane.b32.xlu0 %v676, 79
      %v1687 = vpop.permute.xlu0 %1686
      %vm1688 = vcmask 646144
      %v1689 = vsel %vm1688, %v1683, %v1685
      %v1690 = vsel %vm1688, %v1685, %v1687
      %v1693 = vsel %vm1680, %v1689, 0.0
      %v1694 = vsel %vm1681, %v1690, 0.0
      %s1695 = sld [smem:[#allocation8 + $0x16]]
      %s1696 = sld [smem:[#allocation8 + $0x47]]
      %v1697 = vstv %s1695
      %v1698 = vmul.f32 %v1697, %v1693
      %v1699 = vmul.f32 %v1697, %v1694
      %v1700 = vadd.f32 %v1668, %v1698
      %v1701 = vadd.f32 %v1669, %v1699
      %v1702 = vstv %s1696
      %v1703 = vmul.f32 %v1702, %v1693
      %v1704 = vmul.f32 %v1702, %v1694
      %v1707 = vrot.slane %v1703, 1
      %v1708 = vrot.slane %v1704, 1
      %v1711 = vadd.f32 %v1700, %v1707
      %v1712 = vadd.f32 %v1701, %v1708
      %vm1713 = vmand %vm693, %vm717
      %v1714 = vsel %vm1713, 1, 0
      %v1715 = vlaneseq
      %v1716 = vshrl.u32 %v1715, 7
      %v1717 = vsub.s32 0, %v1716
      %v1718 = vrot.slane %v1714, %v1717
      %v1719 = vlaneseq
      %v1720 = vshrl.u32 %v1719, 7
      %v1721 = vsub.s32 1, %v1720
      %v1722 = vrot.slane %v1714, %v1721
      %vm1723 = vcmp.eq.s32.totalorder %v1718, 1
      %vm1724 = vcmp.eq.s32.totalorder %v1722, 1
      %1725 = vrot.lane.b32.xlu0 %v675, 78
      %v1726 = vpop.permute.xlu0 %1725
      %1727 = vrot.lane.b32.xlu0 %v671, 78
      %v1728 = vpop.permute.xlu0 %1727
      %1729 = vrot.lane.b32.xlu0 %v676, 78
      %v1730 = vpop.permute.xlu0 %1729
      %vm1731 = vcmask 637952
      %v1732 = vsel %vm1731, %v1726, %v1728
      %v1733 = vsel %vm1731, %v1728, %v1730
      %v1736 = vsel %vm1723, %v1732, 0.0
      %v1737 = vsel %vm1724, %v1733, 0.0
      %s1738 = sld [smem:[#allocation8 + $0x17]]
      %s1739 = sld [smem:[#allocation8 + $0x48]]
      %v1740 = vstv %s1738
      %v1741 = vmul.f32 %v1740, %v1736
      %v1742 = vmul.f32 %v1740, %v1737
      %v1743 = vadd.f32 %v1711, %v1741
      %v1744 = vadd.f32 %v1712, %v1742
      %v1745 = vstv %s1739
      %v1746 = vmul.f32 %v1745, %v1736
      %v1747 = vmul.f32 %v1745, %v1737
      %v1750 = vrot.slane %v1746, 1
      %v1751 = vrot.slane %v1747, 1
      %v1754 = vadd.f32 %v1743, %v1750
      %v1755 = vadd.f32 %v1744, %v1751
      %vm1756 = vmand %vm693, %vm720
      %v1757 = vsel %vm1756, 1, 0
      %v1758 = vlaneseq
      %v1759 = vshrl.u32 %v1758, 7
      %v1760 = vsub.s32 0, %v1759
      %v1761 = vrot.slane %v1757, %v1760
      %v1762 = vlaneseq
      %v1763 = vshrl.u32 %v1762, 7
      %v1764 = vsub.s32 1, %v1763
      %v1765 = vrot.slane %v1757, %v1764
      %vm1766 = vcmp.eq.s32.totalorder %v1761, 1
      %vm1767 = vcmp.eq.s32.totalorder %v1765, 1
      %1768 = vrot.lane.b32.xlu0 %v675, 77
      %v1769 = vpop.permute.xlu0 %1768
      %1770 = vrot.lane.b32.xlu0 %v671, 77
      %v1771 = vpop.permute.xlu0 %1770
      %1772 = vrot.lane.b32.xlu0 %v676, 77
      %v1773 = vpop.permute.xlu0 %1772
      %vm1774 = vcmask 629760
      %v1775 = vsel %vm1774, %v1769, %v1771
      %v1776 = vsel %vm1774, %v1771, %v1773
      %v1779 = vsel %vm1766, %v1775, 0.0
      %v1780 = vsel %vm1767, %v1776, 0.0
      %s1781 = sld [smem:[#allocation8 + $0x18]]
      %s1782 = sld [smem:[#allocation8 + $0x49]]
      %v1783 = vstv %s1781
      %v1784 = vmul.f32 %v1783, %v1779
      %v1785 = vmul.f32 %v1783, %v1780
      %v1786 = vadd.f32 %v1754, %v1784
      %v1787 = vadd.f32 %v1755, %v1785
      %v1788 = vstv %s1782
      %v1789 = vmul.f32 %v1788, %v1779
      %v1790 = vmul.f32 %v1788, %v1780
      %v1793 = vrot.slane %v1789, 1
      %v1794 = vrot.slane %v1790, 1
      %v1797 = vadd.f32 %v1786, %v1793
      %v1798 = vadd.f32 %v1787, %v1794
      %vm1799 = vmand %vm693, %vm724
      %v1800 = vsel %vm1799, 1, 0
      %v1801 = vlaneseq
      %v1802 = vshrl.u32 %v1801, 7
      %v1803 = vsub.s32 0, %v1802
      %v1804 = vrot.slane %v1800, %v1803
      %v1805 = vlaneseq
      %v1806 = vshrl.u32 %v1805, 7
      %v1807 = vsub.s32 1, %v1806
      %v1808 = vrot.slane %v1800, %v1807
      %vm1809 = vcmp.eq.s32.totalorder %v1804, 1
      %vm1810 = vcmp.eq.s32.totalorder %v1808, 1
      %1811 = vrot.lane.b32.xlu0 %v675, 76
      %v1812 = vpop.permute.xlu0 %1811
      %1813 = vrot.lane.b32.xlu0 %v671, 76
      %v1814 = vpop.permute.xlu0 %1813
      %1815 = vrot.lane.b32.xlu0 %v676, 76
      %v1816 = vpop.permute.xlu0 %1815
      %vm1817 = vcmask 621568
      %v1818 = vsel %vm1817, %v1812, %v1814
      %v1819 = vsel %vm1817, %v1814, %v1816
      %v1822 = vsel %vm1809, %v1818, 0.0
      %v1823 = vsel %vm1810, %v1819, 0.0
      %s1824 = sld [smem:[#allocation8 + $0x19]]
      %s1825 = sld [smem:[#allocation8 + $0x4a]]
      %v1826 = vstv %s1824
      %v1827 = vmul.f32 %v1826, %v1822
      %v1828 = vmul.f32 %v1826, %v1823
      %v1829 = vadd.f32 %v1797, %v1827
      %v1830 = vadd.f32 %v1798, %v1828
      %v1831 = vstv %s1825
      %v1832 = vmul.f32 %v1831, %v1822
      %v1833 = vmul.f32 %v1831, %v1823
      %v1836 = vrot.slane %v1832, 1
      %v1837 = vrot.slane %v1833, 1
      %v1840 = vadd.f32 %v1829, %v1836
      %v1841 = vadd.f32 %v1830, %v1837
      %vm1842 = vmand %vm693, %vm728
      %v1843 = vsel %vm1842, 1, 0
      %v1844 = vlaneseq
      %v1845 = vshrl.u32 %v1844, 7
      %v1846 = vsub.s32 0, %v1845
      %v1847 = vrot.slane %v1843, %v1846
      %v1848 = vlaneseq
      %v1849 = vshrl.u32 %v1848, 7
      %v1850 = vsub.s32 1, %v1849
      %v1851 = vrot.slane %v1843, %v1850
      %vm1852 = vcmp.eq.s32.totalorder %v1847, 1
      %vm1853 = vcmp.eq.s32.totalorder %v1851, 1
      %1854 = vrot.lane.b32.xlu0 %v675, 75
      %v1855 = vpop.permute.xlu0 %1854
      %1856 = vrot.lane.b32.xlu0 %v671, 75
      %v1857 = vpop.permute.xlu0 %1856
      %1858 = vrot.lane.b32.xlu0 %v676, 75
      %v1859 = vpop.permute.xlu0 %1858
      %vm1860 = vcmask 613376
      %v1861 = vsel %vm1860, %v1855, %v1857
      %v1862 = vsel %vm1860, %v1857, %v1859
      %v1865 = vsel %vm1852, %v1861, 0.0
      %v1866 = vsel %vm1853, %v1862, 0.0
      %s1867 = sld [smem:[#allocation8 + $0x1a]]
      %s1868 = sld [smem:[#allocation8 + $0x4b]]
      %v1869 = vstv %s1867
      %v1870 = vmul.f32 %v1869, %v1865
      %v1871 = vmul.f32 %v1869, %v1866
      %v1872 = vadd.f32 %v1840, %v1870
      %v1873 = vadd.f32 %v1841, %v1871
      %v1874 = vstv %s1868
      %v1875 = vmul.f32 %v1874, %v1865
      %v1876 = vmul.f32 %v1874, %v1866
      %v1879 = vrot.slane %v1875, 1
      %v1880 = vrot.slane %v1876, 1
      %v1883 = vadd.f32 %v1872, %v1879
      %v1884 = vadd.f32 %v1873, %v1880
      %vm1885 = vmand %vm693, %vm732
      %v1886 = vsel %vm1885, 1, 0
      %v1887 = vlaneseq
      %v1888 = vshrl.u32 %v1887, 7
      %v1889 = vsub.s32 0, %v1888
      %v1890 = vrot.slane %v1886, %v1889
      %v1891 = vlaneseq
      %v1892 = vshrl.u32 %v1891, 7
      %v1893 = vsub.s32 1, %v1892
      %v1894 = vrot.slane %v1886, %v1893
      %vm1895 = vcmp.eq.s32.totalorder %v1890, 1
      %vm1896 = vcmp.eq.s32.totalorder %v1894, 1
      %1897 = vrot.lane.b32.xlu0 %v675, 74
      %v1898 = vpop.permute.xlu0 %1897
      %1899 = vrot.lane.b32.xlu0 %v671, 74
      %v1900 = vpop.permute.xlu0 %1899
      %1901 = vrot.lane.b32.xlu0 %v676, 74
      %v1902 = vpop.permute.xlu0 %1901
      %vm1903 = vcmask 605184
      %v1904 = vsel %vm1903, %v1898, %v1900
      %v1905 = vsel %vm1903, %v1900, %v1902
      %v1908 = vsel %vm1895, %v1904, 0.0
      %v1909 = vsel %vm1896, %v1905, 0.0
      %s1910 = sld [smem:[#allocation8 + $0x1b]]
      %s1911 = sld [smem:[#allocation8 + $0x4c]]
      %v1912 = vstv %s1910
      %v1913 = vmul.f32 %v1912, %v1908
      %v1914 = vmul.f32 %v1912, %v1909
      %v1915 = vadd.f32 %v1883, %v1913
      %v1916 = vadd.f32 %v1884, %v1914
      %v1917 = vstv %s1911
      %v1918 = vmul.f32 %v1917, %v1908
      %v1919 = vmul.f32 %v1917, %v1909
      %v1922 = vrot.slane %v1918, 1
      %v1923 = vrot.slane %v1919, 1
      %v1926 = vadd.f32 %v1915, %v1922
      %v1927 = vadd.f32 %v1916, %v1923
      %vm1928 = vmand %vm697, %vm709
      %v1929 = vsel %vm1928, 1, 0
      %v1930 = vlaneseq
      %v1931 = vshrl.u32 %v1930, 7
      %v1932 = vsub.s32 0, %v1931
      %v1933 = vrot.slane %v1929, %v1932
      %v1934 = vlaneseq
      %v1935 = vshrl.u32 %v1934, 7
      %v1936 = vsub.s32 1, %v1935
      %v1937 = vrot.slane %v1929, %v1936
      %vm1938 = vcmp.eq.s32.totalorder %v1933, 1
      %vm1939 = vcmp.eq.s32.totalorder %v1937, 1
      %1940 = vrot.lane.b32.xlu0 %v675, 64
      %v1941 = vpop.permute.xlu0 %1940
      %1942 = vrot.lane.b32.xlu0 %v671, 64
      %v1943 = vpop.permute.xlu0 %1942
      %1944 = vrot.lane.b32.xlu0 %v676, 64
      %v1945 = vpop.permute.xlu0 %1944
      %vm1946 = vcmask 523264
      %v1947 = vsel %vm1946, %v1941, %v1943
      %v1948 = vsel %vm1946, %v1943, %v1945
      %v1951 = vsel %vm1938, %v1947, 0.0
      %v1952 = vsel %vm1939, %v1948, 0.0
      %s1953 = sld [smem:[#allocation8 + $0x1c]]
      %s1954 = sld [smem:[#allocation8 + $0x4d]]
      %v1955 = vstv %s1953
      %v1956 = vmul.f32 %v1955, %v1951
      %v1957 = vmul.f32 %v1955, %v1952
      %v1958 = vadd.f32 %v1926, %v1956
      %v1959 = vadd.f32 %v1927, %v1957
      %v1960 = vstv %s1954
      %v1961 = vmul.f32 %v1960, %v1951
      %v1962 = vmul.f32 %v1960, %v1952
      %v1965 = vrot.slane %v1961, 1
      %v1966 = vrot.slane %v1962, 1
      %v1969 = vadd.f32 %v1958, %v1965
      %v1970 = vadd.f32 %v1959, %v1966
      %vm1971 = vmand %vm697, %vm713
      %v1972 = vsel %vm1971, 1, 0
      %v1973 = vlaneseq
      %v1974 = vshrl.u32 %v1973, 7
      %v1975 = vsub.s32 0, %v1974
      %v1976 = vrot.slane %v1972, %v1975
      %v1977 = vlaneseq
      %v1978 = vshrl.u32 %v1977, 7
      %v1979 = vsub.s32 1, %v1978
      %v1980 = vrot.slane %v1972, %v1979
      %vm1981 = vcmp.eq.s32.totalorder %v1976, 1
      %vm1982 = vcmp.eq.s32.totalorder %v1980, 1
      %1983 = vrot.lane.b32.xlu0 %v675, 63
      %v1984 = vpop.permute.xlu0 %1983
      %1985 = vrot.lane.b32.xlu0 %v671, 63
      %v1986 = vpop.permute.xlu0 %1985
      %1987 = vrot.lane.b32.xlu0 %v676, 63
      %v1988 = vpop.permute.xlu0 %1987
      %vm1989 = vcmask 515072
      %v1990 = vsel %vm1989, %v1984, %v1986
      %v1991 = vsel %vm1989, %v1986, %v1988
      %v1994 = vsel %vm1981, %v1990, 0.0
      %v1995 = vsel %vm1982, %v1991, 0.0
      %s1996 = sld [smem:[#allocation8 + $0x1d]]
      %s1997 = sld [smem:[#allocation8 + $0x4e]]
      %v1998 = vstv %s1996
      %v1999 = vmul.f32 %v1998, %v1994
      %v2000 = vmul.f32 %v1998, %v1995
      %v2001 = vadd.f32 %v1969, %v1999
      %v2002 = vadd.f32 %v1970, %v2000
      %v2003 = vstv %s1997
      %v2004 = vmul.f32 %v2003, %v1994
      %v2005 = vmul.f32 %v2003, %v1995
      %v2008 = vrot.slane %v2004, 1
      %v2009 = vrot.slane %v2005, 1
      %v2012 = vadd.f32 %v2001, %v2008
      %v2013 = vadd.f32 %v2002, %v2009
      %vm2014 = vmand %vm697, %vm717
      %v2015 = vsel %vm2014, 1, 0
      %v2016 = vlaneseq
      %v2017 = vshrl.u32 %v2016, 7
      %v2018 = vsub.s32 0, %v2017
      %v2019 = vrot.slane %v2015, %v2018
      %v2020 = vlaneseq
      %v2021 = vshrl.u32 %v2020, 7
      %v2022 = vsub.s32 1, %v2021
      %v2023 = vrot.slane %v2015, %v2022
      %vm2024 = vcmp.eq.s32.totalorder %v2019, 1
      %vm2025 = vcmp.eq.s32.totalorder %v2023, 1
      %2026 = vrot.lane.b32.xlu0 %v675, 62
      %v2027 = vpop.permute.xlu0 %2026
      %2028 = vrot.lane.b32.xlu0 %v671, 62
      %v2029 = vpop.permute.xlu0 %2028
      %2030 = vrot.lane.b32.xlu0 %v676, 62
      %v2031 = vpop.permute.xlu0 %2030
      %vm2032 = vcmask 506880
      %v2033 = vsel %vm2032, %v2027, %v2029
      %v2034 = vsel %vm2032, %v2029, %v2031
      %v2037 = vsel %vm2024, %v2033, 0.0
      %v2038 = vsel %vm2025, %v2034, 0.0
      %s2039 = sld [smem:[#allocation8 + $0x1e]]
      %s2040 = sld [smem:[#allocation8 + $0x4f]]
      %v2041 = vstv %s2039
      %v2042 = vmul.f32 %v2041, %v2037
      %v2043 = vmul.f32 %v2041, %v2038
      %v2044 = vadd.f32 %v2012, %v2042
      %v2045 = vadd.f32 %v2013, %v2043
      %v2046 = vstv %s2040
      %v2047 = vmul.f32 %v2046, %v2037
      %v2048 = vmul.f32 %v2046, %v2038
      %v2051 = vrot.slane %v2047, 1
      %v2052 = vrot.slane %v2048, 1
      %v2055 = vadd.f32 %v2044, %v2051
      %v2056 = vadd.f32 %v2045, %v2052
      %vm2057 = vmand %vm697, %vm720
      %v2058 = vsel %vm2057, 1, 0
      %v2059 = vlaneseq
      %v2060 = vshrl.u32 %v2059, 7
      %v2061 = vsub.s32 0, %v2060
      %v2062 = vrot.slane %v2058, %v2061
      %v2063 = vlaneseq
      %v2064 = vshrl.u32 %v2063, 7
      %v2065 = vsub.s32 1, %v2064
      %v2066 = vrot.slane %v2058, %v2065
      %vm2067 = vcmp.eq.s32.totalorder %v2062, 1
      %vm2068 = vcmp.eq.s32.totalorder %v2066, 1
      %2069 = vrot.lane.b32.xlu0 %v675, 61
      %v2070 = vpop.permute.xlu0 %2069
      %2071 = vrot.lane.b32.xlu0 %v671, 61
      %v2072 = vpop.permute.xlu0 %2071
      %2073 = vrot.lane.b32.xlu0 %v676, 61
      %v2074 = vpop.permute.xlu0 %2073
      %vm2075 = vcmask 498688
      %v2076 = vsel %vm2075, %v2070, %v2072
      %v2077 = vsel %vm2075, %v2072, %v2074
      %v2080 = vsel %vm2067, %v2076, 0.0
      %v2081 = vsel %vm2068, %v2077, 0.0
      %s2082 = sld [smem:[#allocation8 + $0x1f]]
      %s2083 = sld [smem:[#allocation8 + $0x50]]
      %v2084 = vstv %s2082
      %v2085 = vmul.f32 %v2084, %v2080
      %v2086 = vmul.f32 %v2084, %v2081
      %v2087 = vadd.f32 %v2055, %v2085
      %v2088 = vadd.f32 %v2056, %v2086
      %v2089 = vstv %s2083
      %v2090 = vmul.f32 %v2089, %v2080
      %v2091 = vmul.f32 %v2089, %v2081
      %v2094 = vrot.slane %v2090, 1
      %v2095 = vrot.slane %v2091, 1
      %v2098 = vadd.f32 %v2087, %v2094
      %v2099 = vadd.f32 %v2088, %v2095
      %vm2100 = vmand %vm697, %vm724
      %v2101 = vsel %vm2100, 1, 0
      %v2102 = vlaneseq
      %v2103 = vshrl.u32 %v2102, 7
      %v2104 = vsub.s32 0, %v2103
      %v2105 = vrot.slane %v2101, %v2104
      %v2106 = vlaneseq
      %v2107 = vshrl.u32 %v2106, 7
      %v2108 = vsub.s32 1, %v2107
      %v2109 = vrot.slane %v2101, %v2108
      %vm2110 = vcmp.eq.s32.totalorder %v2105, 1
      %vm2111 = vcmp.eq.s32.totalorder %v2109, 1
      %2112 = vrot.lane.b32.xlu0 %v675, 60
      %v2113 = vpop.permute.xlu0 %2112
      %2114 = vrot.lane.b32.xlu0 %v671, 60
      %v2115 = vpop.permute.xlu0 %2114
      %2116 = vrot.lane.b32.xlu0 %v676, 60
      %v2117 = vpop.permute.xlu0 %2116
      %vm2118 = vcmask 490496
      %v2119 = vsel %vm2118, %v2113, %v2115
      %v2120 = vsel %vm2118, %v2115, %v2117
      %v2123 = vsel %vm2110, %v2119, 0.0
      %v2124 = vsel %vm2111, %v2120, 0.0
      %s2125 = sld [smem:[#allocation8 + $0x20]]
      %s2126 = sld [smem:[#allocation8 + $0x51]]
      %v2127 = vstv %s2125
      %v2128 = vmul.f32 %v2127, %v2123
      %v2129 = vmul.f32 %v2127, %v2124
      %v2130 = vadd.f32 %v2098, %v2128
      %v2131 = vadd.f32 %v2099, %v2129
      %v2132 = vstv %s2126
      %v2133 = vmul.f32 %v2132, %v2123
      %v2134 = vmul.f32 %v2132, %v2124
      %v2137 = vrot.slane %v2133, 1
      %v2138 = vrot.slane %v2134, 1
      %v2141 = vadd.f32 %v2130, %v2137
      %v2142 = vadd.f32 %v2131, %v2138
      %vm2143 = vmand %vm697, %vm728
      %v2144 = vsel %vm2143, 1, 0
      %v2145 = vlaneseq
      %v2146 = vshrl.u32 %v2145, 7
      %v2147 = vsub.s32 0, %v2146
      %v2148 = vrot.slane %v2144, %v2147
      %v2149 = vlaneseq
      %v2150 = vshrl.u32 %v2149, 7
      %v2151 = vsub.s32 1, %v2150
      %v2152 = vrot.slane %v2144, %v2151
      %vm2153 = vcmp.eq.s32.totalorder %v2148, 1
      %vm2154 = vcmp.eq.s32.totalorder %v2152, 1
      %2155 = vrot.lane.b32.xlu0 %v675, 59
      %v2156 = vpop.permute.xlu0 %2155
      %2157 = vrot.lane.b32.xlu0 %v671, 59
      %v2158 = vpop.permute.xlu0 %2157
      %2159 = vrot.lane.b32.xlu0 %v676, 59
      %v2160 = vpop.permute.xlu0 %2159
      %vm2161 = vcmask 482304
      %v2162 = vsel %vm2161, %v2156, %v2158
      %v2163 = vsel %vm2161, %v2158, %v2160
      %v2166 = vsel %vm2153, %v2162, 0.0
      %v2167 = vsel %vm2154, %v2163, 0.0
      %s2168 = sld [smem:[#allocation8 + $0x21]]
      %s2169 = sld [smem:[#allocation8 + $0x52]]
      %v2170 = vstv %s2168
      %v2171 = vmul.f32 %v2170, %v2166
      %v2172 = vmul.f32 %v2170, %v2167
      %v2173 = vadd.f32 %v2141, %v2171
      %v2174 = vadd.f32 %v2142, %v2172
      %v2175 = vstv %s2169
      %v2176 = vmul.f32 %v2175, %v2166
      %v2177 = vmul.f32 %v2175, %v2167
      %v2180 = vrot.slane %v2176, 1
      %v2181 = vrot.slane %v2177, 1
      %v2184 = vadd.f32 %v2173, %v2180
      %v2185 = vadd.f32 %v2174, %v2181
      %vm2186 = vmand %vm697, %vm732
      %v2187 = vsel %vm2186, 1, 0
      %v2188 = vlaneseq
      %v2189 = vshrl.u32 %v2188, 7
      %v2190 = vsub.s32 0, %v2189
      %v2191 = vrot.slane %v2187, %v2190
      %v2192 = vlaneseq
      %v2193 = vshrl.u32 %v2192, 7
      %v2194 = vsub.s32 1, %v2193
      %v2195 = vrot.slane %v2187, %v2194
      %vm2196 = vcmp.eq.s32.totalorder %v2191, 1
      %vm2197 = vcmp.eq.s32.totalorder %v2195, 1
      %2198 = vrot.lane.b32.xlu0 %v675, 58
      %v2199 = vpop.permute.xlu0 %2198
      %2200 = vrot.lane.b32.xlu0 %v671, 58
      %v2201 = vpop.permute.xlu0 %2200
      %2202 = vrot.lane.b32.xlu0 %v676, 58
      %v2203 = vpop.permute.xlu0 %2202
      %vm2204 = vcmask 474112
      %v2205 = vsel %vm2204, %v2199, %v2201
      %v2206 = vsel %vm2204, %v2201, %v2203
      %v2209 = vsel %vm2196, %v2205, 0.0
      %v2210 = vsel %vm2197, %v2206, 0.0
      %s2211 = sld [smem:[#allocation8 + $0x22]]
      %s2212 = sld [smem:[#allocation8 + $0x53]]
      %v2213 = vstv %s2211
      %v2214 = vmul.f32 %v2213, %v2209
      %v2215 = vmul.f32 %v2213, %v2210
      %v2216 = vadd.f32 %v2184, %v2214
      %v2217 = vadd.f32 %v2185, %v2215
      %v2218 = vstv %s2212
      %v2219 = vmul.f32 %v2218, %v2209
      %v2220 = vmul.f32 %v2218, %v2210
      %v2223 = vrot.slane %v2219, 1
      %v2224 = vrot.slane %v2220, 1
      %v2227 = vadd.f32 %v2216, %v2223
      %v2228 = vadd.f32 %v2217, %v2224
      %vm2229 = vmand %vm701, %vm709
      %v2230 = vsel %vm2229, 1, 0
      %v2231 = vlaneseq
      %v2232 = vshrl.u32 %v2231, 7
      %v2233 = vsub.s32 0, %v2232
      %v2234 = vrot.slane %v2230, %v2233
      %v2235 = vlaneseq
      %v2236 = vshrl.u32 %v2235, 7
      %v2237 = vsub.s32 1, %v2236
      %v2238 = vrot.slane %v2230, %v2237
      %vm2239 = vcmp.eq.s32.totalorder %v2234, 1
      %vm2240 = vcmp.eq.s32.totalorder %v2238, 1
      %2241 = vrot.lane.b32.xlu0 %v675, 48
      %v2242 = vpop.permute.xlu0 %2241
      %2243 = vrot.lane.b32.xlu0 %v671, 48
      %v2244 = vpop.permute.xlu0 %2243
      %2245 = vrot.lane.b32.xlu0 %v676, 48
      %v2246 = vpop.permute.xlu0 %2245
      %vm2247 = vcmask 392192
      %v2248 = vsel %vm2247, %v2242, %v2244
      %v2249 = vsel %vm2247, %v2244, %v2246
      %v2252 = vsel %vm2239, %v2248, 0.0
      %v2253 = vsel %vm2240, %v2249, 0.0
      %s2254 = sld [smem:[#allocation8 + $0x23]]
      %s2255 = sld [smem:[#allocation8 + $0x54]]
      %v2256 = vstv %s2254
      %v2257 = vmul.f32 %v2256, %v2252
      %v2258 = vmul.f32 %v2256, %v2253
      %v2259 = vadd.f32 %v2227, %v2257
      %v2260 = vadd.f32 %v2228, %v2258
      %v2261 = vstv %s2255
      %v2262 = vmul.f32 %v2261, %v2252
      %v2263 = vmul.f32 %v2261, %v2253
      %v2266 = vrot.slane %v2262, 1
      %v2267 = vrot.slane %v2263, 1
      %v2270 = vadd.f32 %v2259, %v2266
      %v2271 = vadd.f32 %v2260, %v2267
      %vm2272 = vmand %vm701, %vm713
      %v2273 = vsel %vm2272, 1, 0
      %v2274 = vlaneseq
      %v2275 = vshrl.u32 %v2274, 7
      %v2276 = vsub.s32 0, %v2275
      %v2277 = vrot.slane %v2273, %v2276
      %v2278 = vlaneseq
      %v2279 = vshrl.u32 %v2278, 7
      %v2280 = vsub.s32 1, %v2279
      %v2281 = vrot.slane %v2273, %v2280
      %vm2282 = vcmp.eq.s32.totalorder %v2277, 1
      %vm2283 = vcmp.eq.s32.totalorder %v2281, 1
      %2284 = vrot.lane.b32.xlu0 %v675, 47
      %v2285 = vpop.permute.xlu0 %2284
      %2286 = vrot.lane.b32.xlu0 %v671, 47
      %v2287 = vpop.permute.xlu0 %2286
      %2288 = vrot.lane.b32.xlu0 %v676, 47
      %v2289 = vpop.permute.xlu0 %2288
      %vm2290 = vcmask 384000
      %v2291 = vsel %vm2290, %v2285, %v2287
      %v2292 = vsel %vm2290, %v2287, %v2289
      %v2295 = vsel %vm2282, %v2291, 0.0
      %v2296 = vsel %vm2283, %v2292, 0.0
      %s2297 = sld [smem:[#allocation8 + $0x24]]
      %s2298 = sld [smem:[#allocation8 + $0x55]]
      %v2299 = vstv %s2297
      %v2300 = vmul.f32 %v2299, %v2295
      %v2301 = vmul.f32 %v2299, %v2296
      %v2302 = vadd.f32 %v2270, %v2300
      %v2303 = vadd.f32 %v2271, %v2301
      %v2304 = vstv %s2298
      %v2305 = vmul.f32 %v2304, %v2295
      %v2306 = vmul.f32 %v2304, %v2296
      %v2309 = vrot.slane %v2305, 1
      %v2310 = vrot.slane %v2306, 1
      %v2313 = vadd.f32 %v2302, %v2309
      %v2314 = vadd.f32 %v2303, %v2310
      %vm2315 = vmand %vm701, %vm717
      %v2316 = vsel %vm2315, 1, 0
      %v2317 = vlaneseq
      %v2318 = vshrl.u32 %v2317, 7
      %v2319 = vsub.s32 0, %v2318
      %v2320 = vrot.slane %v2316, %v2319
      %v2321 = vlaneseq
      %v2322 = vshrl.u32 %v2321, 7
      %v2323 = vsub.s32 1, %v2322
      %v2324 = vrot.slane %v2316, %v2323
      %vm2325 = vcmp.eq.s32.totalorder %v2320, 1
      %vm2326 = vcmp.eq.s32.totalorder %v2324, 1
      %2327 = vrot.lane.b32.xlu0 %v675, 46
      %v2328 = vpop.permute.xlu0 %2327
      %2329 = vrot.lane.b32.xlu0 %v671, 46
      %v2330 = vpop.permute.xlu0 %2329
      %2331 = vrot.lane.b32.xlu0 %v676, 46
      %v2332 = vpop.permute.xlu0 %2331
      %vm2333 = vcmask 375808
      %v2334 = vsel %vm2333, %v2328, %v2330
      %v2335 = vsel %vm2333, %v2330, %v2332
      %v2338 = vsel %vm2325, %v2334, 0.0
      %v2339 = vsel %vm2326, %v2335, 0.0
      %s2340 = sld [smem:[#allocation8 + $0x25]]
      %s2341 = sld [smem:[#allocation8 + $0x56]]
      %v2342 = vstv %s2340
      %v2343 = vmul.f32 %v2342, %v2338
      %v2344 = vmul.f32 %v2342, %v2339
      %v2345 = vadd.f32 %v2313, %v2343
      %v2346 = vadd.f32 %v2314, %v2344
      %v2347 = vstv %s2341
      %v2348 = vmul.f32 %v2347, %v2338
      %v2349 = vmul.f32 %v2347, %v2339
      %v2352 = vrot.slane %v2348, 1
      %v2353 = vrot.slane %v2349, 1
      %v2356 = vadd.f32 %v2345, %v2352
      %v2357 = vadd.f32 %v2346, %v2353
      %vm2358 = vmand %vm701, %vm720
      %v2359 = vsel %vm2358, 1, 0
      %v2360 = vlaneseq
      %v2361 = vshrl.u32 %v2360, 7
      %v2362 = vsub.s32 0, %v2361
      %v2363 = vrot.slane %v2359, %v2362
      %v2364 = vlaneseq
      %v2365 = vshrl.u32 %v2364, 7
      %v2366 = vsub.s32 1, %v2365
      %v2367 = vrot.slane %v2359, %v2366
      %vm2368 = vcmp.eq.s32.totalorder %v2363, 1
      %vm2369 = vcmp.eq.s32.totalorder %v2367, 1
      %2370 = vrot.lane.b32.xlu0 %v675, 45
      %v2371 = vpop.permute.xlu0 %2370
      %2372 = vrot.lane.b32.xlu0 %v671, 45
      %v2373 = vpop.permute.xlu0 %2372
      %2374 = vrot.lane.b32.xlu0 %v676, 45
      %v2375 = vpop.permute.xlu0 %2374
      %vm2376 = vcmask 367616
      %v2377 = vsel %vm2376, %v2371, %v2373
      %v2378 = vsel %vm2376, %v2373, %v2375
      %v2381 = vsel %vm2368, %v2377, 0.0
      %v2382 = vsel %vm2369, %v2378, 0.0
      %s2383 = sld [smem:[#allocation8 + $0x26]]
      %s2384 = sld [smem:[#allocation8 + $0x57]]
      %v2385 = vstv %s2383
      %v2386 = vmul.f32 %v2385, %v2381
      %v2387 = vmul.f32 %v2385, %v2382
      %v2388 = vadd.f32 %v2356, %v2386
      %v2389 = vadd.f32 %v2357, %v2387
      %v2390 = vstv %s2384
      %v2391 = vmul.f32 %v2390, %v2381
      %v2392 = vmul.f32 %v2390, %v2382
      %v2395 = vrot.slane %v2391, 1
      %v2396 = vrot.slane %v2392, 1
      %v2399 = vadd.f32 %v2388, %v2395
      %v2400 = vadd.f32 %v2389, %v2396
      %vm2401 = vmand %vm701, %vm724
      %v2402 = vsel %vm2401, 1, 0
      %v2403 = vlaneseq
      %v2404 = vshrl.u32 %v2403, 7
      %v2405 = vsub.s32 0, %v2404
      %v2406 = vrot.slane %v2402, %v2405
      %v2407 = vlaneseq
      %v2408 = vshrl.u32 %v2407, 7
      %v2409 = vsub.s32 1, %v2408
      %v2410 = vrot.slane %v2402, %v2409
      %vm2411 = vcmp.eq.s32.totalorder %v2406, 1
      %vm2412 = vcmp.eq.s32.totalorder %v2410, 1
      %2413 = vrot.lane.b32.xlu0 %v675, 44
      %v2414 = vpop.permute.xlu0 %2413
      %2415 = vrot.lane.b32.xlu0 %v671, 44
      %v2416 = vpop.permute.xlu0 %2415
      %2417 = vrot.lane.b32.xlu0 %v676, 44
      %v2418 = vpop.permute.xlu0 %2417
      %vm2419 = vcmask 359424
      %v2420 = vsel %vm2419, %v2414, %v2416
      %v2421 = vsel %vm2419, %v2416, %v2418
      %v2424 = vsel %vm2411, %v2420, 0.0
      %v2425 = vsel %vm2412, %v2421, 0.0
      %s2426 = sld [smem:[#allocation8 + $0x27]]
      %s2427 = sld [smem:[#allocation8 + $0x58]]
      %v2428 = vstv %s2426
      %v2429 = vmul.f32 %v2428, %v2424
      %v2430 = vmul.f32 %v2428, %v2425
      %v2431 = vadd.f32 %v2399, %v2429
      %v2432 = vadd.f32 %v2400, %v2430
      %v2433 = vstv %s2427
      %v2434 = vmul.f32 %v2433, %v2424
      %v2435 = vmul.f32 %v2433, %v2425
      %v2438 = vrot.slane %v2434, 1
      %v2439 = vrot.slane %v2435, 1
      %v2442 = vadd.f32 %v2431, %v2438
      %v2443 = vadd.f32 %v2432, %v2439
      %vm2444 = vmand %vm701, %vm728
      %v2445 = vsel %vm2444, 1, 0
      %v2446 = vlaneseq
      %v2447 = vshrl.u32 %v2446, 7
      %v2448 = vsub.s32 0, %v2447
      %v2449 = vrot.slane %v2445, %v2448
      %v2450 = vlaneseq
      %v2451 = vshrl.u32 %v2450, 7
      %v2452 = vsub.s32 1, %v2451
      %v2453 = vrot.slane %v2445, %v2452
      %vm2454 = vcmp.eq.s32.totalorder %v2449, 1
      %vm2455 = vcmp.eq.s32.totalorder %v2453, 1
      %2456 = vrot.lane.b32.xlu0 %v675, 43
      %v2457 = vpop.permute.xlu0 %2456
      %2458 = vrot.lane.b32.xlu0 %v671, 43
      %v2459 = vpop.permute.xlu0 %2458
      %2460 = vrot.lane.b32.xlu0 %v676, 43
      %v2461 = vpop.permute.xlu0 %2460
      %vm2462 = vcmask 351232
      %v2463 = vsel %vm2462, %v2457, %v2459
      %v2464 = vsel %vm2462, %v2459, %v2461
      %v2467 = vsel %vm2454, %v2463, 0.0
      %v2468 = vsel %vm2455, %v2464, 0.0
      %s2469 = sld [smem:[#allocation8 + $0x28]]
      %s2470 = sld [smem:[#allocation8 + $0x59]]
      %v2471 = vstv %s2469
      %v2472 = vmul.f32 %v2471, %v2467
      %v2473 = vmul.f32 %v2471, %v2468
      %v2474 = vadd.f32 %v2442, %v2472
      %v2475 = vadd.f32 %v2443, %v2473
      %v2476 = vstv %s2470
      %v2477 = vmul.f32 %v2476, %v2467
      %v2478 = vmul.f32 %v2476, %v2468
      %v2481 = vrot.slane %v2477, 1
      %v2482 = vrot.slane %v2478, 1
      %v2485 = vadd.f32 %v2474, %v2481
      %v2486 = vadd.f32 %v2475, %v2482
      %vm2487 = vmand %vm701, %vm732
      %v2488 = vsel %vm2487, 1, 0
      %v2489 = vlaneseq
      %v2490 = vshrl.u32 %v2489, 7
      %v2491 = vsub.s32 0, %v2490
      %v2492 = vrot.slane %v2488, %v2491
      %v2493 = vlaneseq
      %v2494 = vshrl.u32 %v2493, 7
      %v2495 = vsub.s32 1, %v2494
      %v2496 = vrot.slane %v2488, %v2495
      %vm2497 = vcmp.eq.s32.totalorder %v2492, 1
      %vm2498 = vcmp.eq.s32.totalorder %v2496, 1
      %2499 = vrot.lane.b32.xlu0 %v675, 42
      %v2500 = vpop.permute.xlu0 %2499
      %2501 = vrot.lane.b32.xlu0 %v671, 42
      %v2502 = vpop.permute.xlu0 %2501
      %2503 = vrot.lane.b32.xlu0 %v676, 42
      %v2504 = vpop.permute.xlu0 %2503
      %vm2505 = vcmask 343040
      %v2506 = vsel %vm2505, %v2500, %v2502
      %v2507 = vsel %vm2505, %v2502, %v2504
      %v2510 = vsel %vm2497, %v2506, 0.0
      %v2511 = vsel %vm2498, %v2507, 0.0
      %s2512 = sld [smem:[#allocation8 + $0x29]]
      %s2513 = sld [smem:[#allocation8 + $0x5a]]
      %v2514 = vstv %s2512
      %v2515 = vmul.f32 %v2514, %v2510
      %v2516 = vmul.f32 %v2514, %v2511
      %v2517 = vadd.f32 %v2485, %v2515
      %v2518 = vadd.f32 %v2486, %v2516
      %v2519 = vstv %s2513
      %v2520 = vmul.f32 %v2519, %v2510
      %v2521 = vmul.f32 %v2519, %v2511
      %v2524 = vrot.slane %v2520, 1
      %v2525 = vrot.slane %v2521, 1
      %v2528 = vadd.f32 %v2517, %v2524
      %v2529 = vadd.f32 %v2518, %v2525
      %vm2530 = vmand %vm705, %vm709
      %v2531 = vsel %vm2530, 1, 0
      %v2532 = vlaneseq
      %v2533 = vshrl.u32 %v2532, 7
      %v2534 = vsub.s32 0, %v2533
      %v2535 = vrot.slane %v2531, %v2534
      %v2536 = vlaneseq
      %v2537 = vshrl.u32 %v2536, 7
      %v2538 = vsub.s32 1, %v2537
      %v2539 = vrot.slane %v2531, %v2538
      %vm2540 = vcmp.eq.s32.totalorder %v2535, 1
      %vm2541 = vcmp.eq.s32.totalorder %v2539, 1
      %2542 = vrot.lane.b32.xlu0 %v675, 32
      %v2543 = vpop.permute.xlu0 %2542
      %2544 = vrot.lane.b32.xlu0 %v671, 32
      %v2545 = vpop.permute.xlu0 %2544
      %2546 = vrot.lane.b32.xlu0 %v676, 32
      %v2547 = vpop.permute.xlu0 %2546
      %v2548 = vsel %vm132, %v2543, %v2545
      %v2549 = vsel %vm132, %v2545, %v2547
      %v2552 = vsel %vm2540, %v2548, 0.0
      %v2553 = vsel %vm2541, %v2549, 0.0
      %s2554 = sld [smem:[#allocation8 + $0x2a]]
      %s2555 = sld [smem:[#allocation8 + $0x5b]]
      %v2556 = vstv %s2554
      %v2557 = vmul.f32 %v2556, %v2552
      %v2558 = vmul.f32 %v2556, %v2553
      %v2559 = vadd.f32 %v2528, %v2557
      %v2560 = vadd.f32 %v2529, %v2558
      %v2561 = vstv %s2555
      %v2562 = vmul.f32 %v2561, %v2552
      %v2563 = vmul.f32 %v2561, %v2553
      %v2566 = vrot.slane %v2562, 1
      %v2567 = vrot.slane %v2563, 1
      %v2570 = vadd.f32 %v2559, %v2566
      %v2571 = vadd.f32 %v2560, %v2567
      %vm2572 = vmand %vm705, %vm713
      %v2573 = vsel %vm2572, 1, 0
      %v2574 = vlaneseq
      %v2575 = vshrl.u32 %v2574, 7
      %v2576 = vsub.s32 0, %v2575
      %v2577 = vrot.slane %v2573, %v2576
      %v2578 = vlaneseq
      %v2579 = vshrl.u32 %v2578, 7
      %v2580 = vsub.s32 1, %v2579
      %v2581 = vrot.slane %v2573, %v2580
      %vm2582 = vcmp.eq.s32.totalorder %v2577, 1
      %vm2583 = vcmp.eq.s32.totalorder %v2581, 1
      %2584 = vrot.lane.b32.xlu0 %v675, 31
      %v2585 = vpop.permute.xlu0 %2584
      %2586 = vrot.lane.b32.xlu0 %v671, 31
      %v2587 = vpop.permute.xlu0 %2586
      %2588 = vrot.lane.b32.xlu0 %v676, 31
      %v2589 = vpop.permute.xlu0 %2588
      %vm2590 = vcmask 252928
      %v2591 = vsel %vm2590, %v2585, %v2587
      %v2592 = vsel %vm2590, %v2587, %v2589
      %v2595 = vsel %vm2582, %v2591, 0.0
      %v2596 = vsel %vm2583, %v2592, 0.0
      %s2597 = sld [smem:[#allocation8 + $0x2b]]
      %s2598 = sld [smem:[#allocation8 + $0x5c]]
      %v2599 = vstv %s2597
      %v2600 = vmul.f32 %v2599, %v2595
      %v2601 = vmul.f32 %v2599, %v2596
      %v2602 = vadd.f32 %v2570, %v2600
      %v2603 = vadd.f32 %v2571, %v2601
      %v2604 = vstv %s2598
      %v2605 = vmul.f32 %v2604, %v2595
      %v2606 = vmul.f32 %v2604, %v2596
      %v2609 = vrot.slane %v2605, 1
      %v2610 = vrot.slane %v2606, 1
      %v2613 = vadd.f32 %v2602, %v2609
      %v2614 = vadd.f32 %v2603, %v2610
      %vm2615 = vmand %vm705, %vm717
      %v2616 = vsel %vm2615, 1, 0
      %v2617 = vlaneseq
      %v2618 = vshrl.u32 %v2617, 7
      %v2619 = vsub.s32 0, %v2618
      %v2620 = vrot.slane %v2616, %v2619
      %v2621 = vlaneseq
      %v2622 = vshrl.u32 %v2621, 7
      %v2623 = vsub.s32 1, %v2622
      %v2624 = vrot.slane %v2616, %v2623
      %vm2625 = vcmp.eq.s32.totalorder %v2620, 1
      %vm2626 = vcmp.eq.s32.totalorder %v2624, 1
      %2627 = vrot.lane.b32.xlu0 %v675, 30
      %v2628 = vpop.permute.xlu0 %2627
      %2629 = vrot.lane.b32.xlu0 %v671, 30
      %v2630 = vpop.permute.xlu0 %2629
      %2631 = vrot.lane.b32.xlu0 %v676, 30
      %v2632 = vpop.permute.xlu0 %2631
      %vm2633 = vcmask 244736
      %v2634 = vsel %vm2633, %v2628, %v2630
      %v2635 = vsel %vm2633, %v2630, %v2632
      %v2638 = vsel %vm2625, %v2634, 0.0
      %v2639 = vsel %vm2626, %v2635, 0.0
      %s2640 = sld [smem:[#allocation8 + $0x2c]]
      %s2641 = sld [smem:[#allocation8 + $0x5d]]
      %v2642 = vstv %s2640
      %v2643 = vmul.f32 %v2642, %v2638
      %v2644 = vmul.f32 %v2642, %v2639
      %v2645 = vadd.f32 %v2613, %v2643
      %v2646 = vadd.f32 %v2614, %v2644
      %v2647 = vstv %s2641
      %v2648 = vmul.f32 %v2647, %v2638
      %v2649 = vmul.f32 %v2647, %v2639
      %v2652 = vrot.slane %v2648, 1
      %v2653 = vrot.slane %v2649, 1
      %v2656 = vadd.f32 %v2645, %v2652
      %v2657 = vadd.f32 %v2646, %v2653
      %vm2658 = vmand %vm705, %vm720
      %v2659 = vsel %vm2658, 1, 0
      %v2660 = vlaneseq
      %v2661 = vshrl.u32 %v2660, 7
      %v2662 = vsub.s32 0, %v2661
      %v2663 = vrot.slane %v2659, %v2662
      %v2664 = vlaneseq
      %v2665 = vshrl.u32 %v2664, 7
      %v2666 = vsub.s32 1, %v2665
      %v2667 = vrot.slane %v2659, %v2666
      %vm2668 = vcmp.eq.s32.totalorder %v2663, 1
      %vm2669 = vcmp.eq.s32.totalorder %v2667, 1
      %2670 = vrot.lane.b32.xlu0 %v675, 29
      %v2671 = vpop.permute.xlu0 %2670
      %2672 = vrot.lane.b32.xlu0 %v671, 29
      %v2673 = vpop.permute.xlu0 %2672
      %2674 = vrot.lane.b32.xlu0 %v676, 29
      %v2675 = vpop.permute.xlu0 %2674
      %vm2676 = vcmask 236544
      %v2677 = vsel %vm2676, %v2671, %v2673
      %v2678 = vsel %vm2676, %v2673, %v2675
      %v2681 = vsel %vm2668, %v2677, 0.0
      %v2682 = vsel %vm2669, %v2678, 0.0
      %s2683 = sld [smem:[#allocation8 + $0x2d]]
      %s2684 = sld [smem:[#allocation8 + $0x5e]]
      %v2685 = vstv %s2683
      %v2686 = vmul.f32 %v2685, %v2681
      %v2687 = vmul.f32 %v2685, %v2682
      %v2688 = vadd.f32 %v2656, %v2686
      %v2689 = vadd.f32 %v2657, %v2687
      %v2690 = vstv %s2684
      %v2691 = vmul.f32 %v2690, %v2681
      %v2692 = vmul.f32 %v2690, %v2682
      %v2695 = vrot.slane %v2691, 1
      %v2696 = vrot.slane %v2692, 1
      %v2699 = vadd.f32 %v2688, %v2695
      %v2700 = vadd.f32 %v2689, %v2696
      %vm2701 = vmand %vm705, %vm724
      %v2702 = vsel %vm2701, 1, 0
      %v2703 = vlaneseq
      %v2704 = vshrl.u32 %v2703, 7
      %v2705 = vsub.s32 0, %v2704
      %v2706 = vrot.slane %v2702, %v2705
      %v2707 = vlaneseq
      %v2708 = vshrl.u32 %v2707, 7
      %v2709 = vsub.s32 1, %v2708
      %v2710 = vrot.slane %v2702, %v2709
      %vm2711 = vcmp.eq.s32.totalorder %v2706, 1
      %vm2712 = vcmp.eq.s32.totalorder %v2710, 1
      %2713 = vrot.lane.b32.xlu0 %v675, 28
      %v2714 = vpop.permute.xlu0 %2713
      %2715 = vrot.lane.b32.xlu0 %v671, 28
      %v2716 = vpop.permute.xlu0 %2715
      %2717 = vrot.lane.b32.xlu0 %v676, 28
      %v2718 = vpop.permute.xlu0 %2717
      %vm2719 = vcmask 228352
      %v2720 = vsel %vm2719, %v2714, %v2716
      %v2721 = vsel %vm2719, %v2716, %v2718
      %v2724 = vsel %vm2711, %v2720, 0.0
      %v2725 = vsel %vm2712, %v2721, 0.0
      %s2726 = sld [smem:[#allocation8 + $0x2e]]
      %s2727 = sld [smem:[#allocation8 + $0x5f]]
      %v2728 = vstv %s2726
      %v2729 = vmul.f32 %v2728, %v2724
      %v2730 = vmul.f32 %v2728, %v2725
      %v2731 = vadd.f32 %v2699, %v2729
      %v2732 = vadd.f32 %v2700, %v2730
      %v2733 = vstv %s2727
      %v2734 = vmul.f32 %v2733, %v2724
      %v2735 = vmul.f32 %v2733, %v2725
      %v2738 = vrot.slane %v2734, 1
      %v2739 = vrot.slane %v2735, 1
      %v2742 = vadd.f32 %v2731, %v2738
      %v2743 = vadd.f32 %v2732, %v2739
      %vm2744 = vmand %vm705, %vm728
      %v2745 = vsel %vm2744, 1, 0
      %v2746 = vlaneseq
      %v2747 = vshrl.u32 %v2746, 7
      %v2748 = vsub.s32 0, %v2747
      %v2749 = vrot.slane %v2745, %v2748
      %v2750 = vlaneseq
      %v2751 = vshrl.u32 %v2750, 7
      %v2752 = vsub.s32 1, %v2751
      %v2753 = vrot.slane %v2745, %v2752
      %vm2754 = vcmp.eq.s32.totalorder %v2749, 1
      %vm2755 = vcmp.eq.s32.totalorder %v2753, 1
      %2756 = vrot.lane.b32.xlu0 %v675, 27
      %v2757 = vpop.permute.xlu0 %2756
      %2758 = vrot.lane.b32.xlu0 %v671, 27
      %v2759 = vpop.permute.xlu0 %2758
      %2760 = vrot.lane.b32.xlu0 %v676, 27
      %v2761 = vpop.permute.xlu0 %2760
      %vm2762 = vcmask 220160
      %v2763 = vsel %vm2762, %v2757, %v2759
      %v2764 = vsel %vm2762, %v2759, %v2761
      %v2767 = vsel %vm2754, %v2763, 0.0
      %v2768 = vsel %vm2755, %v2764, 0.0
      %s2769 = sld [smem:[#allocation8 + $0x2f]]
      %s2770 = sld [smem:[#allocation8 + $0x60]]
      %v2771 = vstv %s2769
      %v2772 = vmul.f32 %v2771, %v2767
      %v2773 = vmul.f32 %v2771, %v2768
      %v2774 = vadd.f32 %v2742, %v2772
      %v2775 = vadd.f32 %v2743, %v2773
      %v2776 = vstv %s2770
      %v2777 = vmul.f32 %v2776, %v2767
      %v2778 = vmul.f32 %v2776, %v2768
      %v2781 = vrot.slane %v2777, 1
      %v2782 = vrot.slane %v2778, 1
      %v2785 = vadd.f32 %v2774, %v2781
      %v2786 = vadd.f32 %v2775, %v2782
      %vm2787 = vmand %vm705, %vm732
      %v2788 = vsel %vm2787, 1, 0
      %v2789 = vlaneseq
      %v2790 = vshrl.u32 %v2789, 7
      %v2791 = vsub.s32 0, %v2790
      %v2792 = vrot.slane %v2788, %v2791
      %v2793 = vlaneseq
      %v2794 = vshrl.u32 %v2793, 7
      %v2795 = vsub.s32 1, %v2794
      %v2796 = vrot.slane %v2788, %v2795
      %vm2797 = vcmp.eq.s32.totalorder %v2792, 1
      %vm2798 = vcmp.eq.s32.totalorder %v2796, 1
      %2799 = vrot.lane.b32.xlu0 %v675, 26
      %v2800 = vpop.permute.xlu0 %2799
      %2801 = vrot.lane.b32.xlu0 %v671, 26
      %v2802 = vpop.permute.xlu0 %2801
      %2803 = vrot.lane.b32.xlu0 %v676, 26
      %v2804 = vpop.permute.xlu0 %2803
      %vm2805 = vcmask 211968
      %v2806 = vsel %vm2805, %v2800, %v2802
      %v2807 = vsel %vm2805, %v2802, %v2804
      %v2810 = vsel %vm2797, %v2806, 0.0
      %v2811 = vsel %vm2798, %v2807, 0.0
      %s2812 = sld [smem:[#allocation8 + $0x30]]
      %s2813 = sld [smem:[#allocation8 + $0x61]]
      %v2814 = vstv %s2812
      %v2815 = vmul.f32 %v2814, %v2810
      %v2816 = vmul.f32 %v2814, %v2811
      %v2817 = vadd.f32 %v2785, %v2815
      %v2818 = vadd.f32 %v2786, %v2816
      %v2819 = vstv %s2813
      %v2820 = vmul.f32 %v2819, %v2810
      %v2821 = vmul.f32 %v2819, %v2811
      %v2824 = vrot.slane %v2820, 1
      %v2825 = vrot.slane %v2821, 1
      %v2828 = vadd.f32 %v2817, %v2824
      %v2829 = vadd.f32 %v2818, %v2825
      %s2830 = sld [smem:[#allocation8 + $0x62]]
      %v2831 = vstv %s2830
      %v2832 = vadd.f32 %v2828, %v2831
      %v2833 = vadd.f32 %v2829, %v2831
      %v2834 = vsub.f32 0.0, %v2832
      %v2835 = vsub.f32 0.0, %v2833
      %v2836 = vmul.f32 %v2834, 1.442695
      %v2837 = vpow.pop %v2836
      %v2838 = vmul.f32 %v2835, 1.442695
      %v2839 = vpow.pop %v2838
      %v2840 = vadd.f32 %v2837, 1.0
      %v2841 = vadd.f32 %v2839, 1.0
      %v2842 = vrcp.pop %v2840
      %v2843 = vmul.f32 1.0, %v2842
      %v2844 = vrcp.pop %v2841
      %v2845 = vmul.f32 1.0, %v2844
      %v2846 = vlaneseq
      %v2847 = vshrl.u32 %v2846, 7
      %v2848 = vsub.s32 0, %v2847
      %v2849 = vrot.slane %v2843, %v2848
      %v2850 = vlaneseq
      %v2851 = vshrl.u32 %v2850, 7
      %v2852 = vsub.s32 0, %v2851
      %v2853 = vrot.slane %v2845, %v2852
      %v2854 = vmul.f32 %v614, %v2849
      %v2855 = vmul.f32 %v615, %v2853
      %v2856 = vmul.f32 %v616, %v2849
      %v2857 = vmul.f32 %v617, %v2853
      %v2858 = vmul.f32 %v618, %v2849
      %v2859 = vmul.f32 %v619, %v2853
      %v2860 = vmul.f32 %v620, %v2849
      %v2861 = vmul.f32 %v621, %v2853
      %s2862 = smul.addr %s107, 8
      %s2863 = scalar_lea.vmem [#allocation9], %s2862
      %2864 = vst [vmem:[%s2863] sm:$0xff] %v2854
      %2865 = vst [vmem:[%s2863 + $0x8] sm:$0xff] %v2855
      %2866 = vst [vmem:[%s2863 + $0x10] sm:$0xff] %v2856
      %2867 = vst [vmem:[%s2863 + $0x18] sm:$0xff] %v2857
      %2868 = vst [vmem:[%s2863 + $0x20] sm:$0xff] %v2858
      %2869 = vst [vmem:[%s2863 + $0x28] sm:$0xff] %v2859
      %2870 = vst [vmem:[%s2863 + $0x30] sm:$0xff] %v2860
      %2871 = vst [vmem:[%s2863 + $0x38] sm:$0xff] %v2861
      %v2872 = vadd.f32 %v2854, %v2855
      %2873 = vadd.xlane.f32.xlu0 %v2872
      %v2874 = vpop.xlane.xlu0 %2873
      %v2875 = vadd.f32 %v2856, %v2857
      %2876 = vadd.xlane.f32.xlu0 %v2875
      %v2877 = vpop.xlane.xlu0 %2876
      %v2878 = vadd.f32 %v2858, %v2859
      %2879 = vadd.xlane.f32.xlu0 %v2878
      %v2880 = vpop.xlane.xlu0 %2879
      %v2881 = vadd.f32 %v2860, %v2861
      %2882 = vadd.xlane.f32.xlu0 %v2881
      %v2883 = vpop.xlane.xlu0 %2882
      %v2884 = vadd.f32 %v95, %v2874
      %v2885 = vadd.f32 %v96, %v2877
      %v2886 = vadd.f32 %v97, %v2880
      %v2887 = vadd.f32 %v98, %v2883
      %v2888 = vmul.f32 %v2854, %v2854
      %v2889 = vmul.f32 %v2855, %v2855
      %v2890 = vmul.f32 %v2856, %v2856
      %v2891 = vmul.f32 %v2857, %v2857
      %v2892 = vmul.f32 %v2858, %v2858
      %v2893 = vmul.f32 %v2859, %v2859
      %v2894 = vmul.f32 %v2860, %v2860
      %v2895 = vmul.f32 %v2861, %v2861
      %v2896 = vadd.f32 %v2888, %v2889
      %2897 = vadd.xlane.f32.xlu0 %v2896
      %v2898 = vpop.xlane.xlu0 %2897
      %v2899 = vadd.f32 %v2890, %v2891
      %2900 = vadd.xlane.f32.xlu0 %v2899
      %v2901 = vpop.xlane.xlu0 %2900
      %v2902 = vadd.f32 %v2892, %v2893
      %2903 = vadd.xlane.f32.xlu0 %v2902
      %v2904 = vpop.xlane.xlu0 %2903
      %v2905 = vadd.f32 %v2894, %v2895
      %2906 = vadd.xlane.f32.xlu0 %v2905
      %v2907 = vpop.xlane.xlu0 %2906
      %v2908 = vadd.f32 %v99, %v2898
      %v2909 = vadd.f32 %v100, %v2901
      %v2910 = vadd.f32 %v101, %v2904
      %v2911 = vadd.f32 %v102, %v2907
    $region74: #{tpu_custom_call.1} parent=1 // loop_footer
      %s94 = sadd.s32 1, %s90
    $region75: #{tpu_custom_call.1} parent=1 // loop_footer_branch
      %89 = sbr.rel target = $region71
    $region76: #{tpu_custom_call.1} parent=1 // loop_exit
      _
    %v2912 = vmul.f32 %v95, 0.001953125
    %v2913 = vmul.f32 %v96, 0.001953125
    %v2914 = vmul.f32 %v97, 0.001953125
    %v2915 = vmul.f32 %v98, 0.001953125
    %v2916 = vmul.f32 %v99, 0.001953125
    %v2917 = vmul.f32 %v100, 0.001953125
    %v2918 = vmul.f32 %v101, 0.001953125
    %v2919 = vmul.f32 %v102, 0.001953125
    %v2920 = vmul.f32 %v2912, %v2912
    %v2921 = vmul.f32 %v2913, %v2913
    %v2922 = vmul.f32 %v2914, %v2914
    %v2923 = vmul.f32 %v2915, %v2915
    %v2924 = vsub.f32 %v2916, %v2920
    %v2925 = vsub.f32 %v2917, %v2921
    %v2926 = vsub.f32 %v2918, %v2922
    %v2927 = vsub.f32 %v2919, %v2923
    %v2928 = vmax.f32 %v2924, 0.0
    %v2929 = vmax.f32 %v2925, 0.0
    %v2930 = vmax.f32 %v2926, 0.0
    %v2931 = vmax.f32 %v2927, 0.0
    %v2932 = vadd.f32 %v2928, 1e-05
    %v2933 = vadd.f32 %v2929, 1e-05
    %v2934 = vadd.f32 %v2930, 1e-05
    %v2935 = vadd.f32 %v2931, 1e-05
    %v2936 = vrsqrt.pop %v2932
    %v2937 = vrsqrt.pop %v2933
    %v2938 = vrsqrt.pop %v2934
    %v2939 = vrsqrt.pop %v2935
    %v2940 = vld [vmem:[%s10] sm:$0xff]
    %v2941 = vld [vmem:[%s10 + $0x8] sm:$0xff]
    %v2942 = vld [vmem:[%s10 + $0x10] sm:$0xff]
    %v2943 = vld [vmem:[%s10 + $0x18] sm:$0xff]
    %v2944 = vmul.f32 %v2940, %v2936
    %v2945 = vmul.f32 %v2941, %v2937
    %v2946 = vmul.f32 %v2942, %v2938
    %v2947 = vmul.f32 %v2943, %v2939
    %v2948 = vld [vmem:[%s11] sm:$0xff]
    %v2949 = vld [vmem:[%s11 + $0x8] sm:$0xff]
    %v2950 = vld [vmem:[%s11 + $0x10] sm:$0xff]
    %v2951 = vld [vmem:[%s11 + $0x18] sm:$0xff]
    %v2952 = vmul.f32 %v2912, %v2944
    %v2953 = vmul.f32 %v2913, %v2945
    %v2954 = vmul.f32 %v2914, %v2946
    %v2955 = vmul.f32 %v2915, %v2947
    %v2956 = vsub.f32 %v2948, %v2952
    %v2957 = vsub.f32 %v2949, %v2953
    %v2958 = vsub.f32 %v2950, %v2954
    %v2959 = vsub.f32 %v2951, %v2955
    loop: start=0, step=1, limit=2
    $region77: #{tpu_custom_call.1} parent=1 // loop_pre_header
      _
    $region78: #{tpu_custom_call.1} parent=1 // loop_header
      %s2961 = sphi 0, %s2965
      %p2962 = scmp.ge.s32.totalorder %s2961, 2
    $region79: #{tpu_custom_call.1} parent=1 // loop_header_branch
      %2964 = sbr.rel (%p2962) target = $region83
    $region80: #{tpu_custom_call.1} parent=1 // loop_body
      %s2966 = smul.u32 %s2961, 8
      %s2967 = smul.addr %s2966, 8
      %s2968 = scalar_lea.vmem [#allocation9], %s2967
      %v2969 = vld [vmem:[%s2968] sm:$0xff]
      %v2970 = vld [vmem:[%s2968 + $0x8] sm:$0xff]
      %v2971 = vld [vmem:[%s2968 + $0x10] sm:$0xff]
      %v2972 = vld [vmem:[%s2968 + $0x18] sm:$0xff]
      %v2973 = vld [vmem:[%s2968 + $0x20] sm:$0xff]
      %v2974 = vld [vmem:[%s2968 + $0x28] sm:$0xff]
      %v2975 = vld [vmem:[%s2968 + $0x30] sm:$0xff]
      %v2976 = vld [vmem:[%s2968 + $0x38] sm:$0xff]
      %2978 = vset.pattern.permute.xlu0 0
      %2979 = vperm.xlu0 %2978, %v2944
      %v2980 = vpop.permute.xlu0 %2979
      %2983 = vset.pattern.permute.xlu0 0
      %2984 = vperm.xlu0 %2983, %v2945
      %v2985 = vpop.permute.xlu0 %2984
      %2988 = vset.pattern.permute.xlu0 0
      %2989 = vperm.xlu0 %2988, %v2946
      %v2990 = vpop.permute.xlu0 %2989
      %2993 = vset.pattern.permute.xlu0 0
      %2994 = vperm.xlu0 %2993, %v2947
      %v2995 = vpop.permute.xlu0 %2994
      %v2997 = vmul.f32 %v2969, %v2980
      %v2998 = vmul.f32 %v2970, %v2980
      %v2999 = vmul.f32 %v2971, %v2985
      %v3000 = vmul.f32 %v2972, %v2985
      %v3001 = vmul.f32 %v2973, %v2990
      %v3002 = vmul.f32 %v2974, %v2990
      %v3003 = vmul.f32 %v2975, %v2995
      %v3004 = vmul.f32 %v2976, %v2995
      %3006 = vset.pattern.permute.xlu0 0
      %3007 = vperm.xlu0 %3006, %v2956
      %v3008 = vpop.permute.xlu0 %3007
      %3011 = vset.pattern.permute.xlu0 0
      %3012 = vperm.xlu0 %3011, %v2957
      %v3013 = vpop.permute.xlu0 %3012
      %3016 = vset.pattern.permute.xlu0 0
      %3017 = vperm.xlu0 %3016, %v2958
      %v3018 = vpop.permute.xlu0 %3017
      %3021 = vset.pattern.permute.xlu0 0
      %3022 = vperm.xlu0 %3021, %v2959
      %v3023 = vpop.permute.xlu0 %3022
      %v3025 = vadd.f32 %v2997, %v3008
      %v3026 = vadd.f32 %v2998, %v3008
      %v3027 = vadd.f32 %v2999, %v3013
      %v3028 = vadd.f32 %v3000, %v3013
      %v3029 = vadd.f32 %v3001, %v3018
      %v3030 = vadd.f32 %v3002, %v3018
      %v3031 = vadd.f32 %v3003, %v3023
      %v3032 = vadd.f32 %v3004, %v3023
      %v3033 = vmax.f32 %v3025, 0.0
      %v3034 = vmax.f32 %v3026, 0.0
      %v3035 = vmax.f32 %v3027, 0.0
      %v3036 = vmax.f32 %v3028, 0.0
      %v3037 = vmax.f32 %v3029, 0.0
      %v3038 = vmax.f32 %v3030, 0.0
      %v3039 = vmax.f32 %v3031, 0.0
      %v3040 = vmax.f32 %v3032, 0.0
      %3041 = vst [vmem:[%s2968] sm:$0xff] %v3033
      %3042 = vst [vmem:[%s2968 + $0x8] sm:$0xff] %v3034
      %3043 = vst [vmem:[%s2968 + $0x10] sm:$0xff] %v3035
      %3044 = vst [vmem:[%s2968 + $0x18] sm:$0xff] %v3036
      %3045 = vst [vmem:[%s2968 + $0x20] sm:$0xff] %v3037
      %3046 = vst [vmem:[%s2968 + $0x28] sm:$0xff] %v3038
      %3047 = vst [vmem:[%s2968 + $0x30] sm:$0xff] %v3039
      %3048 = vst [vmem:[%s2968 + $0x38] sm:$0xff] %v3040
    $region81: #{tpu_custom_call.1} parent=1 // loop_footer
      %s2965 = sadd.s32 1, %s2961
    $region82: #{tpu_custom_call.1} parent=1 // loop_footer_branch
      %2960 = sbr.rel target = $region78
    $region83: #{tpu_custom_call.1} parent=1 // loop_exit
      _
    // Predicated region
    $region84: #{tpu_custom_call.1} parent=1 // pred_check
      _
    $region85: #{tpu_custom_call.1} parent=1 // pred_check_branch
      %3050 = sbr.rel (0) target = $region87
    $region86: #{tpu_custom_call.1} parent=1 // pred_region
      %s3052 = ssub.s32 2048, 2048
      %3053 = vsyncadd [#allocation4], %s3052
      %s3054 = sshll.u32 [#allocation9], 4
      %s3055 = int_to_ptr.vmem [resolvable:$true] %s3054
      %3060 = dma.vmem_to_hbm [thread:$0]  %s3055, 2048, %s14, [#allocation4], 256, 256, 16
    $region87: #{tpu_custom_call.1} parent=1 // pred_fallthru
      _
    // Predicated region
    $region88: #{tpu_custom_call.1} parent=1 // pred_check
      _
    $region89: #{tpu_custom_call.1} parent=1 // pred_check_branch
      %3062 = sbr.rel (0) target = $region91
    $region90: #{tpu_custom_call.1} parent=1 // pred_region
      %3063 = dma.done [#allocation4], 2048
    $region91: #{tpu_custom_call.1} parent=1 // pred_fallthru
      _
    %3064 = vsyncpa [#allocation3], 1
    %3065 = vsyncpa [#allocation7], 1
    %3066 = vsyncpa [#allocation4], 1
    %3067 = vsyncpa [#allocation5], 1

</llo_original>
